<compile_context>
chip_gen: v7x
topology: tpu7x:2x2x1
jax: 0.10.0
libtpu: 0.0.40
codegen_flags: <defaults>
</compile_context>

<pallas_src>
import jax
import jax.numpy as jnp
from jax import lax
from jax.experimental import pallas as pl
from jax.experimental.pallas import tpu as pltpu

C_IN, C_OUT, KH, KW = 220, 16, 3, 3
H, W = 16, 16
HO, WO = H - KH + 1, W - KW + 1          # 14, 14
N_FEAT = HO * WO * C_OUT                 # 3136
N_CLASSES = 101
N_PAD = 128                              # lane-dense classifier width (pad 101 -> 128)
N_TAPS = KH * KW                         # 9
BN_EPS = 1e-5
LEAKY_SLOPE = 0.1                        # nn.LeakyReLU(0.1) in the module


def _conv_batch_tile(B):
    # >=2 grid steps when B > 1 (v7x megacore); cap at 8 (v5e scoped-VMEM headroom).
    if B <= 2:
        return 1
    return min(8, pl.cdiv(B, 2))


def _linear_batch_tile(bpad):
    # Prefer sublane-aligned 8..128-row blocks that divide bpad and give >=2 steps;
    # otherwise one full-extent block (legal: second-to-last dim == full array dim).
    if bpad % 8 == 0 and bpad > 8:
        for t in (128, 64, 32, 16, 8):
            if bpad % t == 0 and bpad // t >= 2:
                return t
    return bpad


def _conv_lrelu_kernel(x_ref, w_ref, b_ref, o_ref):
    # x_ref: (Bt, H*W, C_IN) bf16   Bt images, NHWC rows flattened
    # w_ref: (C_IN, 9*C_OUT) bf16   tap-major column blocks of the 3x3 conv weight
    # b_ref: (1, 1, 1, C_OUT) f32   conv bias
    # o_ref: (Bt, HO, WO, C_OUT) bf16
    bt = x_ref.shape[0]
    x2d = x_ref[...].reshape(bt * H * W, C_IN)            # lane dim unchanged -> cheap
    z = jnp.dot(x2d, w_ref[...], preferred_element_type=jnp.float32)  # (Bt*256, 144)
    z4 = z.reshape(bt, H, W, N_TAPS * C_OUT)              # leading-dim split, cheap
    acc = None
    for t in range(N_TAPS):                               # 9-tap shifted add
        di, dj = t // KW, t % KW
        term = z4[:, di:di + HO, dj:dj + WO, t * C_OUT:(t + 1) * C_OUT]
        acc = term if acc is None else acc + term
    acc = acc + b_ref[...]                                # conv bias (before LeakyReLU)
    y = jnp.where(acc >= 0.0, acc, LEAKY_SLOPE * acc)     # LeakyReLU(0.1)
    # Dropout2d(0.5) is identity in eval mode; BatchNorm is folded into the Linear.
    # TODO(synk): training-mode Dropout2d (stochastic channel masking) not reproduced.
    o_ref[...] = y.astype(o_ref.dtype)


def _linear_kernel(x_ref, w_ref, b_ref, o_ref):
    # (TB,3136) bf16 @ (3136,128) bf16 -> f32, + folded-BN bias (lane-dense 128 cols)
    o_ref[...] = (
        jnp.dot(x_ref[...], w_ref[...], preferred_element_type=jnp.float32)
        + b_ref[...]
    )


def prepare_params(params):
    """One-time weight relayout + BatchNorm folding (eval mode). Not in the hot path."""
    # conv weight (O, I, KH, KW) -> (I, 9*O): column index = (i*KW + j)*C_OUT + o
    w_all = (
        jnp.transpose(params["conv_w"], (1, 2, 3, 0))
        .reshape(C_IN, N_TAPS * C_OUT)
        .astype(jnp.bfloat16)
    )
    conv_b = params["conv_b"].reshape(1, 1, 1, C_OUT).astype(jnp.float32)

    # PyTorch Linear weight (101, 3136) has features ordered (c, h, w);
    # reorder to the kernel's (h, w, c) activation order -> (3136, 101).
    wl_hwc = jnp.transpose(
        params["lin_w"].reshape(N_CLASSES, C_OUT, HO, WO), (2, 3, 1, 0)
    ).reshape(N_FEAT, N_CLASSES)

    # BatchNorm2d eval: y*scale + shift (per channel) sits between LeakyReLU and the
    # Linear, so it folds exactly into (Wl, bl).
    scale = params["bn_gamma"] / jnp.sqrt(params["bn_var"] + BN_EPS)
    shift = params["bn_beta"] - params["bn_mean"] * scale
    scale_f = jnp.tile(scale, HO * WO)            # (3136,), channel fastest-varying
    shift_f = jnp.tile(shift, HO * WO)
    wl_fold = (wl_hwc * scale_f[:, None]).astype(jnp.bfloat16)
    bl_fold = (params["lin_b"] + shift_f @ wl_hwc).astype(jnp.float32)

    # Pad classifier to 128 output lanes (zeros) -> unmasked lane-dense stores.
    wl_pad = jnp.zeros((N_FEAT, N_PAD), jnp.bfloat16).at[:, :N_CLASSES].set(wl_fold)
    bl_pad = jnp.zeros((1, N_PAD), jnp.float32).at[0, :N_CLASSES].set(bl_fold)

    return {"w_all": w_all, "conv_b": conv_b, "wl": wl_pad, "bl": bl_pad}


def classi_forward(x_nchw, prep):
    B = x_nchw.shape[0]
    assert x_nchw.shape[1:] == (C_IN, H, W), x_nchw.shape

    bt = _conv_batch_tile(B)
    n_conv = pl.cdiv(B, bt)
    bpad = bt * n_conv
    tb = _linear_batch_tile(bpad)
    n_lin = bpad // tb

    # NCHW -> NHWC, bf16 cast, flatten spatial -> (B, 256, 220). One small fused XLA
    # copy; no 9x im2col matrix is ever materialized in HBM.
    x3 = (
        jnp.transpose(x_nchw, (0, 2, 3, 1))
        .astype(jnp.bfloat16)
        .reshape(B, H * W, C_IN)
    )
    if bpad != B:
        x3 = jnp.pad(x3, ((0, bpad - B), (0, 0), (0, 0)))

    conv_cost = pl.CostEstimate(
        flops=2 * bpad * H * W * C_IN * N_TAPS * C_OUT,
        transcendentals=0,
        bytes_accessed=(
            bpad * H * W * C_IN * 2            # x bf16
            + C_IN * N_TAPS * C_OUT * 2        # w bf16
            + C_OUT * 4                        # bias f32
            + bpad * HO * WO * C_OUT * 2       # out bf16
        ),
    )

    act = pl.pallas_call(
        _conv_lrelu_kernel,
        out_shape=jax.ShapeDtypeStruct((bpad, HO, WO, C_OUT), jnp.bfloat16),
        grid=(n_conv,),
        in_specs=[
            pl.BlockSpec((bt, H * W, C_IN), lambda b: (b, 0, 0)),
            pl.BlockSpec((C_IN, N_TAPS * C_OUT), lambda b: (0, 0)),
            pl.BlockSpec((1, 1, 1, C_OUT), lambda b: (0, 0, 0, 0)),
        ],
        out_specs=pl.BlockSpec((bt, HO, WO, C_OUT), lambda b: (b, 0, 0, 0)),
        compiler_params=pltpu.CompilerParams(dimension_semantics=("parallel",)),
        cost_estimate=conv_cost,
    )(x3, prep["w_all"], prep["conv_b"])

    # Contiguous (h, w, c) flatten: a free bitcast-style reshape at the XLA level.
    flat = act.reshape(bpad, N_FEAT)

    lin_cost = pl.CostEstimate(
        flops=2 * bpad * N_FEAT * N_PAD,
        transcendentals=0,
        bytes_accessed=(
            bpad * N_FEAT * 2                  # activations bf16
            + N_FEAT * N_PAD * 2               # weights bf16
            + N_PAD * 4                        # bias f32
            + bpad * N_PAD * 4                 # logits f32
        ),
    )

    logits_pad = pl.pallas_call(
        _linear_kernel,
        out_shape=jax.ShapeDtypeStruct((bpad, N_PAD), jnp.float32),
        grid=(n_lin,),
        in_specs=[
            pl.BlockSpec((tb, N_FEAT), lambda i: (i, 0)),
            pl.BlockSpec((N_FEAT, N_PAD), lambda i: (0, 0)),   # stays VMEM-resident
            pl.BlockSpec((1, N_PAD), lambda i: (0, 0)),
        ],
        out_specs=pl.BlockSpec((tb, N_PAD), lambda i: (i, 0)),
        compiler_params=pltpu.CompilerParams(dimension_semantics=("parallel",)),
        cost_estimate=lin_cost,
    )(flat, prep["wl"], prep["bl"])

    # The PyTorch module computes F.softmax into `result` but returns the pre-softmax
    # logits `x`; softmax is dead code, so we return logits (sliced to 101 classes).
    return logits_pad[:B, :N_CLASSES]


def classi_reference(x_nchw, params):
    """Pure-JAX f32 reference replicating the PyTorch forward (eval mode)."""
    x = jnp.transpose(x_nchw, (0, 2, 3, 1))
    w_hwio = jnp.transpose(params["conv_w"], (2, 3, 1, 0))
    y = lax.conv_general_dilated(
        x, w_hwio, window_strides=(1, 1), padding="VALID",
        dimension_numbers=("NHWC", "HWIO", "NHWC"))
    y = y + params["conv_b"].reshape(1, 1, 1, C_OUT)
    y = jnp.where(y >= 0, y, LEAKY_SLOPE * y)
    scale = params["bn_gamma"] / jnp.sqrt(params["bn_var"] + BN_EPS)
    shift = params["bn_beta"] - params["bn_mean"] * scale
    y = y * scale + shift
    # PyTorch x.view(B, -1) flattens NCHW in (c, h, w) order
    y = jnp.transpose(y, (0, 3, 1, 2)).reshape(x_nchw.shape[0], -1)
    return y @ params["lin_w"].T + params["lin_b"]


if __name__ == "__main__":
    key = jax.random.PRNGKey(0)
    keys = jax.random.split(key, 8)
    B = 2
    x = jax.random.normal(keys[0], (B, C_IN, H, W), jnp.float32)

    params = {
        "conv_w": 0.02 * jax.random.normal(keys[1], (C_OUT, C_IN, KH, KW), jnp.float32),
        "conv_b": 0.10 * jax.random.normal(keys[2], (C_OUT,), jnp.float32),
        "bn_gamma": 1.0 + 0.1 * jax.random.normal(keys[3], (C_OUT,), jnp.float32),
        "bn_beta": 0.1 * jax.random.normal(keys[4], (C_OUT,), jnp.float32),
        "bn_mean": 0.05 * jax.random.normal(keys[5], (C_OUT,), jnp.float32),
        "bn_var": 1.0 + 0.1 * jnp.abs(jax.random.normal(keys[6], (C_OUT,), jnp.float32)),
        "lin_w": 0.01 * jax.random.normal(keys[7], (N_CLASSES, N_FEAT), jnp.float32),
        "lin_b": 0.01 * jnp.arange(N_CLASSES, dtype=jnp.float32),
    }

    prep = prepare_params(params)            # one-time relayout + BN fold + lane pad
    out = jax.jit(classi_forward)(x, prep)
    out = jax.block_until_ready(out)
    assert out.shape == (B, N_CLASSES), out.shape

    ref = classi_reference(x, params)
    max_diff = float(jnp.max(jnp.abs(out - ref)))
    if not jnp.allclose(out, ref, rtol=2e-2, atol=2e-2):
        raise AssertionError(f"kernel/reference mismatch, max abs diff = {max_diff}")
    print("KERNEL_OK")
</pallas_src>

<mosaic_0001>
module attributes {stable_mosaic.version = 11 : i64} {
  func.func @_conv_lrelu_kernel(%arg0: i32, %arg1: memref<1x256x220xbf16, #tpu.memory_space<vmem>>, %arg2: memref<220x144xbf16, #tpu.memory_space<vmem>>, %arg3: memref<1x1x1x16xf32, #tpu.memory_space<vmem>>, %arg4: memref<1x14x14x16xbf16, #tpu.memory_space<vmem>>) attributes {dimension_semantics = [#tpu.dimension_semantics<parallel>], iteration_bounds = array<i64: 2>, scalar_prefetch = 0 : i64, scratch_operands = 0 : i64, tpu.core_type = #tpu.core_type<tc>, window_params = [{transform_indices = @transform_0, window_bounds = array<i64: 1, 256, 220>}, {pipeline_mode = #tpu.pipeline_mode<synchronous>, transform_indices = @transform_1, window_bounds = array<i64: 220, 144>}, {pipeline_mode = #tpu.pipeline_mode<synchronous>, transform_indices = @transform_2, window_bounds = array<i64: 1, 1, 1, 16>}, {transform_indices = @transform_3, window_bounds = array<i64: 1, 14, 14, 16>}]} {
    %c0 = arith.constant 0 : index
    %c0_0 = arith.constant 0 : index
    %c0_1 = arith.constant 0 : index
    %0 = vector.load %arg1[%c0, %c0_0, %c0_1] : memref<1x256x220xbf16, #tpu.memory_space<vmem>>, vector<1x256x220xbf16>
    %1 = vector.shape_cast %0 : vector<1x256x220xbf16> to vector<256x220xbf16>
    %c0_2 = arith.constant 0 : index
    %c0_3 = arith.constant 0 : index
    %2 = vector.load %arg2[%c0_2, %c0_3] : memref<220x144xbf16, #tpu.memory_space<vmem>>, vector<220x144xbf16>
    %cst = arith.constant dense<0.000000e+00> : vector<256x144xf32>
    %3 = tpu.matmul %1, %2, %cst {dimension_numbers = #tpu.dot_dimension_numbers<[1], [0], [0], [1], [0, 0, 1, 1], [], []>} : vector<256x220xbf16>, vector<220x144xbf16>, vector<256x144xf32> -> vector<256x144xf32>
    %4 = vector.shape_cast %3 : vector<256x144xf32> to vector<1x16x16x144xf32>
    %5 = vector.extract_strided_slice %4 {offsets = [0, 0, 0, 0], sizes = [1, 14, 14, 16], strides = [1, 1, 1, 1]} : vector<1x16x16x144xf32> to vector<1x14x14x16xf32>
    %6 = vector.extract_strided_slice %4 {offsets = [0, 0, 1, 16], sizes = [1, 14, 14, 16], strides = [1, 1, 1, 1]} : vector<1x16x16x144xf32> to vector<1x14x14x16xf32>
    %7 = arith.addf %5, %6 : vector<1x14x14x16xf32>
    %8 = vector.extract_strided_slice %4 {offsets = [0, 0, 2, 32], sizes = [1, 14, 14, 16], strides = [1, 1, 1, 1]} : vector<1x16x16x144xf32> to vector<1x14x14x16xf32>
    %9 = arith.addf %7, %8 : vector<1x14x14x16xf32>
    %10 = vector.extract_strided_slice %4 {offsets = [0, 1, 0, 48], sizes = [1, 14, 14, 16], strides = [1, 1, 1, 1]} : vector<1x16x16x144xf32> to vector<1x14x14x16xf32>
    %11 = arith.addf %9, %10 : vector<1x14x14x16xf32>
    %12 = vector.extract_strided_slice %4 {offsets = [0, 1, 1, 64], sizes = [1, 14, 14, 16], strides = [1, 1, 1, 1]} : vector<1x16x16x144xf32> to vector<1x14x14x16xf32>
    %13 = arith.addf %11, %12 : vector<1x14x14x16xf32>
    %14 = vector.extract_strided_slice %4 {offsets = [0, 1, 2, 80], sizes = [1, 14, 14, 16], strides = [1, 1, 1, 1]} : vector<1x16x16x144xf32> to vector<1x14x14x16xf32>
    %15 = arith.addf %13, %14 : vector<1x14x14x16xf32>
    %16 = vector.extract_strided_slice %4 {offsets = [0, 2, 0, 96], sizes = [1, 14, 14, 16], strides = [1, 1, 1, 1]} : vector<1x16x16x144xf32> to vector<1x14x14x16xf32>
    %17 = arith.addf %15, %16 : vector<1x14x14x16xf32>
    %18 = vector.extract_strided_slice %4 {offsets = [0, 2, 1, 112], sizes = [1, 14, 14, 16], strides = [1, 1, 1, 1]} : vector<1x16x16x144xf32> to vector<1x14x14x16xf32>
    %19 = arith.addf %17, %18 : vector<1x14x14x16xf32>
    %20 = vector.extract_strided_slice %4 {offsets = [0, 2, 2, 128], sizes = [1, 14, 14, 16], strides = [1, 1, 1, 1]} : vector<1x16x16x144xf32> to vector<1x14x14x16xf32>
    %21 = arith.addf %19, %20 : vector<1x14x14x16xf32>
    %c0_4 = arith.constant 0 : index
    %c0_5 = arith.constant 0 : index
    %c0_6 = arith.constant 0 : index
    %c0_7 = arith.constant 0 : index
    %22 = vector.load %arg3[%c0_4, %c0_5, %c0_6, %c0_7] : memref<1x1x1x16xf32, #tpu.memory_space<vmem>>, vector<1x1x1x16xf32>
    %23 = vector.broadcast %22 : vector<1x1x1x16xf32> to vector<1x14x14x16xf32>
    %24 = arith.addf %21, %23 : vector<1x14x14x16xf32>
    %cst_8 = arith.constant 0.000000e+00 : f32
    %25 = vector.broadcast %cst_8 : f32 to vector<1x14x14x16xf32>
    %26 = arith.cmpf oge, %24, %25 : vector<1x14x14x16xf32>
    %cst_9 = arith.constant 1.000000e-01 : f32
    %27 = vector.broadcast %cst_9 : f32 to vector<1x14x14x16xf32>
    %28 = arith.mulf %27, %24 : vector<1x14x14x16xf32>
    %29 = arith.select %26, %24, %28 : vector<1x14x14x16xi1>, vector<1x14x14x16xf32>
    %30 = arith.truncf %29 : vector<1x14x14x16xf32> to vector<1x14x14x16xbf16>
    %c0_10 = arith.constant 0 : index
    %c0_11 = arith.constant 0 : index
    %c0_12 = arith.constant 0 : index
    %c0_13 = arith.constant 0 : index
    %31 = vector.load %arg4[%c0_10, %c0_11, %c0_12, %c0_13] : memref<1x14x14x16xbf16, #tpu.memory_space<vmem>>, vector<1x14x14x16xbf16>
    tpu.vector_store %arg4[%c0_10, %c0_11, %c0_12, %c0_13], %30 {strides = array<i32>} : memref<1x14x14x16xbf16, #tpu.memory_space<vmem>>, vector<1x14x14x16xbf16>,
    return
  }
  func.func @transform_0(%arg0: i32) -> (i32, i32, i32) {
    %c0_i32 = arith.constant 0 : i32
    %c0_i32_0 = arith.constant 0 : i32
    %c0_i32_1 = arith.constant 0 : i32
    return %arg0, %c0_i32, %c0_i32_0 : i32, i32, i32
  }
  func.func @transform_1(%arg0: i32) -> (i32, i32) {
    %c0_i32 = arith.constant 0 : i32
    %c0_i32_0 = arith.constant 0 : i32
    %c0_i32_1 = arith.constant 0 : i32
    return %c0_i32, %c0_i32_0 : i32, i32
  }
  func.func @transform_2(%arg0: i32) -> (i32, i32, i32, i32) {
    %c0_i32 = arith.constant 0 : i32
    %c0_i32_0 = arith.constant 0 : i32
    %c0_i32_1 = arith.constant 0 : i32
    %c0_i32_2 = arith.constant 0 : i32
    %c0_i32_3 = arith.constant 0 : i32
    return %c0_i32, %c0_i32_0, %c0_i32_1, %c0_i32_2 : i32, i32, i32, i32
  }
  func.func @transform_3(%arg0: i32) -> (i32, i32, i32, i32) {
    %c0_i32 = arith.constant 0 : i32
    %c0_i32_0 = arith.constant 0 : i32
    %c0_i32_1 = arith.constant 0 : i32
    %c0_i32_2 = arith.constant 0 : i32
    return %arg0, %c0_i32, %c0_i32_0, %c0_i32_1 : i32, i32, i32, i32
  }
}

module attributes {stable_mosaic.version = 11 : i64} {
  func.func @_linear_kernel(%arg0: i32, %arg1: memref<2x3136xbf16, #tpu.memory_space<vmem>>, %arg2: memref<3136x128xbf16, #tpu.memory_space<vmem>>, %arg3: memref<1x128xf32, #tpu.memory_space<vmem>>, %arg4: memref<2x128xf32, #tpu.memory_space<vmem>>) attributes {dimension_semantics = [#tpu.dimension_semantics<parallel>], iteration_bounds = array<i64: 1>, scalar_prefetch = 0 : i64, scratch_operands = 0 : i64, tpu.core_type = #tpu.core_type<tc>, window_params = [{transform_indices = @transform_0, window_bounds = array<i64: 2, 3136>}, {pipeline_mode = #tpu.pipeline_mode<synchronous>, transform_indices = @transform_1, window_bounds = array<i64: 3136, 128>}, {pipeline_mode = #tpu.pipeline_mode<synchronous>, transform_indices = @transform_2, window_bounds = array<i64: 1, 128>}, {transform_indices = @transform_3, window_bounds = array<i64: 2, 128>}]} {
    %c0 = arith.constant 0 : index
    %c0_0 = arith.constant 0 : index
    %0 = vector.load %arg1[%c0, %c0_0] : memref<2x3136xbf16, #tpu.memory_space<vmem>>, vector<2x3136xbf16>
    %c0_1 = arith.constant 0 : index
    %c0_2 = arith.constant 0 : index
    %1 = vector.load %arg2[%c0_1, %c0_2] : memref<3136x128xbf16, #tpu.memory_space<vmem>>, vector<3136x128xbf16>
    %cst = arith.constant dense<0.000000e+00> : vector<2x128xf32>
    %2 = tpu.matmul %0, %1, %cst {dimension_numbers = #tpu.dot_dimension_numbers<[1], [0], [0], [1], [0, 0, 1, 1], [], []>} : vector<2x3136xbf16>, vector<3136x128xbf16>, vector<2x128xf32> -> vector<2x128xf32>
    %c0_3 = arith.constant 0 : index
    %c0_4 = arith.constant 0 : index
    %3 = vector.load %arg3[%c0_3, %c0_4] : memref<1x128xf32, #tpu.memory_space<vmem>>, vector<1x128xf32>
    %4 = vector.broadcast %3 : vector<1x128xf32> to vector<2x128xf32>
    %5 = arith.addf %2, %4 : vector<2x128xf32>
    %c0_5 = arith.constant 0 : index
    %c0_6 = arith.constant 0 : index
    %6 = vector.load %arg4[%c0_5, %c0_6] : memref<2x128xf32, #tpu.memory_space<vmem>>, vector<2x128xf32>
    tpu.vector_store %arg4[%c0_5, %c0_6], %5 {strides = array<i32>} : memref<2x128xf32, #tpu.memory_space<vmem>>, vector<2x128xf32>,
    return
  }
  func.func @transform_0(%arg0: i32) -> (i32, i32) {
    %c0_i32 = arith.constant 0 : i32
    %c0_i32_0 = arith.constant 0 : i32
    return %arg0, %c0_i32 : i32, i32
  }
  func.func @transform_1(%arg0: i32) -> (i32, i32) {
    %c0_i32 = arith.constant 0 : i32
    %c0_i32_0 = arith.constant 0 : i32
    %c0_i32_1 = arith.constant 0 : i32
    return %c0_i32, %c0_i32_0 : i32, i32
  }
  func.func @transform_2(%arg0: i32) -> (i32, i32) {
    %c0_i32 = arith.constant 0 : i32
    %c0_i32_0 = arith.constant 0 : i32
    %c0_i32_1 = arith.constant 0 : i32
    return %c0_i32, %c0_i32_0 : i32, i32
  }
  func.func @transform_3(%arg0: i32) -> (i32, i32) {
    %c0_i32 = arith.constant 0 : i32
    %c0_i32_0 = arith.constant 0 : i32
    return %arg0, %c0_i32 : i32, i32
  }
}

</mosaic_0001>

<llo_original>
// kernel: classi_forward.2
$region0: #{classi_forward.2}
  #allocation0 [shape = 'u32[]', space=smem, size = 0x4, offset = 0x4, fixed_abs, tag = 'smem constant byte address 0x4 - core index']
  #allocation1 [shape = 'u32[144,128]{1,0:T(1,128)}', space=vmem, size = 0x12000, scoped, tag = 'internal scratch']
  %s0 = inlined_call_operand.vmem [shape: bf16[2,256,220], index: 0, kind: input, shape index: {}]
  %s1 = inlined_call_operand.vmem [shape: bf16[220,144], index: 1, kind: input, shape index: {}]
  %s2 = inlined_call_operand.vmem [shape: f32[1,1,1,16], index: 2, kind: input, shape index: {}]
  %s3 = inlined_call_operand.vmem [shape: bf16[2,14,14,16], index: 3, kind: output, shape index: {}]
  %s4 = sld [smem:[#allocation0]]
  $region45: #{classi_forward.2} parent=0
    _
  %s6 = ssub.s32 1, %s4
  %s7 = scalar_select 0, %s6, %s4
  loop: start=0, step=1, limit=4
  $region2: #{classi_forward.2} parent=0 // loop_pre_header
    _
  $region3: #{classi_forward.2} parent=0 // loop_header
    %s9 = sphi 0, %s13
    %p10 = scmp.ge.s32.totalorder %s9, 4
    %s19 = sphi 0, %s21
    %s22 = sphi 0, %s19
    %s23 = sphi 0, %s22
    %s39 = sphi 0, %s23
    %s43 = sphi 0, %s43
    %s45 = sphi 0, %s43
    %s46 = sphi 0, %s45
    %s60 = sphi 0, %s46
    %s64 = sphi 0, %s64
    %s66 = sphi 0, %s64
    %s67 = sphi 0, %s66
    %s81 = sphi 0, %s67
    %s87 = sphi 0, %s89
    %s90 = sphi 0, %s87
    %s91 = sphi 0, %s90
    %s107 = sphi 0, %s91
  $region4: #{classi_forward.2} parent=0 // loop_header_branch
    %12 = sbr.rel (%p10) target = $region8
  $region5: #{classi_forward.2} parent=0 // loop_body
    %s14 = ssub.s32 %s9, 1
    %s15 = ssub.s32 %s9, 2
    %s16 = sadd.s32 %s9, 1
    %s17 = ssub.s32 %s9, %s16
    %p18 = scmp.eq.s32.totalorder %s17, 0
    %s20 = sadd.s32 %s19, 1
    %s21 = scalar_select %p18, %s19, %s20
    %p24 = pneg %p18
    %p25 = scmp.eq.s32.totalorder %s9, 1
    %p26 = por %p24, %p25
    %p27 = scmp.ne.s32.totalorder %s19, %s22
    %p28 = scmp.eq.s32.totalorder %s9, 0
    %p29 = por %p27, %p28
    %p30 = scmp.ne.s32.totalorder %s19, %s22
    %p31 = scmp.eq.s32.totalorder %s14, 1
    %p32 = por %p30, %p31
    %p33 = scmp.ne.s32.totalorder %s22, %s23
    %p34 = scmp.eq.s32.totalorder %s14, 0
    %p35 = por %p33, %p34
    %p36 = scmp.ne.s32.totalorder %s22, %s23
    %p37 = scmp.eq.s32.totalorder %s15, 1
    %p38 = por %p36, %p37
    %p40 = scmp.ne.s32.totalorder %s23, %s39
    %p41 = scmp.eq.s32.totalorder %s15, 0
    %p42 = por %p40, %p41
    %s44 = sadd.s32 %s43, 1
    %p47 = scmp.eq.s32.totalorder %s9, 1
    %p48 = scmp.ne.s32.totalorder %s43, %s45
    %p49 = scmp.eq.s32.totalorder %s9, 0
    %p50 = por %p48, %p49
    %p51 = scmp.ne.s32.totalorder %s43, %s45
    %p52 = scmp.eq.s32.totalorder %s14, 1
    %p53 = por %p51, %p52
    %p54 = scmp.ne.s32.totalorder %s45, %s46
    %p55 = scmp.eq.s32.totalorder %s14, 0
    %p56 = por %p54, %p55
    %p57 = scmp.ne.s32.totalorder %s45, %s46
    %p58 = scmp.eq.s32.totalorder %s15, 1
    %p59 = por %p57, %p58
    %p61 = scmp.ne.s32.totalorder %s46, %s60
    %p62 = scmp.eq.s32.totalorder %s15, 0
    %p63 = por %p61, %p62
    %s65 = sadd.s32 %s64, 1
    %p68 = scmp.eq.s32.totalorder %s9, 1
    %p69 = scmp.ne.s32.totalorder %s64, %s66
    %p70 = scmp.eq.s32.totalorder %s9, 0
    %p71 = por %p69, %p70
    %p72 = scmp.ne.s32.totalorder %s64, %s66
    %p73 = scmp.eq.s32.totalorder %s14, 1
    %p74 = por %p72, %p73
    %p75 = scmp.ne.s32.totalorder %s66, %s67
    %p76 = scmp.eq.s32.totalorder %s14, 0
    %p77 = por %p75, %p76
    %p78 = scmp.ne.s32.totalorder %s66, %s67
    %p79 = scmp.eq.s32.totalorder %s15, 1
    %p80 = por %p78, %p79
    %p82 = scmp.ne.s32.totalorder %s67, %s81
    %p83 = scmp.eq.s32.totalorder %s15, 0
    %p84 = por %p82, %p83
    %s85 = ssub.s32 %s9, %s16
    %p86 = scmp.eq.s32.totalorder %s85, 0
    %s88 = sadd.s32 %s87, 1
    %s89 = scalar_select %p86, %s87, %s88
    %p92 = pneg %p86
    %p93 = scmp.eq.s32.totalorder %s9, 1
    %p94 = por %p92, %p93
    %p95 = scmp.ne.s32.totalorder %s87, %s90
    %p96 = scmp.eq.s32.totalorder %s9, 0
    %p97 = por %p95, %p96
    %p98 = scmp.ne.s32.totalorder %s87, %s90
    %p99 = scmp.eq.s32.totalorder %s14, 1
    %p100 = por %p98, %p99
    %p101 = scmp.ne.s32.totalorder %s90, %s91
    %p102 = scmp.eq.s32.totalorder %s14, 0
    %p103 = por %p101, %p102
    %p104 = scmp.ne.s32.totalorder %s90, %s91
    %p105 = scmp.eq.s32.totalorder %s15, 1
    %p106 = por %p104, %p105
    %p108 = scmp.ne.s32.totalorder %s91, %s107
    %p109 = scmp.eq.s32.totalorder %s15, 0
    %p110 = por %p108, %p109
    %p111 = scmp.le.s32.totalorder 1, %s9
    %p112 = scmp.lt.s32.totalorder %s9, 3
    %p113 = pnand %p111, %p112
    %p114 = pneg %p113
    // Predicated region
    $region9: #{classi_forward.2} parent=5 // pred_check
      _
    $region10: #{classi_forward.2} parent=5 // pred_check_branch
      %116 = sbr.rel (%p113) target = $region12
    $region11: #{classi_forward.2} parent=5 // pred_region
      %s117 = ssub.s32 %s9, 1
      // Predicated region
      $region13: #{classi_forward.2} parent=11 // pred_check
        %p118 = pneg %p56
      $region14: #{classi_forward.2} parent=11 // pred_check_branch
        %120 = sbr.rel (%p118) target = $region16
      $region15: #{classi_forward.2} parent=11 // pred_region
        _
      $region16: #{classi_forward.2} parent=11 // pred_fallthru
        _
      // Predicated region
      $region17: #{classi_forward.2} parent=11 // pred_check
        %p121 = pneg %p77
      $region18: #{classi_forward.2} parent=11 // pred_check_branch
        %123 = sbr.rel (%p121) target = $region20
      $region19: #{classi_forward.2} parent=11 // pred_region
        _
      $region20: #{classi_forward.2} parent=11 // pred_fallthru
        _
    $region12: #{classi_forward.2} parent=5 // pred_fallthru
      _
    %p124 = scmp.lt.s32.totalorder %s9, 2
    // Predicated region
    $region21: #{classi_forward.2} parent=5 // pred_check
      %p125 = pneg %p124
    $region22: #{classi_forward.2} parent=5 // pred_check_branch
      %127 = sbr.rel (%p125) target = $region24
    $region23: #{classi_forward.2} parent=5 // pred_region
      // Predicated region
      $region25: #{classi_forward.2} parent=23 // pred_check
        %p128 = pneg %p29
      $region26: #{classi_forward.2} parent=23 // pred_check_branch
        %130 = sbr.rel (%p128) target = $region28
      $region27: #{classi_forward.2} parent=23 // pred_region
        %p131 = scmp.lt.s32.totalorder %s9, 1
        %s132 = scalar_select %p131, %s9, 1
        %s133 = smul.addr %s132, 64
        %s134 = smul.addr %s133, 4
        %s135 = scalar_lea.vmem %s0, %s134
      $region28: #{classi_forward.2} parent=23 // pred_fallthru
        _
    $region24: #{classi_forward.2} parent=5 // pred_fallthru
      _
    %p136 = scmp.le.s32.totalorder 1, %s9
    %p137 = scmp.lt.s32.totalorder %s9, 3
    %p138 = pnand %p136, %p137
    %p139 = pneg %p138
    // Predicated region
    $region29: #{classi_forward.2} parent=5 // pred_check
      _
    $region30: #{classi_forward.2} parent=5 // pred_check_branch
      %141 = sbr.rel (%p138) target = $region32
    $region31: #{classi_forward.2} parent=5 // pred_region
      %s142 = ssub.s32 %s9, 1
      %p143 = scmp.lt.s32.totalorder %s14, 1
      %s144 = scalar_select %p143, %s14, 1
      %s145 = smul.addr %s144, 64
      %s146 = smul.addr %s145, 4
      %s147 = scalar_lea.vmem %s0, %s146
      %p148 = pneg %p35
      %p149 = pneg %p32
      %p150 = pneg %p56
      %p151 = pneg %p53
      %p152 = pneg %p77
      %p153 = pneg %p74
      %p154 = pneg %p103
      %p155 = pneg %p100
      %p156 = scmp.lt.s32.totalorder %s14, 1
      %s157 = scalar_select %p156, %s14, 1
      %s158 = smul.addr %s157, 28
      %s159 = smul.addr %s158, 4
      %s160 = scalar_lea.vmem %s3, %s159
      %p161 = scmp.lt.s32.totalorder %s14, 1
      %s162 = scalar_select %p161, %s14, 1
      %s163 = smul.addr %s162, 64
      %s164 = smul.addr %s163, 4
      %s165 = scalar_lea.vmem %s0, %s164
      %p166 = scmp.lt.s32.totalorder %s14, 1
      %s167 = scalar_select %p166, %s14, 1
      %s168 = smul.addr %s167, 28
      %s169 = smul.addr %s168, 4
      %s170 = scalar_lea.vmem %s3, %s169
      %v172 = vld [vmem:[%s165] sm:$0xff]
      %v173 = vld [vmem:[%s165 + $0x8] sm:$0xff]
      %v174 = vld [vmem:[%s165 + $0x10] sm:$0xff]
      %v175 = vld [vmem:[%s165 + $0x18] sm:$0xff]
      %v176 = vld [vmem:[%s165 + $0x20] sm:$0xff]
      %v177 = vld [vmem:[%s165 + $0x28] sm:$0xff]
      %v178 = vld [vmem:[%s165 + $0x30] sm:$0xff]
      %v179 = vld [vmem:[%s165 + $0x38] sm:$0xff]
      %v180 = vld [vmem:[%s165 + $0x40] sm:$0xff]
      %v181 = vld [vmem:[%s165 + $0x48] sm:$0xff]
      %v182 = vld [vmem:[%s165 + $0x50] sm:$0xff]
      %v183 = vld [vmem:[%s165 + $0x58] sm:$0xff]
      %v184 = vld [vmem:[%s165 + $0x60] sm:$0xff]
      %v185 = vld [vmem:[%s165 + $0x68] sm:$0xff]
      %v186 = vld [vmem:[%s165 + $0x70] sm:$0xff]
      %v187 = vld [vmem:[%s165 + $0x78] sm:$0xff]
      %v188 = vld [vmem:[%s165 + $0x80] sm:$0xff]
      %v189 = vld [vmem:[%s165 + $0x88] sm:$0xff]
      %v190 = vld [vmem:[%s165 + $0x90] sm:$0xff]
      %v191 = vld [vmem:[%s165 + $0x98] sm:$0xff]
      %v192 = vld [vmem:[%s165 + $0xa0] sm:$0xff]
      %v193 = vld [vmem:[%s165 + $0xa8] sm:$0xff]
      %v194 = vld [vmem:[%s165 + $0xb0] sm:$0xff]
      %v195 = vld [vmem:[%s165 + $0xb8] sm:$0xff]
      %v196 = vld [vmem:[%s165 + $0xc0] sm:$0xff]
      %v197 = vld [vmem:[%s165 + $0xc8] sm:$0xff]
      %v198 = vld [vmem:[%s165 + $0xd0] sm:$0xff]
      %v199 = vld [vmem:[%s165 + $0xd8] sm:$0xff]
      %v200 = vld [vmem:[%s165 + $0xe0] sm:$0xff]
      %v201 = vld [vmem:[%s165 + $0xe8] sm:$0xff]
      %v202 = vld [vmem:[%s165 + $0xf0] sm:$0xff]
      %v203 = vld [vmem:[%s165 + $0xf8] sm:$0xff]
      %v204 = vld [vmem:[%s1] sm:$0xff]
      %v205 = vld [vmem:[%s1 + $0x8] sm:$0xff]
      %v206 = vld [vmem:[%s1 + $0x10] sm:$0xff]
      %v207 = vld [vmem:[%s1 + $0x18] sm:$0xff]
      %v208 = vld [vmem:[%s1 + $0x20] sm:$0xff]
      %v209 = vld [vmem:[%s1 + $0x28] sm:$0xff]
      %v210 = vld [vmem:[%s1 + $0x30] sm:$0xff]
      %v211 = vld [vmem:[%s1 + $0x38] sm:$0xff]
      %v212 = vld [vmem:[%s1 + $0x40] sm:$0xff]
      %v213 = vld [vmem:[%s1 + $0x48] sm:$0xff]
      %v214 = vld [vmem:[%s1 + $0x50] sm:$0xff]
      %v215 = vld [vmem:[%s1 + $0x58] sm:$0xff]
      %v216 = vld [vmem:[%s1 + $0x60] sm:$0xff]
      %v217 = vld [vmem:[%s1 + $0x68] sm:$0xff]
      %v218 = vld [vmem:[%s1 + $0x70] sm:$0xff]
      %v219 = vld [vmem:[%s1 + $0x78] sm:$0xff]
      %v220 = vld [vmem:[%s1 + $0x80] sm:$0xff]
      %v221 = vld [vmem:[%s1 + $0x88] sm:$0xff]
      %v222 = vld [vmem:[%s1 + $0x90] sm:$0xff]
      %v223 = vld [vmem:[%s1 + $0x98] sm:$0xff]
      %v224 = vld [vmem:[%s1 + $0xa0] sm:$0xff]
      %v225 = vld [vmem:[%s1 + $0xa8] sm:$0xff]
      %v226 = vld [vmem:[%s1 + $0xb0] sm:$0xff]
      %v227 = vld [vmem:[%s1 + $0xb8] sm:$0xff]
      %v228 = vld [vmem:[%s1 + $0xc0] sm:$0xff]
      %v229 = vld [vmem:[%s1 + $0xc8] sm:$0xff]
      %v230 = vld [vmem:[%s1 + $0xd0] sm:$0xff]
      %v231 = vld [vmem:[%s1 + $0xd8] sm:$0x33]
      %v264 = vunpack.c.l.b16 %v172
      %v265 = vunpack.c.h.b16 %v172
      %v266 = vunpack.c.l.b16 %v173
      %v267 = vunpack.c.h.b16 %v173
      %v268 = vunpack.c.l.b16 %v174
      %v269 = vunpack.c.h.b16 %v174
      %v270 = vunpack.c.l.b16 %v175
      %v271 = vunpack.c.h.b16 %v175
      %v272 = vunpack.c.l.b16 %v176
      %v273 = vunpack.c.h.b16 %v176
      %v274 = vunpack.c.l.b16 %v177
      %v275 = vunpack.c.h.b16 %v177
      %v276 = vunpack.c.l.b16 %v178
      %v277 = vunpack.c.h.b16 %v178
      %v278 = vunpack.c.l.b16 %v179
      %v279 = vunpack.c.h.b16 %v179
      %v280 = vunpack.c.l.b16 %v180
      %v281 = vunpack.c.h.b16 %v180
      %v282 = vunpack.c.l.b16 %v181
      %v283 = vunpack.c.h.b16 %v181
      %v284 = vunpack.c.l.b16 %v182
      %v285 = vunpack.c.h.b16 %v182
      %v286 = vunpack.c.l.b16 %v183
      %v287 = vunpack.c.h.b16 %v183
      %v288 = vunpack.c.l.b16 %v184
      %v289 = vunpack.c.h.b16 %v184
      %v290 = vunpack.c.l.b16 %v185
      %v291 = vunpack.c.h.b16 %v185
      %v292 = vunpack.c.l.b16 %v186
      %v293 = vunpack.c.h.b16 %v186
      %v294 = vunpack.c.l.b16 %v187
      %v295 = vunpack.c.h.b16 %v187
      %v296 = vunpack.c.l.b16 %v188
      %v297 = vunpack.c.h.b16 %v188
      %v298 = vunpack.c.l.b16 %v189
      %v299 = vunpack.c.h.b16 %v189
      %v300 = vunpack.c.l.b16 %v190
      %v301 = vunpack.c.h.b16 %v190
      %v302 = vunpack.c.l.b16 %v191
      %v303 = vunpack.c.h.b16 %v191
      %v304 = vunpack.c.l.b16 %v192
      %v305 = vunpack.c.h.b16 %v192
      %v306 = vunpack.c.l.b16 %v193
      %v307 = vunpack.c.h.b16 %v193
      %v308 = vunpack.c.l.b16 %v194
      %v309 = vunpack.c.h.b16 %v194
      %v310 = vunpack.c.l.b16 %v195
      %v311 = vunpack.c.h.b16 %v195
      %v312 = vunpack.c.l.b16 %v196
      %v313 = vunpack.c.h.b16 %v196
      %v314 = vunpack.c.l.b16 %v197
      %v315 = vunpack.c.h.b16 %v197
      %v316 = vunpack.c.l.b16 %v198
      %v317 = vunpack.c.h.b16 %v198
      %v318 = vunpack.c.l.b16 %v199
      %v319 = vunpack.c.h.b16 %v199
      %v320 = vunpack.c.l.b16 %v200
      %v321 = vunpack.c.h.b16 %v200
      %v322 = vunpack.c.l.b16 %v201
      %v323 = vunpack.c.h.b16 %v201
      %v324 = vunpack.c.l.b16 %v202
      %v325 = vunpack.c.h.b16 %v202
      %v326 = vunpack.c.l.b16 %v203
      %v327 = vunpack.c.h.b16 %v203
      %v328 = vpack.c.b16 %v266, %v264
      %v329 = vpack.c.b16 %v267, %v265
      %v330 = vpack.c.b16 %v270, %v268
      %v331 = vpack.c.b16 %v271, %v269
      %v332 = vpack.c.b16 %v274, %v272
      %v333 = vpack.c.b16 %v275, %v273
      %v334 = vpack.c.b16 %v278, %v276
      %v335 = vpack.c.b16 %v279, %v277
      %v336 = vpack.c.b16 %v282, %v280
      %v337 = vpack.c.b16 %v283, %v281
      %v338 = vpack.c.b16 %v286, %v284
      %v339 = vpack.c.b16 %v287, %v285
      %v340 = vpack.c.b16 %v290, %v288
      %v341 = vpack.c.b16 %v291, %v289
      %v342 = vpack.c.b16 %v294, %v292
      %v343 = vpack.c.b16 %v295, %v293
      %v344 = vpack.c.b16 %v298, %v296
      %v345 = vpack.c.b16 %v299, %v297
      %v346 = vpack.c.b16 %v302, %v300
      %v347 = vpack.c.b16 %v303, %v301
      %v348 = vpack.c.b16 %v306, %v304
      %v349 = vpack.c.b16 %v307, %v305
      %v350 = vpack.c.b16 %v310, %v308
      %v351 = vpack.c.b16 %v311, %v309
      %v352 = vpack.c.b16 %v314, %v312
      %v353 = vpack.c.b16 %v315, %v313
      %v354 = vpack.c.b16 %v318, %v316
      %v355 = vpack.c.b16 %v319, %v317
      %v356 = vpack.c.b16 %v322, %v320
      %v357 = vpack.c.b16 %v323, %v321
      %v358 = vpack.c.b16 %v326, %v324
      %v359 = vpack.c.b16 %v327, %v325
      %v404 = vunpack.c.l.b16 %v204
      %v405 = vunpack.c.h.b16 %v204
      %v406 = vunpack.c.l.b16 %v205
      %v407 = vunpack.c.h.b16 %v205
      %v408 = vunpack.c.l.b16 %v206
      %v409 = vunpack.c.h.b16 %v206
      %v410 = vunpack.c.l.b16 %v207
      %v411 = vunpack.c.h.b16 %v207
      %v412 = vunpack.c.l.b16 %v208
      %v413 = vunpack.c.h.b16 %v208
      %v414 = vunpack.c.l.b16 %v209
      %v415 = vunpack.c.h.b16 %v209
      %v416 = vunpack.c.l.b16 %v210
      %v417 = vunpack.c.h.b16 %v210
      %v418 = vunpack.c.l.b16 %v211
      %v419 = vunpack.c.h.b16 %v211
      %v420 = vunpack.c.l.b16 %v212
      %v421 = vunpack.c.h.b16 %v212
      %v422 = vunpack.c.l.b16 %v213
      %v423 = vunpack.c.h.b16 %v213
      %v424 = vunpack.c.l.b16 %v214
      %v425 = vunpack.c.h.b16 %v214
      %v426 = vunpack.c.l.b16 %v215
      %v427 = vunpack.c.h.b16 %v215
      %v428 = vunpack.c.l.b16 %v216
      %v429 = vunpack.c.h.b16 %v216
      %v430 = vunpack.c.l.b16 %v217
      %v431 = vunpack.c.h.b16 %v217
      %v432 = vunpack.c.l.b16 %v218
      %v433 = vunpack.c.h.b16 %v218
      %v434 = vunpack.c.l.b16 %v219
      %v435 = vunpack.c.h.b16 %v219
      %v436 = vunpack.c.l.b16 %v220
      %v437 = vunpack.c.h.b16 %v220
      %v438 = vunpack.c.l.b16 %v221
      %v439 = vunpack.c.h.b16 %v221
      %v440 = vunpack.c.l.b16 %v222
      %v441 = vunpack.c.h.b16 %v222
      %v442 = vunpack.c.l.b16 %v223
      %v443 = vunpack.c.h.b16 %v223
      %v444 = vunpack.c.l.b16 %v224
      %v445 = vunpack.c.h.b16 %v224
      %v446 = vunpack.c.l.b16 %v225
      %v447 = vunpack.c.h.b16 %v225
      %v448 = vunpack.c.l.b16 %v226
      %v449 = vunpack.c.h.b16 %v226
      %v450 = vunpack.c.l.b16 %v227
      %v451 = vunpack.c.h.b16 %v227
      %v452 = vunpack.c.l.b16 %v228
      %v453 = vunpack.c.h.b16 %v228
      %v454 = vunpack.c.l.b16 %v229
      %v455 = vunpack.c.h.b16 %v229
      %v456 = vunpack.c.l.b16 %v230
      %v457 = vunpack.c.h.b16 %v230
      %v458 = vunpack.c.l.b16 %v231
      %v459 = vunpack.c.h.b16 %v231
      %v460 = vpack.c.b16 %v406, %v404
      %v461 = vpack.c.b16 %v407, %v405
      %v462 = vpack.c.b16 %v410, %v408
      %v463 = vpack.c.b16 %v411, %v409
      %v464 = vpack.c.b16 %v414, %v412
      %v465 = vpack.c.b16 %v415, %v413
      %v466 = vpack.c.b16 %v418, %v416
      %v467 = vpack.c.b16 %v419, %v417
      %v468 = vpack.c.b16 %v422, %v420
      %v469 = vpack.c.b16 %v423, %v421
      %v470 = vpack.c.b16 %v426, %v424
      %v471 = vpack.c.b16 %v427, %v425
      %v472 = vpack.c.b16 %v430, %v428
      %v473 = vpack.c.b16 %v431, %v429
      %v474 = vpack.c.b16 %v434, %v432
      %v475 = vpack.c.b16 %v435, %v433
      %v476 = vpack.c.b16 %v438, %v436
      %v477 = vpack.c.b16 %v439, %v437
      %v478 = vpack.c.b16 %v442, %v440
      %v479 = vpack.c.b16 %v443, %v441
      %v480 = vpack.c.b16 %v446, %v444
      %v481 = vpack.c.b16 %v447, %v445
      %v482 = vpack.c.b16 %v450, %v448
      %v483 = vpack.c.b16 %v451, %v449
      %v484 = vpack.c.b16 %v454, %v452
      %v485 = vpack.c.b16 %v455, %v453
      %v486 = vpack.c.b16 %v458, %v456
      %v487 = vpack.c.b16 %v459, %v457
      %vm514 = vcmask 752640
      %v516 = vsel %vm514, %v329, 0
      %v519 = vsel %vm514, %v331, 0
      %v522 = vsel %vm514, %v333, 0
      %v525 = vsel %vm514, %v335, 0
      %v528 = vsel %vm514, %v337, 0
      %v531 = vsel %vm514, %v339, 0
      %v534 = vsel %vm514, %v341, 0
      %v537 = vsel %vm514, %v343, 0
      %v540 = vsel %vm514, %v345, 0
      %v543 = vsel %vm514, %v347, 0
      %v546 = vsel %vm514, %v349, 0
      %v549 = vsel %vm514, %v351, 0
      %v552 = vsel %vm514, %v353, 0
      %v555 = vsel %vm514, %v355, 0
      %v558 = vsel %vm514, %v357, 0
      %v561 = vsel %vm514, %v359, 0
      %vm563 = vcmask 1045504
      %v565 = vsel %vm563, %v486, 0
      %v568 = vsel %vm563, %v487, 0
      %570 = vmatprep.subr.bf16.mxu0 %v461
      %571 = vmatpush1.bf16.msra.mxu0 %v460
      %572 = vmatprep.subr.bf16.mxu0 %v463
      %573 = vmatpush1.bf16.msra.mxu0 %v462
      %574 = vmatprep.subr.bf16.mxu0 %v465
      %575 = vmatpush1.bf16.msra.mxu0 %v464
      %576 = vmatprep.subr.bf16.mxu0 %v467
      %577 = vmatpush1.bf16.msra.mxu0 %v466
      %578 = vmatprep.subr.bf16.mxu0 %v469
      %579 = vmatpush1.bf16.msra.mxu0 %v468
      %580 = vmatprep.subr.bf16.mxu0 %v471
      %581 = vmatpush1.bf16.msra.mxu0 %v470
      %582 = vmatprep.subr.bf16.mxu0 %v473
      %583 = vmatpush1.bf16.msra.mxu0 %v472
      %584 = vmatprep.subr.bf16.mxu0 %v475
      %585 = vmatpush1.bf16.msra.mxu0 %v474
      %586 = vmatprep.subr.bf16.mxu0 %v477
      %587 = vmatpush1.bf16.msra.mxu0 %v476
      %588 = vmatprep.subr.bf16.mxu0 %v479
      %589 = vmatpush1.bf16.msra.mxu0 %v478
      %590 = vmatprep.subr.bf16.mxu0 %v481
      %591 = vmatpush1.bf16.msra.mxu0 %v480
      %592 = vmatprep.subr.bf16.mxu0 %v483
      %593 = vmatpush1.bf16.msra.mxu0 %v482
      %594 = vmatprep.subr.bf16.mxu0 %v485
      %595 = vmatpush1.bf16.msra.mxu0 %v484
      %596 = vmatprep.subr.bf16.mxu0 %v568
      %597 = vmatpush1.bf16.msra.mxu0 %v565
      %598 = vmatprep.subr.bf16.mxu0 0
      %599 = vmatpush1.bf16.msra.mxu0 0
      %600 = vmatprep.subr.bf16.mxu0 0
      %601 = vmatpush1.bf16.msra.mxu0 0
      %602 = vmatprep.mubr.bf16.mxu0 %v516
      %603 = vmatmul.mubr.bf16.gmra.mrb[0].mxu0 %v328
      %v604 = vpop.f32.mrb[0].mxu0
      %v605 = vadd.f32 0.0, %v604
      %v606 = vpop.f32.mrb[0].mxu0
      %v607 = vpop.f32.mrb[0].mxu0
      %v608 = vadd.f32 0.0, %v607
      %v609 = vpop.f32.mrb[0].mxu0
      %610 = vmatprep.mubr.bf16.mxu0 %v519
      %611 = vmatmul.mubr.bf16.gmra.mrb[0].mxu0 %v330
      %v612 = vpop.f32.mrb[0].mxu0
      %v613 = vadd.f32 0.0, %v612
      %v614 = vpop.f32.mrb[0].mxu0
      %v615 = vpop.f32.mrb[0].mxu0
      %v616 = vadd.f32 0.0, %v615
      %v617 = vpop.f32.mrb[0].mxu0
      %618 = vmatprep.mubr.bf16.mxu0 %v522
      %619 = vmatmul.mubr.bf16.gmra.mrb[0].mxu0 %v332
      %v620 = vpop.f32.mrb[0].mxu0
      %v621 = vadd.f32 0.0, %v620
      %v622 = vpop.f32.mrb[0].mxu0
      %v623 = vadd.f32 0.0, %v622
      %v624 = vpop.f32.mrb[0].mxu0
      %v625 = vadd.f32 0.0, %v624
      %v626 = vpop.f32.mrb[0].mxu0
      %v627 = vadd.f32 0.0, %v626
      %628 = vmatprep.mubr.bf16.mxu0 %v525
      %629 = vmatmul.mubr.bf16.gmra.mrb[0].mxu0 %v334
      %v630 = vpop.f32.mrb[0].mxu0
      %v631 = vadd.f32 0.0, %v630
      %v632 = vpop.f32.mrb[0].mxu0
      %v633 = vadd.f32 0.0, %v632
      %v634 = vpop.f32.mrb[0].mxu0
      %v635 = vadd.f32 0.0, %v634
      %v636 = vpop.f32.mrb[0].mxu0
      %v637 = vadd.f32 0.0, %v636
      %638 = vmatprep.mubr.bf16.mxu0 %v528
      %639 = vmatmul.mubr.bf16.gmra.mrb[0].mxu0 %v336
      %v640 = vpop.f32.mrb[0].mxu0
      %v641 = vadd.f32 0.0, %v640
      %v642 = vpop.f32.mrb[0].mxu0
      %v643 = vadd.f32 0.0, %v642
      %v644 = vpop.f32.mrb[0].mxu0
      %v645 = vadd.f32 0.0, %v644
      %v646 = vpop.f32.mrb[0].mxu0
      %v647 = vadd.f32 0.0, %v646
      %648 = vmatprep.mubr.bf16.mxu0 %v531
      %649 = vmatmul.mubr.bf16.gmra.mrb[0].mxu0 %v338
      %v650 = vpop.f32.mrb[0].mxu0
      %v651 = vadd.f32 0.0, %v650
      %v652 = vpop.f32.mrb[0].mxu0
      %v653 = vadd.f32 0.0, %v652
      %v654 = vpop.f32.mrb[0].mxu0
      %v655 = vadd.f32 0.0, %v654
      %v656 = vpop.f32.mrb[0].mxu0
      %v657 = vadd.f32 0.0, %v656
      %658 = vmatprep.mubr.bf16.mxu0 %v534
      %659 = vmatmul.mubr.bf16.gmra.mrb[0].mxu0 %v340
      %v660 = vpop.f32.mrb[0].mxu0
      %v661 = vadd.f32 0.0, %v660
      %v662 = vpop.f32.mrb[0].mxu0
      %v663 = vadd.f32 0.0, %v662
      %v664 = vpop.f32.mrb[0].mxu0
      %v665 = vadd.f32 0.0, %v664
      %v666 = vpop.f32.mrb[0].mxu0
      %v667 = vadd.f32 0.0, %v666
      %668 = vmatprep.mubr.bf16.mxu0 %v537
      %669 = vmatmul.mubr.bf16.gmra.mrb[0].mxu0 %v342
      %v670 = vpop.f32.mrb[0].mxu0
      %v671 = vadd.f32 0.0, %v670
      %v672 = vpop.f32.mrb[0].mxu0
      %v673 = vadd.f32 0.0, %v672
      %v674 = vpop.f32.mrb[0].mxu0
      %v675 = vadd.f32 0.0, %v674
      %v676 = vpop.f32.mrb[0].mxu0
      %v677 = vadd.f32 0.0, %v676
      %678 = vmatprep.mubr.bf16.mxu0 %v540
      %679 = vmatmul.mubr.bf16.gmra.mrb[0].mxu0 %v344
      %v680 = vpop.f32.mrb[0].mxu0
      %v681 = vadd.f32 0.0, %v680
      %v682 = vpop.f32.mrb[0].mxu0
      %v683 = vadd.f32 0.0, %v682
      %v684 = vpop.f32.mrb[0].mxu0
      %v685 = vadd.f32 0.0, %v684
      %v686 = vpop.f32.mrb[0].mxu0
      %v687 = vadd.f32 0.0, %v686
      %688 = vmatprep.mubr.bf16.mxu0 %v543
      %689 = vmatmul.mubr.bf16.gmra.mrb[0].mxu0 %v346
      %v690 = vpop.f32.mrb[0].mxu0
      %v691 = vadd.f32 0.0, %v690
      %v692 = vpop.f32.mrb[0].mxu0
      %v693 = vadd.f32 0.0, %v692
      %v694 = vpop.f32.mrb[0].mxu0
      %v695 = vadd.f32 0.0, %v694
      %v696 = vpop.f32.mrb[0].mxu0
      %v697 = vadd.f32 0.0, %v696
      %698 = vmatprep.mubr.bf16.mxu0 %v546
      %699 = vmatmul.mubr.bf16.gmra.mrb[0].mxu0 %v348
      %v700 = vpop.f32.mrb[0].mxu0
      %v701 = vadd.f32 0.0, %v700
      %v702 = vpop.f32.mrb[0].mxu0
      %v703 = vadd.f32 0.0, %v702
      %v704 = vpop.f32.mrb[0].mxu0
      %v705 = vadd.f32 0.0, %v704
      %v706 = vpop.f32.mrb[0].mxu0
      %v707 = vadd.f32 0.0, %v706
      %708 = vmatprep.mubr.bf16.mxu0 %v549
      %709 = vmatmul.mubr.bf16.gmra.mrb[0].mxu0 %v350
      %v710 = vpop.f32.mrb[0].mxu0
      %v711 = vadd.f32 0.0, %v710
      %v712 = vpop.f32.mrb[0].mxu0
      %v713 = vadd.f32 0.0, %v712
      %v714 = vpop.f32.mrb[0].mxu0
      %v715 = vadd.f32 0.0, %v714
      %v716 = vpop.f32.mrb[0].mxu0
      %v717 = vadd.f32 0.0, %v716
      %718 = vmatprep.mubr.bf16.mxu0 %v552
      %719 = vmatmul.mubr.bf16.gmra.mrb[0].mxu0 %v352
      %v720 = vpop.f32.mrb[0].mxu0
      %v721 = vadd.f32 0.0, %v720
      %v722 = vpop.f32.mrb[0].mxu0
      %v723 = vadd.f32 0.0, %v722
      %v724 = vpop.f32.mrb[0].mxu0
      %v725 = vadd.f32 0.0, %v724
      %v726 = vpop.f32.mrb[0].mxu0
      %v727 = vadd.f32 0.0, %v726
      %728 = vmatprep.mubr.bf16.mxu0 %v555
      %729 = vmatmul.mubr.bf16.gmra.mrb[0].mxu0 %v354
      %v730 = vpop.f32.mrb[0].mxu0
      %v731 = vadd.f32 0.0, %v730
      %v732 = vpop.f32.mrb[0].mxu0
      %v733 = vadd.f32 0.0, %v732
      %v734 = vpop.f32.mrb[0].mxu0
      %v735 = vadd.f32 0.0, %v734
      %v736 = vpop.f32.mrb[0].mxu0
      %v737 = vadd.f32 0.0, %v736
      %738 = vmatprep.mubr.bf16.mxu0 %v558
      %739 = vmatmul.mubr.bf16.gmra.mrb[0].mxu0 %v356
      %v740 = vpop.f32.mrb[0].mxu0
      %v741 = vadd.f32 0.0, %v740
      %v742 = vpop.f32.mrb[0].mxu0
      %v743 = vadd.f32 0.0, %v742
      %v744 = vpop.f32.mrb[0].mxu0
      %v745 = vadd.f32 0.0, %v744
      %v746 = vpop.f32.mrb[0].mxu0
      %v747 = vadd.f32 0.0, %v746
      %748 = vmatprep.mubr.bf16.mxu0 %v561
      %749 = vmatmul.mubr.bf16.gmra.mrb[0].mxu0 %v358
      %v750 = vpop.f32.mrb[0].mxu0
      %v751 = vadd.f32 0.0, %v750
      %v752 = vpop.f32.mrb[0].mxu0
      %v753 = vadd.f32 0.0, %v752
      %v754 = vpop.f32.mrb[0].mxu0
      %v755 = vadd.f32 0.0, %v754
      %v756 = vpop.f32.mrb[0].mxu0
      %v757 = vadd.f32 0.0, %v756
      %758 = vdwg.mxu0
      %vm787 = vcmask 1046528
      %v788 = vrot.slane %v605, 1
      %v789 = vrot.slane %v608, 1
      %v790 = vsel %vm787, %v788, %v789
      %v791 = vrot.slane %v613, 1
      %v792 = vrot.slane %v616, 1
      %v793 = vsel %vm787, %v791, %v792
      %v794 = vrot.slane %v621, 1
      %v795 = vrot.slane %v625, 1
      %v796 = vsel %vm787, %v794, %v795
      %v797 = vrot.slane %v631, 1
      %v798 = vrot.slane %v635, 1
      %v799 = vsel %vm787, %v797, %v798
      %v800 = vrot.slane %v641, 1
      %v801 = vrot.slane %v645, 1
      %v802 = vsel %vm787, %v800, %v801
      %v803 = vrot.slane %v651, 1
      %v804 = vrot.slane %v655, 1
      %v805 = vsel %vm787, %v803, %v804
      %v806 = vrot.slane %v661, 1
      %v807 = vrot.slane %v665, 1
      %v808 = vsel %vm787, %v806, %v807
      %v809 = vrot.slane %v671, 1
      %v810 = vrot.slane %v675, 1
      %v811 = vsel %vm787, %v809, %v810
      %v812 = vrot.slane %v681, 1
      %v813 = vrot.slane %v685, 1
      %v814 = vsel %vm787, %v812, %v813
      %v815 = vrot.slane %v691, 1
      %v816 = vrot.slane %v695, 1
      %v817 = vsel %vm787, %v815, %v816
      %v818 = vrot.slane %v701, 1
      %v819 = vrot.slane %v705, 1
      %v820 = vsel %vm787, %v818, %v819
      %v821 = vrot.slane %v711, 1
      %v822 = vrot.slane %v715, 1
      %v823 = vsel %vm787, %v821, %v822
      %v824 = vrot.slane %v721, 1
      %v825 = vrot.slane %v725, 1
      %v826 = vsel %vm787, %v824, %v825
      %v827 = vrot.slane %v731, 1
      %v828 = vrot.slane %v735, 1
      %v829 = vsel %vm787, %v827, %v828
      %830 = vrot.lane.b32.xlu0 %v790, 112
      %v831 = vpop.permute.xlu0 %830
      %832 = vrot.lane.b32.xlu0 %v789, 112
      %v833 = vpop.permute.xlu0 %832
      %834 = vrot.lane.b32.xlu0 %v793, 112
      %v835 = vpop.permute.xlu0 %834
      %836 = vrot.lane.b32.xlu0 %v792, 112
      %v837 = vpop.permute.xlu0 %836
      %838 = vrot.lane.b32.xlu0 %v796, 112
      %v839 = vpop.permute.xlu0 %838
      %840 = vrot.lane.b32.xlu0 %v795, 112
      %v841 = vpop.permute.xlu0 %840
      %842 = vrot.lane.b32.xlu0 %v799, 112
      %v843 = vpop.permute.xlu0 %842
      %844 = vrot.lane.b32.xlu0 %v798, 112
      %v845 = vpop.permute.xlu0 %844
      %846 = vrot.lane.b32.xlu0 %v802, 112
      %v847 = vpop.permute.xlu0 %846
      %848 = vrot.lane.b32.xlu0 %v801, 112
      %v849 = vpop.permute.xlu0 %848
      %850 = vrot.lane.b32.xlu0 %v805, 112
      %v851 = vpop.permute.xlu0 %850
      %852 = vrot.lane.b32.xlu0 %v804, 112
      %v853 = vpop.permute.xlu0 %852
      %854 = vrot.lane.b32.xlu0 %v808, 112
      %v855 = vpop.permute.xlu0 %854
      %856 = vrot.lane.b32.xlu0 %v807, 112
      %v857 = vpop.permute.xlu0 %856
      %858 = vrot.lane.b32.xlu0 %v811, 112
      %v859 = vpop.permute.xlu0 %858
      %860 = vrot.lane.b32.xlu0 %v810, 112
      %v861 = vpop.permute.xlu0 %860
      %862 = vrot.lane.b32.xlu0 %v814, 112
      %v863 = vpop.permute.xlu0 %862
      %864 = vrot.lane.b32.xlu0 %v813, 112
      %v865 = vpop.permute.xlu0 %864
      %866 = vrot.lane.b32.xlu0 %v817, 112
      %v867 = vpop.permute.xlu0 %866
      %868 = vrot.lane.b32.xlu0 %v816, 112
      %v869 = vpop.permute.xlu0 %868
      %870 = vrot.lane.b32.xlu0 %v820, 112
      %v871 = vpop.permute.xlu0 %870
      %872 = vrot.lane.b32.xlu0 %v819, 112
      %v873 = vpop.permute.xlu0 %872
      %874 = vrot.lane.b32.xlu0 %v823, 112
      %v875 = vpop.permute.xlu0 %874
      %876 = vrot.lane.b32.xlu0 %v822, 112
      %v877 = vpop.permute.xlu0 %876
      %878 = vrot.lane.b32.xlu0 %v826, 112
      %v879 = vpop.permute.xlu0 %878
      %880 = vrot.lane.b32.xlu0 %v825, 112
      %v881 = vpop.permute.xlu0 %880
      %882 = vrot.lane.b32.xlu0 %v829, 112
      %v883 = vpop.permute.xlu0 %882
      %884 = vrot.lane.b32.xlu0 %v828, 112
      %v885 = vpop.permute.xlu0 %884
      %v914 = vadd.f32 %v605, %v831
      %v915 = vadd.f32 %v608, %v833
      %v916 = vadd.f32 %v613, %v835
      %v917 = vadd.f32 %v616, %v837
      %v918 = vadd.f32 %v621, %v839
      %v919 = vadd.f32 %v625, %v841
      %v920 = vadd.f32 %v631, %v843
      %v921 = vadd.f32 %v635, %v845
      %v922 = vadd.f32 %v641, %v847
      %v923 = vadd.f32 %v645, %v849
      %v924 = vadd.f32 %v651, %v851
      %v925 = vadd.f32 %v655, %v853
      %v926 = vadd.f32 %v661, %v855
      %v927 = vadd.f32 %v665, %v857
      %v928 = vadd.f32 %v671, %v859
      %v929 = vadd.f32 %v675, %v861
      %v930 = vadd.f32 %v681, %v863
      %v931 = vadd.f32 %v685, %v865
      %v932 = vadd.f32 %v691, %v867
      %v933 = vadd.f32 %v695, %v869
      %v934 = vadd.f32 %v701, %v871
      %v935 = vadd.f32 %v705, %v873
      %v936 = vadd.f32 %v711, %v875
      %v937 = vadd.f32 %v715, %v877
      %v938 = vadd.f32 %v721, %v879
      %v939 = vadd.f32 %v725, %v881
      %v940 = vadd.f32 %v731, %v883
      %v941 = vadd.f32 %v735, %v885
      %v942 = vrot.slane %v605, 2
      %v943 = vrot.slane %v608, 2
      %v944 = vsel %vm563, %v942, %v943
      %v945 = vrot.slane %v613, 2
      %v946 = vrot.slane %v616, 2
      %v947 = vsel %vm563, %v945, %v946
      %v948 = vrot.slane %v621, 2
      %v949 = vrot.slane %v625, 2
      %v950 = vsel %vm563, %v948, %v949
      %v951 = vrot.slane %v631, 2
      %v952 = vrot.slane %v635, 2
      %v953 = vsel %vm563, %v951, %v952
      %v954 = vrot.slane %v641, 2
      %v955 = vrot.slane %v645, 2
      %v956 = vsel %vm563, %v954, %v955
      %v957 = vrot.slane %v651, 2
      %v958 = vrot.slane %v655, 2
      %v959 = vsel %vm563, %v957, %v958
      %v960 = vrot.slane %v661, 2
      %v961 = vrot.slane %v665, 2
      %v962 = vsel %vm563, %v960, %v961
      %v963 = vrot.slane %v671, 2
      %v964 = vrot.slane %v675, 2
      %v965 = vsel %vm563, %v963, %v964
      %v966 = vrot.slane %v681, 2
      %v967 = vrot.slane %v685, 2
      %v968 = vsel %vm563, %v966, %v967
      %v969 = vrot.slane %v691, 2
      %v970 = vrot.slane %v695, 2
      %v971 = vsel %vm563, %v969, %v970
      %v972 = vrot.slane %v701, 2
      %v973 = vrot.slane %v705, 2
      %v974 = vsel %vm563, %v972, %v973
      %v975 = vrot.slane %v711, 2
      %v976 = vrot.slane %v715, 2
      %v977 = vsel %vm563, %v975, %v976
      %v978 = vrot.slane %v721, 2
      %v979 = vrot.slane %v725, 2
      %v980 = vsel %vm563, %v978, %v979
      %v981 = vrot.slane %v731, 2
      %v982 = vrot.slane %v735, 2
      %v983 = vsel %vm563, %v981, %v982
      %984 = vrot.lane.b32.xlu0 %v944, 96
      %v985 = vpop.permute.xlu0 %984
      %986 = vrot.lane.b32.xlu0 %v943, 96
      %v987 = vpop.permute.xlu0 %986
      %988 = vrot.lane.b32.xlu0 %v947, 96
      %v989 = vpop.permute.xlu0 %988
      %990 = vrot.lane.b32.xlu0 %v946, 96
      %v991 = vpop.permute.xlu0 %990
      %992 = vrot.lane.b32.xlu0 %v950, 96
      %v993 = vpop.permute.xlu0 %992
      %994 = vrot.lane.b32.xlu0 %v949, 96
      %v995 = vpop.permute.xlu0 %994
      %996 = vrot.lane.b32.xlu0 %v953, 96
      %v997 = vpop.permute.xlu0 %996
      %998 = vrot.lane.b32.xlu0 %v952, 96
      %v999 = vpop.permute.xlu0 %998
      %1000 = vrot.lane.b32.xlu0 %v956, 96
      %v1001 = vpop.permute.xlu0 %1000
      %1002 = vrot.lane.b32.xlu0 %v955, 96
      %v1003 = vpop.permute.xlu0 %1002
      %1004 = vrot.lane.b32.xlu0 %v959, 96
      %v1005 = vpop.permute.xlu0 %1004
      %1006 = vrot.lane.b32.xlu0 %v958, 96
      %v1007 = vpop.permute.xlu0 %1006
      %1008 = vrot.lane.b32.xlu0 %v962, 96
      %v1009 = vpop.permute.xlu0 %1008
      %1010 = vrot.lane.b32.xlu0 %v961, 96
      %v1011 = vpop.permute.xlu0 %1010
      %1012 = vrot.lane.b32.xlu0 %v965, 96
      %v1013 = vpop.permute.xlu0 %1012
      %1014 = vrot.lane.b32.xlu0 %v964, 96
      %v1015 = vpop.permute.xlu0 %1014
      %1016 = vrot.lane.b32.xlu0 %v968, 96
      %v1017 = vpop.permute.xlu0 %1016
      %1018 = vrot.lane.b32.xlu0 %v967, 96
      %v1019 = vpop.permute.xlu0 %1018
      %1020 = vrot.lane.b32.xlu0 %v971, 96
      %v1021 = vpop.permute.xlu0 %1020
      %1022 = vrot.lane.b32.xlu0 %v970, 96
      %v1023 = vpop.permute.xlu0 %1022
      %1024 = vrot.lane.b32.xlu0 %v974, 96
      %v1025 = vpop.permute.xlu0 %1024
      %1026 = vrot.lane.b32.xlu0 %v973, 96
      %v1027 = vpop.permute.xlu0 %1026
      %1028 = vrot.lane.b32.xlu0 %v977, 96
      %v1029 = vpop.permute.xlu0 %1028
      %1030 = vrot.lane.b32.xlu0 %v976, 96
      %v1031 = vpop.permute.xlu0 %1030
      %1032 = vrot.lane.b32.xlu0 %v980, 96
      %v1033 = vpop.permute.xlu0 %1032
      %1034 = vrot.lane.b32.xlu0 %v979, 96
      %v1035 = vpop.permute.xlu0 %1034
      %1036 = vrot.lane.b32.xlu0 %v983, 96
      %v1037 = vpop.permute.xlu0 %1036
      %1038 = vrot.lane.b32.xlu0 %v982, 96
      %v1039 = vpop.permute.xlu0 %1038
      %v1068 = vadd.f32 %v914, %v985
      %v1069 = vadd.f32 %v915, %v987
      %v1070 = vadd.f32 %v916, %v989
      %v1071 = vadd.f32 %v917, %v991
      %v1072 = vadd.f32 %v918, %v993
      %v1073 = vadd.f32 %v919, %v995
      %v1074 = vadd.f32 %v920, %v997
      %v1075 = vadd.f32 %v921, %v999
      %v1076 = vadd.f32 %v922, %v1001
      %v1077 = vadd.f32 %v923, %v1003
      %v1078 = vadd.f32 %v924, %v1005
      %v1079 = vadd.f32 %v925, %v1007
      %v1080 = vadd.f32 %v926, %v1009
      %v1081 = vadd.f32 %v927, %v1011
      %v1082 = vadd.f32 %v928, %v1013
      %v1083 = vadd.f32 %v929, %v1015
      %v1084 = vadd.f32 %v930, %v1017
      %v1085 = vadd.f32 %v931, %v1019
      %v1086 = vadd.f32 %v932, %v1021
      %v1087 = vadd.f32 %v933, %v1023
      %v1088 = vadd.f32 %v934, %v1025
      %v1089 = vadd.f32 %v935, %v1027
      %v1090 = vadd.f32 %v936, %v1029
      %v1091 = vadd.f32 %v937, %v1031
      %v1092 = vadd.f32 %v938, %v1033
      %v1093 = vadd.f32 %v939, %v1035
      %v1094 = vadd.f32 %v940, %v1037
      %v1095 = vadd.f32 %v941, %v1039
      %1098 = vrot.lane.b32.xlu0 %v613, 80
      %v1099 = vpop.permute.xlu0 %1098
      %1100 = vrot.lane.b32.xlu0 %v616, 80
      %v1101 = vpop.permute.xlu0 %1100
      %1102 = vrot.lane.b32.xlu0 %v621, 80
      %v1103 = vpop.permute.xlu0 %1102
      %1104 = vrot.lane.b32.xlu0 %v625, 80
      %v1105 = vpop.permute.xlu0 %1104
      %1106 = vrot.lane.b32.xlu0 %v631, 80
      %v1107 = vpop.permute.xlu0 %1106
      %1108 = vrot.lane.b32.xlu0 %v635, 80
      %v1109 = vpop.permute.xlu0 %1108
      %1110 = vrot.lane.b32.xlu0 %v641, 80
      %v1111 = vpop.permute.xlu0 %1110
      %1112 = vrot.lane.b32.xlu0 %v645, 80
      %v1113 = vpop.permute.xlu0 %1112
      %1114 = vrot.lane.b32.xlu0 %v651, 80
      %v1115 = vpop.permute.xlu0 %1114
      %1116 = vrot.lane.b32.xlu0 %v655, 80
      %v1117 = vpop.permute.xlu0 %1116
      %1118 = vrot.lane.b32.xlu0 %v661, 80
      %v1119 = vpop.permute.xlu0 %1118
      %1120 = vrot.lane.b32.xlu0 %v665, 80
      %v1121 = vpop.permute.xlu0 %1120
      %1122 = vrot.lane.b32.xlu0 %v671, 80
      %v1123 = vpop.permute.xlu0 %1122
      %1124 = vrot.lane.b32.xlu0 %v675, 80
      %v1125 = vpop.permute.xlu0 %1124
      %1126 = vrot.lane.b32.xlu0 %v681, 80
      %v1127 = vpop.permute.xlu0 %1126
      %1128 = vrot.lane.b32.xlu0 %v685, 80
      %v1129 = vpop.permute.xlu0 %1128
      %1130 = vrot.lane.b32.xlu0 %v691, 80
      %v1131 = vpop.permute.xlu0 %1130
      %1132 = vrot.lane.b32.xlu0 %v695, 80
      %v1133 = vpop.permute.xlu0 %1132
      %1134 = vrot.lane.b32.xlu0 %v701, 80
      %v1135 = vpop.permute.xlu0 %1134
      %1136 = vrot.lane.b32.xlu0 %v705, 80
      %v1137 = vpop.permute.xlu0 %1136
      %1138 = vrot.lane.b32.xlu0 %v711, 80
      %v1139 = vpop.permute.xlu0 %1138
      %1140 = vrot.lane.b32.xlu0 %v715, 80
      %v1141 = vpop.permute.xlu0 %1140
      %1142 = vrot.lane.b32.xlu0 %v721, 80
      %v1143 = vpop.permute.xlu0 %1142
      %1144 = vrot.lane.b32.xlu0 %v725, 80
      %v1145 = vpop.permute.xlu0 %1144
      %1146 = vrot.lane.b32.xlu0 %v731, 80
      %v1147 = vpop.permute.xlu0 %1146
      %1148 = vrot.lane.b32.xlu0 %v735, 80
      %v1149 = vpop.permute.xlu0 %1148
      %1150 = vrot.lane.b32.xlu0 %v741, 80
      %v1151 = vpop.permute.xlu0 %1150
      %1152 = vrot.lane.b32.xlu0 %v745, 80
      %v1153 = vpop.permute.xlu0 %1152
      %v1182 = vadd.f32 %v1068, %v1099
      %v1183 = vadd.f32 %v1069, %v1101
      %v1184 = vadd.f32 %v1070, %v1103
      %v1185 = vadd.f32 %v1071, %v1105
      %v1186 = vadd.f32 %v1072, %v1107
      %v1187 = vadd.f32 %v1073, %v1109
      %v1188 = vadd.f32 %v1074, %v1111
      %v1189 = vadd.f32 %v1075, %v1113
      %v1190 = vadd.f32 %v1076, %v1115
      %v1191 = vadd.f32 %v1077, %v1117
      %v1192 = vadd.f32 %v1078, %v1119
      %v1193 = vadd.f32 %v1079, %v1121
      %v1194 = vadd.f32 %v1080, %v1123
      %v1195 = vadd.f32 %v1081, %v1125
      %v1196 = vadd.f32 %v1082, %v1127
      %v1197 = vadd.f32 %v1083, %v1129
      %v1198 = vadd.f32 %v1084, %v1131
      %v1199 = vadd.f32 %v1085, %v1133
      %v1200 = vadd.f32 %v1086, %v1135
      %v1201 = vadd.f32 %v1087, %v1137
      %v1202 = vadd.f32 %v1088, %v1139
      %v1203 = vadd.f32 %v1089, %v1141
      %v1204 = vadd.f32 %v1090, %v1143
      %v1205 = vadd.f32 %v1091, %v1145
      %v1206 = vadd.f32 %v1092, %v1147
      %v1207 = vadd.f32 %v1093, %v1149
      %v1208 = vadd.f32 %v1094, %v1151
      %v1209 = vadd.f32 %v1095, %v1153
      %v1210 = vrot.slane %v741, 1
      %v1211 = vrot.slane %v745, 1
      %v1212 = vsel %vm787, %v1210, %v1211
      %1213 = vrot.lane.b32.xlu0 %v793, 64
      %v1214 = vpop.permute.xlu0 %1213
      %1215 = vrot.lane.b32.xlu0 %v792, 64
      %v1216 = vpop.permute.xlu0 %1215
      %1217 = vrot.lane.b32.xlu0 %v796, 64
      %v1218 = vpop.permute.xlu0 %1217
      %1219 = vrot.lane.b32.xlu0 %v795, 64
      %v1220 = vpop.permute.xlu0 %1219
      %1221 = vrot.lane.b32.xlu0 %v799, 64
      %v1222 = vpop.permute.xlu0 %1221
      %1223 = vrot.lane.b32.xlu0 %v798, 64
      %v1224 = vpop.permute.xlu0 %1223
      %1225 = vrot.lane.b32.xlu0 %v802, 64
      %v1226 = vpop.permute.xlu0 %1225
      %1227 = vrot.lane.b32.xlu0 %v801, 64
      %v1228 = vpop.permute.xlu0 %1227
      %1229 = vrot.lane.b32.xlu0 %v805, 64
      %v1230 = vpop.permute.xlu0 %1229
      %1231 = vrot.lane.b32.xlu0 %v804, 64
      %v1232 = vpop.permute.xlu0 %1231
      %1233 = vrot.lane.b32.xlu0 %v808, 64
      %v1234 = vpop.permute.xlu0 %1233
      %1235 = vrot.lane.b32.xlu0 %v807, 64
      %v1236 = vpop.permute.xlu0 %1235
      %1237 = vrot.lane.b32.xlu0 %v811, 64
      %v1238 = vpop.permute.xlu0 %1237
      %1239 = vrot.lane.b32.xlu0 %v810, 64
      %v1240 = vpop.permute.xlu0 %1239
      %1241 = vrot.lane.b32.xlu0 %v814, 64
      %v1242 = vpop.permute.xlu0 %1241
      %1243 = vrot.lane.b32.xlu0 %v813, 64
      %v1244 = vpop.permute.xlu0 %1243
      %1245 = vrot.lane.b32.xlu0 %v817, 64
      %v1246 = vpop.permute.xlu0 %1245
      %1247 = vrot.lane.b32.xlu0 %v816, 64
      %v1248 = vpop.permute.xlu0 %1247
      %1249 = vrot.lane.b32.xlu0 %v820, 64
      %v1250 = vpop.permute.xlu0 %1249
      %1251 = vrot.lane.b32.xlu0 %v819, 64
      %v1252 = vpop.permute.xlu0 %1251
      %1253 = vrot.lane.b32.xlu0 %v823, 64
      %v1254 = vpop.permute.xlu0 %1253
      %1255 = vrot.lane.b32.xlu0 %v822, 64
      %v1256 = vpop.permute.xlu0 %1255
      %1257 = vrot.lane.b32.xlu0 %v826, 64
      %v1258 = vpop.permute.xlu0 %1257
      %1259 = vrot.lane.b32.xlu0 %v825, 64
      %v1260 = vpop.permute.xlu0 %1259
      %1261 = vrot.lane.b32.xlu0 %v829, 64
      %v1262 = vpop.permute.xlu0 %1261
      %1263 = vrot.lane.b32.xlu0 %v828, 64
      %v1264 = vpop.permute.xlu0 %1263
      %1265 = vrot.lane.b32.xlu0 %v1212, 64
      %v1266 = vpop.permute.xlu0 %1265
      %1267 = vrot.lane.b32.xlu0 %v1211, 64
      %v1268 = vpop.permute.xlu0 %1267
      %v1297 = vadd.f32 %v1182, %v1214
      %v1298 = vadd.f32 %v1183, %v1216
      %v1299 = vadd.f32 %v1184, %v1218
      %v1300 = vadd.f32 %v1185, %v1220
      %v1301 = vadd.f32 %v1186, %v1222
      %v1302 = vadd.f32 %v1187, %v1224
      %v1303 = vadd.f32 %v1188, %v1226
      %v1304 = vadd.f32 %v1189, %v1228
      %v1305 = vadd.f32 %v1190, %v1230
      %v1306 = vadd.f32 %v1191, %v1232
      %v1307 = vadd.f32 %v1192, %v1234
      %v1308 = vadd.f32 %v1193, %v1236
      %v1309 = vadd.f32 %v1194, %v1238
      %v1310 = vadd.f32 %v1195, %v1240
      %v1311 = vadd.f32 %v1196, %v1242
      %v1312 = vadd.f32 %v1197, %v1244
      %v1313 = vadd.f32 %v1198, %v1246
      %v1314 = vadd.f32 %v1199, %v1248
      %v1315 = vadd.f32 %v1200, %v1250
      %v1316 = vadd.f32 %v1201, %v1252
      %v1317 = vadd.f32 %v1202, %v1254
      %v1318 = vadd.f32 %v1203, %v1256
      %v1319 = vadd.f32 %v1204, %v1258
      %v1320 = vadd.f32 %v1205, %v1260
      %v1321 = vadd.f32 %v1206, %v1262
      %v1322 = vadd.f32 %v1207, %v1264
      %v1323 = vadd.f32 %v1208, %v1266
      %v1324 = vadd.f32 %v1209, %v1268
      %v1325 = vrot.slane %v741, 2
      %v1326 = vrot.slane %v745, 2
      %v1327 = vsel %vm563, %v1325, %v1326
      %1328 = vrot.lane.b32.xlu0 %v947, 48
      %v1329 = vpop.permute.xlu0 %1328
      %1330 = vrot.lane.b32.xlu0 %v946, 48
      %v1331 = vpop.permute.xlu0 %1330
      %1332 = vrot.lane.b32.xlu0 %v950, 48
      %v1333 = vpop.permute.xlu0 %1332
      %1334 = vrot.lane.b32.xlu0 %v949, 48
      %v1335 = vpop.permute.xlu0 %1334
      %1336 = vrot.lane.b32.xlu0 %v953, 48
      %v1337 = vpop.permute.xlu0 %1336
      %1338 = vrot.lane.b32.xlu0 %v952, 48
      %v1339 = vpop.permute.xlu0 %1338
      %1340 = vrot.lane.b32.xlu0 %v956, 48
      %v1341 = vpop.permute.xlu0 %1340
      %1342 = vrot.lane.b32.xlu0 %v955, 48
      %v1343 = vpop.permute.xlu0 %1342
      %1344 = vrot.lane.b32.xlu0 %v959, 48
      %v1345 = vpop.permute.xlu0 %1344
      %1346 = vrot.lane.b32.xlu0 %v958, 48
      %v1347 = vpop.permute.xlu0 %1346
      %1348 = vrot.lane.b32.xlu0 %v962, 48
      %v1349 = vpop.permute.xlu0 %1348
      %1350 = vrot.lane.b32.xlu0 %v961, 48
      %v1351 = vpop.permute.xlu0 %1350
      %1352 = vrot.lane.b32.xlu0 %v965, 48
      %v1353 = vpop.permute.xlu0 %1352
      %1354 = vrot.lane.b32.xlu0 %v964, 48
      %v1355 = vpop.permute.xlu0 %1354
      %1356 = vrot.lane.b32.xlu0 %v968, 48
      %v1357 = vpop.permute.xlu0 %1356
      %1358 = vrot.lane.b32.xlu0 %v967, 48
      %v1359 = vpop.permute.xlu0 %1358
      %1360 = vrot.lane.b32.xlu0 %v971, 48
      %v1361 = vpop.permute.xlu0 %1360
      %1362 = vrot.lane.b32.xlu0 %v970, 48
      %v1363 = vpop.permute.xlu0 %1362
      %1364 = vrot.lane.b32.xlu0 %v974, 48
      %v1365 = vpop.permute.xlu0 %1364
      %1366 = vrot.lane.b32.xlu0 %v973, 48
      %v1367 = vpop.permute.xlu0 %1366
      %1368 = vrot.lane.b32.xlu0 %v977, 48
      %v1369 = vpop.permute.xlu0 %1368
      %1370 = vrot.lane.b32.xlu0 %v976, 48
      %v1371 = vpop.permute.xlu0 %1370
      %1372 = vrot.lane.b32.xlu0 %v980, 48
      %v1373 = vpop.permute.xlu0 %1372
      %1374 = vrot.lane.b32.xlu0 %v979, 48
      %v1375 = vpop.permute.xlu0 %1374
      %1376 = vrot.lane.b32.xlu0 %v983, 48
      %v1377 = vpop.permute.xlu0 %1376
      %1378 = vrot.lane.b32.xlu0 %v982, 48
      %v1379 = vpop.permute.xlu0 %1378
      %1380 = vrot.lane.b32.xlu0 %v1327, 48
      %v1381 = vpop.permute.xlu0 %1380
      %1382 = vrot.lane.b32.xlu0 %v1326, 48
      %v1383 = vpop.permute.xlu0 %1382
      %v1412 = vadd.f32 %v1297, %v1329
      %v1413 = vadd.f32 %v1298, %v1331
      %v1414 = vadd.f32 %v1299, %v1333
      %v1415 = vadd.f32 %v1300, %v1335
      %v1416 = vadd.f32 %v1301, %v1337
      %v1417 = vadd.f32 %v1302, %v1339
      %v1418 = vadd.f32 %v1303, %v1341
      %v1419 = vadd.f32 %v1304, %v1343
      %v1420 = vadd.f32 %v1305, %v1345
      %v1421 = vadd.f32 %v1306, %v1347
      %v1422 = vadd.f32 %v1307, %v1349
      %v1423 = vadd.f32 %v1308, %v1351
      %v1424 = vadd.f32 %v1309, %v1353
      %v1425 = vadd.f32 %v1310, %v1355
      %v1426 = vadd.f32 %v1311, %v1357
      %v1427 = vadd.f32 %v1312, %v1359
      %v1428 = vadd.f32 %v1313, %v1361
      %v1429 = vadd.f32 %v1314, %v1363
      %v1430 = vadd.f32 %v1315, %v1365
      %v1431 = vadd.f32 %v1316, %v1367
      %v1432 = vadd.f32 %v1317, %v1369
      %v1433 = vadd.f32 %v1318, %v1371
      %v1434 = vadd.f32 %v1319, %v1373
      %v1435 = vadd.f32 %v1320, %v1375
      %v1436 = vadd.f32 %v1321, %v1377
      %v1437 = vadd.f32 %v1322, %v1379
      %v1438 = vadd.f32 %v1323, %v1381
      %v1439 = vadd.f32 %v1324, %v1383
      %1442 = vrot.lane.b32.xlu0 %v621, 32
      %v1443 = vpop.permute.xlu0 %1442
      %1444 = vrot.lane.b32.xlu0 %v625, 32
      %v1445 = vpop.permute.xlu0 %1444
      %1446 = vrot.lane.b32.xlu0 %v631, 32
      %v1447 = vpop.permute.xlu0 %1446
      %1448 = vrot.lane.b32.xlu0 %v635, 32
      %v1449 = vpop.permute.xlu0 %1448
      %1450 = vrot.lane.b32.xlu0 %v641, 32
      %v1451 = vpop.permute.xlu0 %1450
      %1452 = vrot.lane.b32.xlu0 %v645, 32
      %v1453 = vpop.permute.xlu0 %1452
      %1454 = vrot.lane.b32.xlu0 %v651, 32
      %v1455 = vpop.permute.xlu0 %1454
      %1456 = vrot.lane.b32.xlu0 %v655, 32
      %v1457 = vpop.permute.xlu0 %1456
      %1458 = vrot.lane.b32.xlu0 %v661, 32
      %v1459 = vpop.permute.xlu0 %1458
      %1460 = vrot.lane.b32.xlu0 %v665, 32
      %v1461 = vpop.permute.xlu0 %1460
      %1462 = vrot.lane.b32.xlu0 %v671, 32
      %v1463 = vpop.permute.xlu0 %1462
      %1464 = vrot.lane.b32.xlu0 %v675, 32
      %v1465 = vpop.permute.xlu0 %1464
      %1466 = vrot.lane.b32.xlu0 %v681, 32
      %v1467 = vpop.permute.xlu0 %1466
      %1468 = vrot.lane.b32.xlu0 %v685, 32
      %v1469 = vpop.permute.xlu0 %1468
      %1470 = vrot.lane.b32.xlu0 %v691, 32
      %v1471 = vpop.permute.xlu0 %1470
      %1472 = vrot.lane.b32.xlu0 %v695, 32
      %v1473 = vpop.permute.xlu0 %1472
      %1474 = vrot.lane.b32.xlu0 %v701, 32
      %v1475 = vpop.permute.xlu0 %1474
      %1476 = vrot.lane.b32.xlu0 %v705, 32
      %v1477 = vpop.permute.xlu0 %1476
      %1478 = vrot.lane.b32.xlu0 %v711, 32
      %v1479 = vpop.permute.xlu0 %1478
      %1480 = vrot.lane.b32.xlu0 %v715, 32
      %v1481 = vpop.permute.xlu0 %1480
      %1482 = vrot.lane.b32.xlu0 %v721, 32
      %v1483 = vpop.permute.xlu0 %1482
      %1484 = vrot.lane.b32.xlu0 %v725, 32
      %v1485 = vpop.permute.xlu0 %1484
      %1486 = vrot.lane.b32.xlu0 %v731, 32
      %v1487 = vpop.permute.xlu0 %1486
      %1488 = vrot.lane.b32.xlu0 %v735, 32
      %v1489 = vpop.permute.xlu0 %1488
      %1490 = vrot.lane.b32.xlu0 %v741, 32
      %v1491 = vpop.permute.xlu0 %1490
      %1492 = vrot.lane.b32.xlu0 %v745, 32
      %v1493 = vpop.permute.xlu0 %1492
      %1494 = vrot.lane.b32.xlu0 %v751, 32
      %v1495 = vpop.permute.xlu0 %1494
      %1496 = vrot.lane.b32.xlu0 %v755, 32
      %v1497 = vpop.permute.xlu0 %1496
      %v1526 = vadd.f32 %v1412, %v1443
      %v1527 = vadd.f32 %v1413, %v1445
      %v1528 = vadd.f32 %v1414, %v1447
      %v1529 = vadd.f32 %v1415, %v1449
      %v1530 = vadd.f32 %v1416, %v1451
      %v1531 = vadd.f32 %v1417, %v1453
      %v1532 = vadd.f32 %v1418, %v1455
      %v1533 = vadd.f32 %v1419, %v1457
      %v1534 = vadd.f32 %v1420, %v1459
      %v1535 = vadd.f32 %v1421, %v1461
      %v1536 = vadd.f32 %v1422, %v1463
      %v1537 = vadd.f32 %v1423, %v1465
      %v1538 = vadd.f32 %v1424, %v1467
      %v1539 = vadd.f32 %v1425, %v1469
      %v1540 = vadd.f32 %v1426, %v1471
      %v1541 = vadd.f32 %v1427, %v1473
      %v1542 = vadd.f32 %v1428, %v1475
      %v1543 = vadd.f32 %v1429, %v1477
      %v1544 = vadd.f32 %v1430, %v1479
      %v1545 = vadd.f32 %v1431, %v1481
      %v1546 = vadd.f32 %v1432, %v1483
      %v1547 = vadd.f32 %v1433, %v1485
      %v1548 = vadd.f32 %v1434, %v1487
      %v1549 = vadd.f32 %v1435, %v1489
      %v1550 = vadd.f32 %v1436, %v1491
      %v1551 = vadd.f32 %v1437, %v1493
      %v1552 = vadd.f32 %v1438, %v1495
      %v1553 = vadd.f32 %v1439, %v1497
      %v1554 = vrot.slane %v751, 1
      %v1555 = vrot.slane %v755, 1
      %v1556 = vsel %vm787, %v1554, %v1555
      %1557 = vrot.lane.b32.xlu0 %v796, 16
      %v1558 = vpop.permute.xlu0 %1557
      %1559 = vrot.lane.b32.xlu0 %v795, 16
      %v1560 = vpop.permute.xlu0 %1559
      %1561 = vrot.lane.b32.xlu0 %v799, 16
      %v1562 = vpop.permute.xlu0 %1561
      %1563 = vrot.lane.b32.xlu0 %v798, 16
      %v1564 = vpop.permute.xlu0 %1563
      %1565 = vrot.lane.b32.xlu0 %v802, 16
      %v1566 = vpop.permute.xlu0 %1565
      %1567 = vrot.lane.b32.xlu0 %v801, 16
      %v1568 = vpop.permute.xlu0 %1567
      %1569 = vrot.lane.b32.xlu0 %v805, 16
      %v1570 = vpop.permute.xlu0 %1569
      %1571 = vrot.lane.b32.xlu0 %v804, 16
      %v1572 = vpop.permute.xlu0 %1571
      %1573 = vrot.lane.b32.xlu0 %v808, 16
      %v1574 = vpop.permute.xlu0 %1573
      %1575 = vrot.lane.b32.xlu0 %v807, 16
      %v1576 = vpop.permute.xlu0 %1575
      %1577 = vrot.lane.b32.xlu0 %v811, 16
      %v1578 = vpop.permute.xlu0 %1577
      %1579 = vrot.lane.b32.xlu0 %v810, 16
      %v1580 = vpop.permute.xlu0 %1579
      %1581 = vrot.lane.b32.xlu0 %v814, 16
      %v1582 = vpop.permute.xlu0 %1581
      %1583 = vrot.lane.b32.xlu0 %v813, 16
      %v1584 = vpop.permute.xlu0 %1583
      %1585 = vrot.lane.b32.xlu0 %v817, 16
      %v1586 = vpop.permute.xlu0 %1585
      %1587 = vrot.lane.b32.xlu0 %v816, 16
      %v1588 = vpop.permute.xlu0 %1587
      %1589 = vrot.lane.b32.xlu0 %v820, 16
      %v1590 = vpop.permute.xlu0 %1589
      %1591 = vrot.lane.b32.xlu0 %v819, 16
      %v1592 = vpop.permute.xlu0 %1591
      %1593 = vrot.lane.b32.xlu0 %v823, 16
      %v1594 = vpop.permute.xlu0 %1593
      %1595 = vrot.lane.b32.xlu0 %v822, 16
      %v1596 = vpop.permute.xlu0 %1595
      %1597 = vrot.lane.b32.xlu0 %v826, 16
      %v1598 = vpop.permute.xlu0 %1597
      %1599 = vrot.lane.b32.xlu0 %v825, 16
      %v1600 = vpop.permute.xlu0 %1599
      %1601 = vrot.lane.b32.xlu0 %v829, 16
      %v1602 = vpop.permute.xlu0 %1601
      %1603 = vrot.lane.b32.xlu0 %v828, 16
      %v1604 = vpop.permute.xlu0 %1603
      %1605 = vrot.lane.b32.xlu0 %v1212, 16
      %v1606 = vpop.permute.xlu0 %1605
      %1607 = vrot.lane.b32.xlu0 %v1211, 16
      %v1608 = vpop.permute.xlu0 %1607
      %1609 = vrot.lane.b32.xlu0 %v1556, 16
      %v1610 = vpop.permute.xlu0 %1609
      %1611 = vrot.lane.b32.xlu0 %v1555, 16
      %v1612 = vpop.permute.xlu0 %1611
      %v1641 = vadd.f32 %v1526, %v1558
      %v1642 = vadd.f32 %v1527, %v1560
      %v1643 = vadd.f32 %v1528, %v1562
      %v1644 = vadd.f32 %v1529, %v1564
      %v1645 = vadd.f32 %v1530, %v1566
      %v1646 = vadd.f32 %v1531, %v1568
      %v1647 = vadd.f32 %v1532, %v1570
      %v1648 = vadd.f32 %v1533, %v1572
      %v1649 = vadd.f32 %v1534, %v1574
      %v1650 = vadd.f32 %v1535, %v1576
      %v1651 = vadd.f32 %v1536, %v1578
      %v1652 = vadd.f32 %v1537, %v1580
      %v1653 = vadd.f32 %v1538, %v1582
      %v1654 = vadd.f32 %v1539, %v1584
      %v1655 = vadd.f32 %v1540, %v1586
      %v1656 = vadd.f32 %v1541, %v1588
      %v1657 = vadd.f32 %v1542, %v1590
      %v1658 = vadd.f32 %v1543, %v1592
      %v1659 = vadd.f32 %v1544, %v1594
      %v1660 = vadd.f32 %v1545, %v1596
      %v1661 = vadd.f32 %v1546, %v1598
      %v1662 = vadd.f32 %v1547, %v1600
      %v1663 = vadd.f32 %v1548, %v1602
      %v1664 = vadd.f32 %v1549, %v1604
      %v1665 = vadd.f32 %v1550, %v1606
      %v1666 = vadd.f32 %v1551, %v1608
      %v1667 = vadd.f32 %v1552, %v1610
      %v1668 = vadd.f32 %v1553, %v1612
      %v1697 = vrot.slane %v623, 2
      %v1698 = vrot.slane %v627, 2
      %v1699 = vsel %vm563, %v1697, %v1698
      %v1700 = vrot.slane %v633, 2
      %v1701 = vrot.slane %v637, 2
      %v1702 = vsel %vm563, %v1700, %v1701
      %v1703 = vrot.slane %v643, 2
      %v1704 = vrot.slane %v647, 2
      %v1705 = vsel %vm563, %v1703, %v1704
      %v1706 = vrot.slane %v653, 2
      %v1707 = vrot.slane %v657, 2
      %v1708 = vsel %vm563, %v1706, %v1707
      %v1709 = vrot.slane %v663, 2
      %v1710 = vrot.slane %v667, 2
      %v1711 = vsel %vm563, %v1709, %v1710
      %v1712 = vrot.slane %v673, 2
      %v1713 = vrot.slane %v677, 2
      %v1714 = vsel %vm563, %v1712, %v1713
      %v1715 = vrot.slane %v683, 2
      %v1716 = vrot.slane %v687, 2
      %v1717 = vsel %vm563, %v1715, %v1716
      %v1718 = vrot.slane %v693, 2
      %v1719 = vrot.slane %v697, 2
      %v1720 = vsel %vm563, %v1718, %v1719
      %v1721 = vrot.slane %v703, 2
      %v1722 = vrot.slane %v707, 2
      %v1723 = vsel %vm563, %v1721, %v1722
      %v1724 = vrot.slane %v713, 2
      %v1725 = vrot.slane %v717, 2
      %v1726 = vsel %vm563, %v1724, %v1725
      %v1727 = vrot.slane %v723, 2
      %v1728 = vrot.slane %v727, 2
      %v1729 = vsel %vm563, %v1727, %v1728
      %v1730 = vrot.slane %v733, 2
      %v1731 = vrot.slane %v737, 2
      %v1732 = vsel %vm563, %v1730, %v1731
      %v1733 = vrot.slane %v743, 2
      %v1734 = vrot.slane %v747, 2
      %v1735 = vsel %vm563, %v1733, %v1734
      %v1736 = vrot.slane %v753, 2
      %v1737 = vrot.slane %v757, 2
      %v1738 = vsel %vm563, %v1736, %v1737
      %v1767 = vadd.f32 %v1641, %v1699
      %v1768 = vadd.f32 %v1642, %v1698
      %v1769 = vadd.f32 %v1643, %v1702
      %v1770 = vadd.f32 %v1644, %v1701
      %v1771 = vadd.f32 %v1645, %v1705
      %v1772 = vadd.f32 %v1646, %v1704
      %v1773 = vadd.f32 %v1647, %v1708
      %v1774 = vadd.f32 %v1648, %v1707
      %v1775 = vadd.f32 %v1649, %v1711
      %v1776 = vadd.f32 %v1650, %v1710
      %v1777 = vadd.f32 %v1651, %v1714
      %v1778 = vadd.f32 %v1652, %v1713
      %v1779 = vadd.f32 %v1653, %v1717
      %v1780 = vadd.f32 %v1654, %v1716
      %v1781 = vadd.f32 %v1655, %v1720
      %v1782 = vadd.f32 %v1656, %v1719
      %v1783 = vadd.f32 %v1657, %v1723
      %v1784 = vadd.f32 %v1658, %v1722
      %v1785 = vadd.f32 %v1659, %v1726
      %v1786 = vadd.f32 %v1660, %v1725
      %v1787 = vadd.f32 %v1661, %v1729
      %v1788 = vadd.f32 %v1662, %v1728
      %v1789 = vadd.f32 %v1663, %v1732
      %v1790 = vadd.f32 %v1664, %v1731
      %v1791 = vadd.f32 %v1665, %v1735
      %v1792 = vadd.f32 %v1666, %v1734
      %v1793 = vadd.f32 %v1667, %v1738
      %v1794 = vadd.f32 %v1668, %v1737
      %v1795 = vld [vmem:[%s2] sm:$0x1]
      %v1797 = vlaneseq
      %v1798 = vshrl.u32 %v1797, 7
      %v1799 = vsub.s32 0, %v1798
      %v1800 = vrot.slane %v1795, %v1799
      %v1802 = vadd.f32 %v1767, %v1800
      %v1803 = vadd.f32 %v1768, %v1800
      %v1804 = vadd.f32 %v1769, %v1800
      %v1805 = vadd.f32 %v1770, %v1800
      %v1806 = vadd.f32 %v1771, %v1800
      %v1807 = vadd.f32 %v1772, %v1800
      %v1808 = vadd.f32 %v1773, %v1800
      %v1809 = vadd.f32 %v1774, %v1800
      %v1810 = vadd.f32 %v1775, %v1800
      %v1811 = vadd.f32 %v1776, %v1800
      %v1812 = vadd.f32 %v1777, %v1800
      %v1813 = vadd.f32 %v1778, %v1800
      %v1814 = vadd.f32 %v1779, %v1800
      %v1815 = vadd.f32 %v1780, %v1800
      %v1816 = vadd.f32 %v1781, %v1800
      %v1817 = vadd.f32 %v1782, %v1800
      %v1818 = vadd.f32 %v1783, %v1800
      %v1819 = vadd.f32 %v1784, %v1800
      %v1820 = vadd.f32 %v1785, %v1800
      %v1821 = vadd.f32 %v1786, %v1800
      %v1822 = vadd.f32 %v1787, %v1800
      %v1823 = vadd.f32 %v1788, %v1800
      %v1824 = vadd.f32 %v1789, %v1800
      %v1825 = vadd.f32 %v1790, %v1800
      %v1826 = vadd.f32 %v1791, %v1800
      %v1827 = vadd.f32 %v1792, %v1800
      %v1828 = vadd.f32 %v1793, %v1800
      %v1829 = vadd.f32 %v1794, %v1800
      %vm1830 = vcmp.ge.f32.partialorder %v1802, 0.0
      %vm1831 = vcmp.ge.f32.partialorder %v1803, 0.0
      %vm1832 = vcmp.ge.f32.partialorder %v1804, 0.0
      %vm1833 = vcmp.ge.f32.partialorder %v1805, 0.0
      %vm1834 = vcmp.ge.f32.partialorder %v1806, 0.0
      %vm1835 = vcmp.ge.f32.partialorder %v1807, 0.0
      %vm1836 = vcmp.ge.f32.partialorder %v1808, 0.0
      %vm1837 = vcmp.ge.f32.partialorder %v1809, 0.0
      %vm1838 = vcmp.ge.f32.partialorder %v1810, 0.0
      %vm1839 = vcmp.ge.f32.partialorder %v1811, 0.0
      %vm1840 = vcmp.ge.f32.partialorder %v1812, 0.0
      %vm1841 = vcmp.ge.f32.partialorder %v1813, 0.0
      %vm1842 = vcmp.ge.f32.partialorder %v1814, 0.0
      %vm1843 = vcmp.ge.f32.partialorder %v1815, 0.0
      %vm1844 = vcmp.ge.f32.partialorder %v1816, 0.0
      %vm1845 = vcmp.ge.f32.partialorder %v1817, 0.0
      %vm1846 = vcmp.ge.f32.partialorder %v1818, 0.0
      %vm1847 = vcmp.ge.f32.partialorder %v1819, 0.0
      %vm1848 = vcmp.ge.f32.partialorder %v1820, 0.0
      %vm1849 = vcmp.ge.f32.partialorder %v1821, 0.0
      %vm1850 = vcmp.ge.f32.partialorder %v1822, 0.0
      %vm1851 = vcmp.ge.f32.partialorder %v1823, 0.0
      %vm1852 = vcmp.ge.f32.partialorder %v1824, 0.0
      %vm1853 = vcmp.ge.f32.partialorder %v1825, 0.0
      %vm1854 = vcmp.ge.f32.partialorder %v1826, 0.0
      %vm1855 = vcmp.ge.f32.partialorder %v1827, 0.0
      %vm1856 = vcmp.ge.f32.partialorder %v1828, 0.0
      %vm1857 = vcmp.ge.f32.partialorder %v1829, 0.0
      %v1858 = vmul.f32 %v1802, 0.1
      %v1859 = vmul.f32 %v1803, 0.1
      %v1860 = vmul.f32 %v1804, 0.1
      %v1861 = vmul.f32 %v1805, 0.1
      %v1862 = vmul.f32 %v1806, 0.1
      %v1863 = vmul.f32 %v1807, 0.1
      %v1864 = vmul.f32 %v1808, 0.1
      %v1865 = vmul.f32 %v1809, 0.1
      %v1866 = vmul.f32 %v1810, 0.1
      %v1867 = vmul.f32 %v1811, 0.1
      %v1868 = vmul.f32 %v1812, 0.1
      %v1869 = vmul.f32 %v1813, 0.1
      %v1870 = vmul.f32 %v1814, 0.1
      %v1871 = vmul.f32 %v1815, 0.1
      %v1872 = vmul.f32 %v1816, 0.1
      %v1873 = vmul.f32 %v1817, 0.1
      %v1874 = vmul.f32 %v1818, 0.1
      %v1875 = vmul.f32 %v1819, 0.1
      %v1876 = vmul.f32 %v1820, 0.1
      %v1877 = vmul.f32 %v1821, 0.1
      %v1878 = vmul.f32 %v1822, 0.1
      %v1879 = vmul.f32 %v1823, 0.1
      %v1880 = vmul.f32 %v1824, 0.1
      %v1881 = vmul.f32 %v1825, 0.1
      %v1882 = vmul.f32 %v1826, 0.1
      %v1883 = vmul.f32 %v1827, 0.1
      %v1884 = vmul.f32 %v1828, 0.1
      %v1885 = vmul.f32 %v1829, 0.1
      %v1886 = vsel %vm1830, %v1802, %v1858
      %v1887 = vsel %vm1831, %v1803, %v1859
      %v1888 = vsel %vm1832, %v1804, %v1860
      %v1889 = vsel %vm1833, %v1805, %v1861
      %v1890 = vsel %vm1834, %v1806, %v1862
      %v1891 = vsel %vm1835, %v1807, %v1863
      %v1892 = vsel %vm1836, %v1808, %v1864
      %v1893 = vsel %vm1837, %v1809, %v1865
      %v1894 = vsel %vm1838, %v1810, %v1866
      %v1895 = vsel %vm1839, %v1811, %v1867
      %v1896 = vsel %vm1840, %v1812, %v1868
      %v1897 = vsel %vm1841, %v1813, %v1869
      %v1898 = vsel %vm1842, %v1814, %v1870
      %v1899 = vsel %vm1843, %v1815, %v1871
      %v1900 = vsel %vm1844, %v1816, %v1872
      %v1901 = vsel %vm1845, %v1817, %v1873
      %v1902 = vsel %vm1846, %v1818, %v1874
      %v1903 = vsel %vm1847, %v1819, %v1875
      %v1904 = vsel %vm1848, %v1820, %v1876
      %v1905 = vsel %vm1849, %v1821, %v1877
      %v1906 = vsel %vm1850, %v1822, %v1878
      %v1907 = vsel %vm1851, %v1823, %v1879
      %v1908 = vsel %vm1852, %v1824, %v1880
      %v1909 = vsel %vm1853, %v1825, %v1881
      %v1910 = vsel %vm1854, %v1826, %v1882
      %v1911 = vsel %vm1855, %v1827, %v1883
      %v1912 = vsel %vm1856, %v1828, %v1884
      %v1913 = vsel %vm1857, %v1829, %v1885
      %v1914 = vpack.c.bf16 %v1887, %v1886
      %v1915 = vpack.c.bf16 %v1889, %v1888
      %v1916 = vpack.c.bf16 %v1891, %v1890
      %v1917 = vpack.c.bf16 %v1893, %v1892
      %v1918 = vpack.c.bf16 %v1895, %v1894
      %v1919 = vpack.c.bf16 %v1897, %v1896
      %v1920 = vpack.c.bf16 %v1899, %v1898
      %v1921 = vpack.c.bf16 %v1901, %v1900
      %v1922 = vpack.c.bf16 %v1903, %v1902
      %v1923 = vpack.c.bf16 %v1905, %v1904
      %v1924 = vpack.c.bf16 %v1907, %v1906
      %v1925 = vpack.c.bf16 %v1909, %v1908
      %v1926 = vpack.c.bf16 %v1911, %v1910
      %v1927 = vpack.c.bf16 %v1913, %v1912
      %v1942 = vunpack.c.l.b16 %v1914
      %v1943 = vunpack.c.h.b16 %v1914
      %v1944 = vunpack.c.l.b16 %v1915
      %v1945 = vunpack.c.h.b16 %v1915
      %v1946 = vunpack.c.l.b16 %v1916
      %v1947 = vunpack.c.h.b16 %v1916
      %v1948 = vunpack.c.l.b16 %v1917
      %v1949 = vunpack.c.h.b16 %v1917
      %v1950 = vunpack.c.l.b16 %v1918
      %v1951 = vunpack.c.h.b16 %v1918
      %v1952 = vunpack.c.l.b16 %v1919
      %v1953 = vunpack.c.h.b16 %v1919
      %v1954 = vunpack.c.l.b16 %v1920
      %v1955 = vunpack.c.h.b16 %v1920
      %v1956 = vunpack.c.l.b16 %v1921
      %v1957 = vunpack.c.h.b16 %v1921
      %v1958 = vunpack.c.l.b16 %v1922
      %v1959 = vunpack.c.h.b16 %v1922
      %v1960 = vunpack.c.l.b16 %v1923
      %v1961 = vunpack.c.h.b16 %v1923
      %v1962 = vunpack.c.l.b16 %v1924
      %v1963 = vunpack.c.h.b16 %v1924
      %v1964 = vunpack.c.l.b16 %v1925
      %v1965 = vunpack.c.h.b16 %v1925
      %v1966 = vunpack.c.l.b16 %v1926
      %v1967 = vunpack.c.h.b16 %v1926
      %v1968 = vunpack.c.l.b16 %v1927
      %v1969 = vunpack.c.h.b16 %v1927
      %v1970 = vpack.c.b16 %v1942, %v1942
      %v1971 = vpack.c.b16 %v1943, %v1943
      %v1972 = vpack.c.b16 %v1944, %v1944
      %v1973 = vpack.c.b16 %v1945, %v1945
      %v1974 = vpack.c.b16 %v1946, %v1946
      %v1975 = vpack.c.b16 %v1947, %v1947
      %v1976 = vpack.c.b16 %v1948, %v1948
      %v1977 = vpack.c.b16 %v1949, %v1949
      %v1978 = vpack.c.b16 %v1950, %v1950
      %v1979 = vpack.c.b16 %v1951, %v1951
      %v1980 = vpack.c.b16 %v1952, %v1952
      %v1981 = vpack.c.b16 %v1953, %v1953
      %v1982 = vpack.c.b16 %v1954, %v1954
      %v1983 = vpack.c.b16 %v1955, %v1955
      %v1984 = vpack.c.b16 %v1956, %v1956
      %v1985 = vpack.c.b16 %v1957, %v1957
      %v1986 = vpack.c.b16 %v1958, %v1958
      %v1987 = vpack.c.b16 %v1959, %v1959
      %v1988 = vpack.c.b16 %v1960, %v1960
      %v1989 = vpack.c.b16 %v1961, %v1961
      %v1990 = vpack.c.b16 %v1962, %v1962
      %v1991 = vpack.c.b16 %v1963, %v1963
      %v1992 = vpack.c.b16 %v1964, %v1964
      %v1993 = vpack.c.b16 %v1965, %v1965
      %v1994 = vpack.c.b16 %v1966, %v1966
      %v1995 = vpack.c.b16 %v1967, %v1967
      %v1996 = vpack.c.b16 %v1968, %v1968
      %v1997 = vpack.c.b16 %v1969, %v1969
      %vm2026 = vcmask 125952
      %2027 = vst.msk [vmem:[%s170] sm:$0xf] %vm2026, %v1970
      %vm2028 = vcmask 124928
      %2029 = vst.msk [vmem:[%s170 + $0x4] sm:$0x7] %vm2028, %v1971
      %2030 = vst.msk [vmem:[%s170 + $0x8] sm:$0xf] %vm2026, %v1972
      %2031 = vst.msk [vmem:[%s170 + $0xc] sm:$0x7] %vm2028, %v1973
      %2032 = vst.msk [vmem:[%s170 + $0x10] sm:$0xf] %vm2026, %v1974
      %2033 = vst.msk [vmem:[%s170 + $0x14] sm:$0x7] %vm2028, %v1975
      %2034 = vst.msk [vmem:[%s170 + $0x18] sm:$0xf] %vm2026, %v1976
      %2035 = vst.msk [vmem:[%s170 + $0x1c] sm:$0x7] %vm2028, %v1977
      %2036 = vst.msk [vmem:[%s170 + $0x20] sm:$0xf] %vm2026, %v1978
      %2037 = vst.msk [vmem:[%s170 + $0x24] sm:$0x7] %vm2028, %v1979
      %2038 = vst.msk [vmem:[%s170 + $0x28] sm:$0xf] %vm2026, %v1980
      %2039 = vst.msk [vmem:[%s170 + $0x2c] sm:$0x7] %vm2028, %v1981
      %2040 = vst.msk [vmem:[%s170 + $0x30] sm:$0xf] %vm2026, %v1982
      %2041 = vst.msk [vmem:[%s170 + $0x34] sm:$0x7] %vm2028, %v1983
      %2042 = vst.msk [vmem:[%s170 + $0x38] sm:$0xf] %vm2026, %v1984
      %2043 = vst.msk [vmem:[%s170 + $0x3c] sm:$0x7] %vm2028, %v1985
      %2044 = vst.msk [vmem:[%s170 + $0x40] sm:$0xf] %vm2026, %v1986
      %2045 = vst.msk [vmem:[%s170 + $0x44] sm:$0x7] %vm2028, %v1987
      %2046 = vst.msk [vmem:[%s170 + $0x48] sm:$0xf] %vm2026, %v1988
      %2047 = vst.msk [vmem:[%s170 + $0x4c] sm:$0x7] %vm2028, %v1989
      %2048 = vst.msk [vmem:[%s170 + $0x50] sm:$0xf] %vm2026, %v1990
      %2049 = vst.msk [vmem:[%s170 + $0x54] sm:$0x7] %vm2028, %v1991
      %2050 = vst.msk [vmem:[%s170 + $0x58] sm:$0xf] %vm2026, %v1992
      %2051 = vst.msk [vmem:[%s170 + $0x5c] sm:$0x7] %vm2028, %v1993
      %2052 = vst.msk [vmem:[%s170 + $0x60] sm:$0xf] %vm2026, %v1994
      %2053 = vst.msk [vmem:[%s170 + $0x64] sm:$0x7] %vm2028, %v1995
      %2054 = vst.msk [vmem:[%s170 + $0x68] sm:$0xf] %vm2026, %v1996
      %2055 = vst.msk [vmem:[%s170 + $0x6c] sm:$0x7] %vm2028, %v1997
      %p2056 = scmp.lt.s32.totalorder %s14, 1
      %s2057 = scalar_select %p2056, %s14, 1
      %s2058 = smul.addr %s2057, 28
      %s2059 = smul.addr %s2058, 4
      %s2060 = scalar_lea.vmem %s3, %s2059
      // Predicated region
      $region33: #{classi_forward.2} parent=31 // pred_check
        %p2061 = pneg %p100
      $region34: #{classi_forward.2} parent=31 // pred_check_branch
        %2063 = sbr.rel (%p2061) target = $region36
      $region35: #{classi_forward.2} parent=31 // pred_region
        _
      $region36: #{classi_forward.2} parent=31 // pred_fallthru
        _
    $region32: #{classi_forward.2} parent=5 // pred_fallthru
      _
    %p2064 = scmp.le.s32.totalorder 2, %s9
    // Predicated region
    $region37: #{classi_forward.2} parent=5 // pred_check
      %p2065 = pneg %p2064
    $region38: #{classi_forward.2} parent=5 // pred_check_branch
      %2067 = sbr.rel (%p2065) target = $region40
    $region39: #{classi_forward.2} parent=5 // pred_region
      %s2068 = ssub.s32 %s9, 2
      // Predicated region
      $region41: #{classi_forward.2} parent=39 // pred_check
        %p2069 = pneg %p106
      $region42: #{classi_forward.2} parent=39 // pred_check_branch
        %2071 = sbr.rel (%p2069) target = $region44
      $region43: #{classi_forward.2} parent=39 // pred_region
        %p2072 = scmp.lt.s32.totalorder %s15, 1
        %s2073 = scalar_select %p2072, %s15, 1
        %s2074 = smul.addr %s2073, 28
        %s2075 = smul.addr %s2074, 4
        %s2076 = scalar_lea.vmem %s3, %s2075
      $region44: #{classi_forward.2} parent=39 // pred_fallthru
        _
    $region40: #{classi_forward.2} parent=5 // pred_fallthru
      _
  $region6: #{classi_forward.2} parent=0 // loop_footer
    %s13 = sadd.s32 1, %s9
  $region7: #{classi_forward.2} parent=0 // loop_footer_branch
    %8 = sbr.rel target = $region3
  $region8: #{classi_forward.2} parent=0 // loop_exit
    _

// kernel: classi_forward.3
$region0: #{classi_forward.3}
  #allocation0 [shape = 'u32[]', space=smem, size = 0x4, offset = 0x4, fixed_abs, tag = 'smem constant byte address 0x4 - core index']
  #allocation1 [shape = 'u32[144,128]{1,0:T(1,128)}', space=vmem, size = 0x12000, scoped, tag = 'internal scratch']
  %s0 = inlined_call_operand.vmem [shape: bf16[2,3136], index: 0, kind: input, shape index: {}]
  %s1 = inlined_call_operand.vmem [shape: bf16[3136,128], index: 1, kind: input, shape index: {}]
  %s2 = inlined_call_operand.vmem [shape: f32[1,128], index: 2, kind: input, shape index: {}]
  %s3 = inlined_call_operand.hbm [shape: f32[2,128], index: 3, kind: output, shape index: {}]
  %s4 = sld [smem:[#allocation0]]
  $region22: #{classi_forward.3} parent=0
    _
  %s6 = ssub.s32 1, %s4
  %s7 = scalar_select 0, %s6, %s4
  $region1: #{classi_forward.3} parent=0
    #allocation2 [shape = 'u8[1024]{0}', space=vmem, size = 0x400, scoped, tag = 'output window, operand 0, single buffered']
    #allocation3 [shape = 's32[1]{0}', space=sflag, size = 0x4, scoped, tag = 'scoped memory for classi_forward.3']
    %8 = vsyncpa [#allocation3], 0
    // Predicated region
    $region2: #{classi_forward.3} parent=1 // pred_check
      _
    $region3: #{classi_forward.3} parent=1 // pred_check_branch
      %10 = sbr.rel (0) target = $region5
    $region4: #{classi_forward.3} parent=1 // pred_region
      _
    $region5: #{classi_forward.3} parent=1 // pred_fallthru
      _
    // Predicated region
    $region6: #{classi_forward.3} parent=1 // pred_check
      _
    $region7: #{classi_forward.3} parent=1 // pred_check_branch
      %12 = sbr.rel (0) target = $region9
    $region8: #{classi_forward.3} parent=1 // pred_region
      _
    $region9: #{classi_forward.3} parent=1 // pred_fallthru
      _
    // Predicated region
    $region10: #{classi_forward.3} parent=1 // pred_check
      _
    $region11: #{classi_forward.3} parent=1 // pred_check_branch
      %14 = sbr.rel (0) target = $region13
    $region12: #{classi_forward.3} parent=1 // pred_region
      _
    $region13: #{classi_forward.3} parent=1 // pred_fallthru
      _
    %v16 = vld [vmem:[%s0] sm:$0xff]
    %v17 = vld [vmem:[%s0 + $0x8] sm:$0xff]
    %v18 = vld [vmem:[%s0 + $0x10] sm:$0xff]
    %v19 = vld [vmem:[%s0 + $0x18] sm:$0x1]
    %v20 = vld [vmem:[%s1] sm:$0xf]
    %v21 = vld [vmem:[%s1 + $0x4] sm:$0xf]
    %v22 = vld [vmem:[%s1 + $0x8] sm:$0xf]
    %v23 = vld [vmem:[%s1 + $0xc] sm:$0xf]
    %v24 = vld [vmem:[%s1 + $0x10] sm:$0xf]
    %v25 = vld [vmem:[%s1 + $0x14] sm:$0xf]
    %v26 = vld [vmem:[%s1 + $0x18] sm:$0xf]
    %v27 = vld [vmem:[%s1 + $0x1c] sm:$0xf]
    %v28 = vld [vmem:[%s1 + $0x20] sm:$0xf]
    %v29 = vld [vmem:[%s1 + $0x24] sm:$0xf]
    %v30 = vld [vmem:[%s1 + $0x28] sm:$0xf]
    %v31 = vld [vmem:[%s1 + $0x2c] sm:$0xf]
    %v32 = vld [vmem:[%s1 + $0x30] sm:$0xf]
    %v33 = vld [vmem:[%s1 + $0x34] sm:$0xf]
    %v34 = vld [vmem:[%s1 + $0x38] sm:$0xf]
    %v35 = vld [vmem:[%s1 + $0x3c] sm:$0xf]
    %v36 = vld [vmem:[%s1 + $0x40] sm:$0xf]
    %v37 = vld [vmem:[%s1 + $0x44] sm:$0xf]
    %v38 = vld [vmem:[%s1 + $0x48] sm:$0xf]
    %v39 = vld [vmem:[%s1 + $0x4c] sm:$0xf]
    %v40 = vld [vmem:[%s1 + $0x50] sm:$0xf]
    %v41 = vld [vmem:[%s1 + $0x54] sm:$0xf]
    %v42 = vld [vmem:[%s1 + $0x58] sm:$0xf]
    %v43 = vld [vmem:[%s1 + $0x5c] sm:$0xf]
    %v44 = vld [vmem:[%s1 + $0x60] sm:$0xf]
    %v45 = vld [vmem:[%s1 + $0x64] sm:$0xf]
    %v46 = vld [vmem:[%s1 + $0x68] sm:$0xf]
    %v47 = vld [vmem:[%s1 + $0x6c] sm:$0xf]
    %v48 = vld [vmem:[%s1 + $0x70] sm:$0xf]
    %v49 = vld [vmem:[%s1 + $0x74] sm:$0xf]
    %v50 = vld [vmem:[%s1 + $0x78] sm:$0xf]
    %v51 = vld [vmem:[%s1 + $0x7c] sm:$0xf]
    %v52 = vld [vmem:[%s1 + $0x80] sm:$0xf]
    %v53 = vld [vmem:[%s1 + $0x84] sm:$0xf]
    %v54 = vld [vmem:[%s1 + $0x88] sm:$0xf]
    %v55 = vld [vmem:[%s1 + $0x8c] sm:$0xf]
    %v56 = vld [vmem:[%s1 + $0x90] sm:$0xf]
    %v57 = vld [vmem:[%s1 + $0x94] sm:$0xf]
    %v58 = vld [vmem:[%s1 + $0x98] sm:$0xf]
    %v59 = vld [vmem:[%s1 + $0x9c] sm:$0xf]
    %v60 = vld [vmem:[%s1 + $0xa0] sm:$0xf]
    %v61 = vld [vmem:[%s1 + $0xa4] sm:$0xf]
    %v62 = vld [vmem:[%s1 + $0xa8] sm:$0xf]
    %v63 = vld [vmem:[%s1 + $0xac] sm:$0xf]
    %v64 = vld [vmem:[%s1 + $0xb0] sm:$0xf]
    %v65 = vld [vmem:[%s1 + $0xb4] sm:$0xf]
    %v66 = vld [vmem:[%s1 + $0xb8] sm:$0xf]
    %v67 = vld [vmem:[%s1 + $0xbc] sm:$0xf]
    %v68 = vld [vmem:[%s1 + $0xc0] sm:$0xf]
    %v69 = vld [vmem:[%s1 + $0xc4] sm:$0xf]
    %v70 = vld [vmem:[%s1 + $0xc8] sm:$0xf]
    %v71 = vld [vmem:[%s1 + $0xcc] sm:$0xf]
    %v72 = vld [vmem:[%s1 + $0xd0] sm:$0xf]
    %v73 = vld [vmem:[%s1 + $0xd4] sm:$0xf]
    %v74 = vld [vmem:[%s1 + $0xd8] sm:$0xf]
    %v75 = vld [vmem:[%s1 + $0xdc] sm:$0xf]
    %v76 = vld [vmem:[%s1 + $0xe0] sm:$0xf]
    %v77 = vld [vmem:[%s1 + $0xe4] sm:$0xf]
    %v78 = vld [vmem:[%s1 + $0xe8] sm:$0xf]
    %v79 = vld [vmem:[%s1 + $0xec] sm:$0xf]
    %v80 = vld [vmem:[%s1 + $0xf0] sm:$0xf]
    %v81 = vld [vmem:[%s1 + $0xf4] sm:$0xf]
    %v82 = vld [vmem:[%s1 + $0xf8] sm:$0xf]
    %v83 = vld [vmem:[%s1 + $0xfc] sm:$0xf]
    %v84 = vld [vmem:[%s1 + $0x100] sm:$0xf]
    %v85 = vld [vmem:[%s1 + $0x104] sm:$0xf]
    %v86 = vld [vmem:[%s1 + $0x108] sm:$0xf]
    %v87 = vld [vmem:[%s1 + $0x10c] sm:$0xf]
    %v88 = vld [vmem:[%s1 + $0x110] sm:$0xf]
    %v89 = vld [vmem:[%s1 + $0x114] sm:$0xf]
    %v90 = vld [vmem:[%s1 + $0x118] sm:$0xf]
    %v91 = vld [vmem:[%s1 + $0x11c] sm:$0xf]
    %v92 = vld [vmem:[%s1 + $0x120] sm:$0xf]
    %v93 = vld [vmem:[%s1 + $0x124] sm:$0xf]
    %v94 = vld [vmem:[%s1 + $0x128] sm:$0xf]
    %v95 = vld [vmem:[%s1 + $0x12c] sm:$0xf]
    %v96 = vld [vmem:[%s1 + $0x130] sm:$0xf]
    %v97 = vld [vmem:[%s1 + $0x134] sm:$0xf]
    %v98 = vld [vmem:[%s1 + $0x138] sm:$0xf]
    %v99 = vld [vmem:[%s1 + $0x13c] sm:$0xf]
    %v100 = vld [vmem:[%s1 + $0x140] sm:$0xf]
    %v101 = vld [vmem:[%s1 + $0x144] sm:$0xf]
    %v102 = vld [vmem:[%s1 + $0x148] sm:$0xf]
    %v103 = vld [vmem:[%s1 + $0x14c] sm:$0xf]
    %v104 = vld [vmem:[%s1 + $0x150] sm:$0xf]
    %v105 = vld [vmem:[%s1 + $0x154] sm:$0xf]
    %v106 = vld [vmem:[%s1 + $0x158] sm:$0xf]
    %v107 = vld [vmem:[%s1 + $0x15c] sm:$0xf]
    %v108 = vld [vmem:[%s1 + $0x160] sm:$0xf]
    %v109 = vld [vmem:[%s1 + $0x164] sm:$0xf]
    %v110 = vld [vmem:[%s1 + $0x168] sm:$0xf]
    %v111 = vld [vmem:[%s1 + $0x16c] sm:$0xf]
    %v112 = vld [vmem:[%s1 + $0x170] sm:$0xf]
    %v113 = vld [vmem:[%s1 + $0x174] sm:$0xf]
    %v114 = vld [vmem:[%s1 + $0x178] sm:$0xf]
    %v115 = vld [vmem:[%s1 + $0x17c] sm:$0xf]
    %v116 = vld [vmem:[%s1 + $0x180] sm:$0xf]
    %v117 = vld [vmem:[%s1 + $0x184] sm:$0xf]
    %v118 = vld [vmem:[%s1 + $0x188] sm:$0xf]
    %v119 = vld [vmem:[%s1 + $0x18c] sm:$0xf]
    %v120 = vld [vmem:[%s1 + $0x190] sm:$0xf]
    %v121 = vld [vmem:[%s1 + $0x194] sm:$0xf]
    %v122 = vld [vmem:[%s1 + $0x198] sm:$0xf]
    %v123 = vld [vmem:[%s1 + $0x19c] sm:$0xf]
    %v124 = vld [vmem:[%s1 + $0x1a0] sm:$0xf]
    %v125 = vld [vmem:[%s1 + $0x1a4] sm:$0xf]
    %v126 = vld [vmem:[%s1 + $0x1a8] sm:$0xf]
    %v127 = vld [vmem:[%s1 + $0x1ac] sm:$0xf]
    %v128 = vld [vmem:[%s1 + $0x1b0] sm:$0xf]
    %v129 = vld [vmem:[%s1 + $0x1b4] sm:$0xf]
    %v130 = vld [vmem:[%s1 + $0x1b8] sm:$0xf]
    %v131 = vld [vmem:[%s1 + $0x1bc] sm:$0xf]
    %v132 = vld [vmem:[%s1 + $0x1c0] sm:$0xf]
    %v133 = vld [vmem:[%s1 + $0x1c4] sm:$0xf]
    %v134 = vld [vmem:[%s1 + $0x1c8] sm:$0xf]
    %v135 = vld [vmem:[%s1 + $0x1cc] sm:$0xf]
    %v136 = vld [vmem:[%s1 + $0x1d0] sm:$0xf]
    %v137 = vld [vmem:[%s1 + $0x1d4] sm:$0xf]
    %v138 = vld [vmem:[%s1 + $0x1d8] sm:$0xf]
    %v139 = vld [vmem:[%s1 + $0x1dc] sm:$0xf]
    %v140 = vld [vmem:[%s1 + $0x1e0] sm:$0xf]
    %v141 = vld [vmem:[%s1 + $0x1e4] sm:$0xf]
    %v142 = vld [vmem:[%s1 + $0x1e8] sm:$0xf]
    %v143 = vld [vmem:[%s1 + $0x1ec] sm:$0xf]
    %v144 = vld [vmem:[%s1 + $0x1f0] sm:$0xf]
    %v145 = vld [vmem:[%s1 + $0x1f4] sm:$0xf]
    %v146 = vld [vmem:[%s1 + $0x1f8] sm:$0xf]
    %v147 = vld [vmem:[%s1 + $0x1fc] sm:$0xf]
    %v148 = vld [vmem:[%s1 + $0x200] sm:$0xf]
    %v149 = vld [vmem:[%s1 + $0x204] sm:$0xf]
    %v150 = vld [vmem:[%s1 + $0x208] sm:$0xf]
    %v151 = vld [vmem:[%s1 + $0x20c] sm:$0xf]
    %v152 = vld [vmem:[%s1 + $0x210] sm:$0xf]
    %v153 = vld [vmem:[%s1 + $0x214] sm:$0xf]
    %v154 = vld [vmem:[%s1 + $0x218] sm:$0xf]
    %v155 = vld [vmem:[%s1 + $0x21c] sm:$0xf]
    %v156 = vld [vmem:[%s1 + $0x220] sm:$0xf]
    %v157 = vld [vmem:[%s1 + $0x224] sm:$0xf]
    %v158 = vld [vmem:[%s1 + $0x228] sm:$0xf]
    %v159 = vld [vmem:[%s1 + $0x22c] sm:$0xf]
    %v160 = vld [vmem:[%s1 + $0x230] sm:$0xf]
    %v161 = vld [vmem:[%s1 + $0x234] sm:$0xf]
    %v162 = vld [vmem:[%s1 + $0x238] sm:$0xf]
    %v163 = vld [vmem:[%s1 + $0x23c] sm:$0xf]
    %v164 = vld [vmem:[%s1 + $0x240] sm:$0xf]
    %v165 = vld [vmem:[%s1 + $0x244] sm:$0xf]
    %v166 = vld [vmem:[%s1 + $0x248] sm:$0xf]
    %v167 = vld [vmem:[%s1 + $0x24c] sm:$0xf]
    %v168 = vld [vmem:[%s1 + $0x250] sm:$0xf]
    %v169 = vld [vmem:[%s1 + $0x254] sm:$0xf]
    %v170 = vld [vmem:[%s1 + $0x258] sm:$0xf]
    %v171 = vld [vmem:[%s1 + $0x25c] sm:$0xf]
    %v172 = vld [vmem:[%s1 + $0x260] sm:$0xf]
    %v173 = vld [vmem:[%s1 + $0x264] sm:$0xf]
    %v174 = vld [vmem:[%s1 + $0x268] sm:$0xf]
    %v175 = vld [vmem:[%s1 + $0x26c] sm:$0xf]
    %v176 = vld [vmem:[%s1 + $0x270] sm:$0xf]
    %v177 = vld [vmem:[%s1 + $0x274] sm:$0xf]
    %v178 = vld [vmem:[%s1 + $0x278] sm:$0xf]
    %v179 = vld [vmem:[%s1 + $0x27c] sm:$0xf]
    %v180 = vld [vmem:[%s1 + $0x280] sm:$0xf]
    %v181 = vld [vmem:[%s1 + $0x284] sm:$0xf]
    %v182 = vld [vmem:[%s1 + $0x288] sm:$0xf]
    %v183 = vld [vmem:[%s1 + $0x28c] sm:$0xf]
    %v184 = vld [vmem:[%s1 + $0x290] sm:$0xf]
    %v185 = vld [vmem:[%s1 + $0x294] sm:$0xf]
    %v186 = vld [vmem:[%s1 + $0x298] sm:$0xf]
    %v187 = vld [vmem:[%s1 + $0x29c] sm:$0xf]
    %v188 = vld [vmem:[%s1 + $0x2a0] sm:$0xf]
    %v189 = vld [vmem:[%s1 + $0x2a4] sm:$0xf]
    %v190 = vld [vmem:[%s1 + $0x2a8] sm:$0xf]
    %v191 = vld [vmem:[%s1 + $0x2ac] sm:$0xf]
    %v192 = vld [vmem:[%s1 + $0x2b0] sm:$0xf]
    %v193 = vld [vmem:[%s1 + $0x2b4] sm:$0xf]
    %v194 = vld [vmem:[%s1 + $0x2b8] sm:$0xf]
    %v195 = vld [vmem:[%s1 + $0x2bc] sm:$0xf]
    %v196 = vld [vmem:[%s1 + $0x2c0] sm:$0xf]
    %v197 = vld [vmem:[%s1 + $0x2c4] sm:$0xf]
    %v198 = vld [vmem:[%s1 + $0x2c8] sm:$0xf]
    %v199 = vld [vmem:[%s1 + $0x2cc] sm:$0xf]
    %v200 = vld [vmem:[%s1 + $0x2d0] sm:$0xf]
    %v201 = vld [vmem:[%s1 + $0x2d4] sm:$0xf]
    %v202 = vld [vmem:[%s1 + $0x2d8] sm:$0xf]
    %v203 = vld [vmem:[%s1 + $0x2dc] sm:$0xf]
    %v204 = vld [vmem:[%s1 + $0x2e0] sm:$0xf]
    %v205 = vld [vmem:[%s1 + $0x2e4] sm:$0xf]
    %v206 = vld [vmem:[%s1 + $0x2e8] sm:$0xf]
    %v207 = vld [vmem:[%s1 + $0x2ec] sm:$0xf]
    %v208 = vld [vmem:[%s1 + $0x2f0] sm:$0xf]
    %v209 = vld [vmem:[%s1 + $0x2f4] sm:$0xf]
    %v210 = vld [vmem:[%s1 + $0x2f8] sm:$0xf]
    %v211 = vld [vmem:[%s1 + $0x2fc] sm:$0xf]
    %v212 = vld [vmem:[%s1 + $0x300] sm:$0xf]
    %v213 = vld [vmem:[%s1 + $0x304] sm:$0xf]
    %v214 = vld [vmem:[%s1 + $0x308] sm:$0xf]
    %v215 = vld [vmem:[%s1 + $0x30c] sm:$0xf]
    %v216 = vld [vmem:[%s1 + $0x310] sm:$0xf]
    %v217 = vld [vmem:[%s1 + $0x314] sm:$0xf]
    %v218 = vld [vmem:[%s1 + $0x318] sm:$0xf]
    %v219 = vld [vmem:[%s1 + $0x31c] sm:$0xf]
    %v220 = vld [vmem:[%s1 + $0x320] sm:$0xf]
    %v221 = vld [vmem:[%s1 + $0x324] sm:$0xf]
    %v222 = vld [vmem:[%s1 + $0x328] sm:$0xf]
    %v223 = vld [vmem:[%s1 + $0x32c] sm:$0xf]
    %v224 = vld [vmem:[%s1 + $0x330] sm:$0xf]
    %v225 = vld [vmem:[%s1 + $0x334] sm:$0xf]
    %v226 = vld [vmem:[%s1 + $0x338] sm:$0xf]
    %v227 = vld [vmem:[%s1 + $0x33c] sm:$0xf]
    %v228 = vld [vmem:[%s1 + $0x340] sm:$0xf]
    %v229 = vld [vmem:[%s1 + $0x344] sm:$0xf]
    %v230 = vld [vmem:[%s1 + $0x348] sm:$0xf]
    %v231 = vld [vmem:[%s1 + $0x34c] sm:$0xf]
    %v232 = vld [vmem:[%s1 + $0x350] sm:$0xf]
    %v233 = vld [vmem:[%s1 + $0x354] sm:$0xf]
    %v234 = vld [vmem:[%s1 + $0x358] sm:$0xf]
    %v235 = vld [vmem:[%s1 + $0x35c] sm:$0xf]
    %v236 = vld [vmem:[%s1 + $0x360] sm:$0xf]
    %v237 = vld [vmem:[%s1 + $0x364] sm:$0xf]
    %v238 = vld [vmem:[%s1 + $0x368] sm:$0xf]
    %v239 = vld [vmem:[%s1 + $0x36c] sm:$0xf]
    %v240 = vld [vmem:[%s1 + $0x370] sm:$0xf]
    %v241 = vld [vmem:[%s1 + $0x374] sm:$0xf]
    %v242 = vld [vmem:[%s1 + $0x378] sm:$0xf]
    %v243 = vld [vmem:[%s1 + $0x37c] sm:$0xf]
    %v244 = vld [vmem:[%s1 + $0x380] sm:$0xf]
    %v245 = vld [vmem:[%s1 + $0x384] sm:$0xf]
    %v246 = vld [vmem:[%s1 + $0x388] sm:$0xf]
    %v247 = vld [vmem:[%s1 + $0x38c] sm:$0xf]
    %v248 = vld [vmem:[%s1 + $0x390] sm:$0xf]
    %v249 = vld [vmem:[%s1 + $0x394] sm:$0xf]
    %v250 = vld [vmem:[%s1 + $0x398] sm:$0xf]
    %v251 = vld [vmem:[%s1 + $0x39c] sm:$0xf]
    %v252 = vld [vmem:[%s1 + $0x3a0] sm:$0xf]
    %v253 = vld [vmem:[%s1 + $0x3a4] sm:$0xf]
    %v254 = vld [vmem:[%s1 + $0x3a8] sm:$0xf]
    %v255 = vld [vmem:[%s1 + $0x3ac] sm:$0xf]
    %v256 = vld [vmem:[%s1 + $0x3b0] sm:$0xf]
    %v257 = vld [vmem:[%s1 + $0x3b4] sm:$0xf]
    %v258 = vld [vmem:[%s1 + $0x3b8] sm:$0xf]
    %v259 = vld [vmem:[%s1 + $0x3bc] sm:$0xf]
    %v260 = vld [vmem:[%s1 + $0x3c0] sm:$0xf]
    %v261 = vld [vmem:[%s1 + $0x3c4] sm:$0xf]
    %v262 = vld [vmem:[%s1 + $0x3c8] sm:$0xf]
    %v263 = vld [vmem:[%s1 + $0x3cc] sm:$0xf]
    %v264 = vld [vmem:[%s1 + $0x3d0] sm:$0xf]
    %v265 = vld [vmem:[%s1 + $0x3d4] sm:$0xf]
    %v266 = vld [vmem:[%s1 + $0x3d8] sm:$0xf]
    %v267 = vld [vmem:[%s1 + $0x3dc] sm:$0xf]
    %v268 = vld [vmem:[%s1 + $0x3e0] sm:$0xf]
    %v269 = vld [vmem:[%s1 + $0x3e4] sm:$0xf]
    %v270 = vld [vmem:[%s1 + $0x3e8] sm:$0xf]
    %v271 = vld [vmem:[%s1 + $0x3ec] sm:$0xf]
    %v272 = vld [vmem:[%s1 + $0x3f0] sm:$0xf]
    %v273 = vld [vmem:[%s1 + $0x3f4] sm:$0xf]
    %v274 = vld [vmem:[%s1 + $0x3f8] sm:$0xf]
    %v275 = vld [vmem:[%s1 + $0x3fc] sm:$0xf]
    %v276 = vld [vmem:[%s1 + $0x400] sm:$0xf]
    %v277 = vld [vmem:[%s1 + $0x404] sm:$0xf]
    %v278 = vld [vmem:[%s1 + $0x408] sm:$0xf]
    %v279 = vld [vmem:[%s1 + $0x40c] sm:$0xf]
    %v280 = vld [vmem:[%s1 + $0x410] sm:$0xf]
    %v281 = vld [vmem:[%s1 + $0x414] sm:$0xf]
    %v282 = vld [vmem:[%s1 + $0x418] sm:$0xf]
    %v283 = vld [vmem:[%s1 + $0x41c] sm:$0xf]
    %v284 = vld [vmem:[%s1 + $0x420] sm:$0xf]
    %v285 = vld [vmem:[%s1 + $0x424] sm:$0xf]
    %v286 = vld [vmem:[%s1 + $0x428] sm:$0xf]
    %v287 = vld [vmem:[%s1 + $0x42c] sm:$0xf]
    %v288 = vld [vmem:[%s1 + $0x430] sm:$0xf]
    %v289 = vld [vmem:[%s1 + $0x434] sm:$0xf]
    %v290 = vld [vmem:[%s1 + $0x438] sm:$0xf]
    %v291 = vld [vmem:[%s1 + $0x43c] sm:$0xf]
    %v292 = vld [vmem:[%s1 + $0x440] sm:$0xf]
    %v293 = vld [vmem:[%s1 + $0x444] sm:$0xf]
    %v294 = vld [vmem:[%s1 + $0x448] sm:$0xf]
    %v295 = vld [vmem:[%s1 + $0x44c] sm:$0xf]
    %v296 = vld [vmem:[%s1 + $0x450] sm:$0xf]
    %v297 = vld [vmem:[%s1 + $0x454] sm:$0xf]
    %v298 = vld [vmem:[%s1 + $0x458] sm:$0xf]
    %v299 = vld [vmem:[%s1 + $0x45c] sm:$0xf]
    %v300 = vld [vmem:[%s1 + $0x460] sm:$0xf]
    %v301 = vld [vmem:[%s1 + $0x464] sm:$0xf]
    %v302 = vld [vmem:[%s1 + $0x468] sm:$0xf]
    %v303 = vld [vmem:[%s1 + $0x46c] sm:$0xf]
    %v304 = vld [vmem:[%s1 + $0x470] sm:$0xf]
    %v305 = vld [vmem:[%s1 + $0x474] sm:$0xf]
    %v306 = vld [vmem:[%s1 + $0x478] sm:$0xf]
    %v307 = vld [vmem:[%s1 + $0x47c] sm:$0xf]
    %v308 = vld [vmem:[%s1 + $0x480] sm:$0xf]
    %v309 = vld [vmem:[%s1 + $0x484] sm:$0xf]
    %v310 = vld [vmem:[%s1 + $0x488] sm:$0xf]
    %v311 = vld [vmem:[%s1 + $0x48c] sm:$0xf]
    %v312 = vld [vmem:[%s1 + $0x490] sm:$0xf]
    %v313 = vld [vmem:[%s1 + $0x494] sm:$0xf]
    %v314 = vld [vmem:[%s1 + $0x498] sm:$0xf]
    %v315 = vld [vmem:[%s1 + $0x49c] sm:$0xf]
    %v316 = vld [vmem:[%s1 + $0x4a0] sm:$0xf]
    %v317 = vld [vmem:[%s1 + $0x4a4] sm:$0xf]
    %v318 = vld [vmem:[%s1 + $0x4a8] sm:$0xf]
    %v319 = vld [vmem:[%s1 + $0x4ac] sm:$0xf]
    %v320 = vld [vmem:[%s1 + $0x4b0] sm:$0xf]
    %v321 = vld [vmem:[%s1 + $0x4b4] sm:$0xf]
    %v322 = vld [vmem:[%s1 + $0x4b8] sm:$0xf]
    %v323 = vld [vmem:[%s1 + $0x4bc] sm:$0xf]
    %v324 = vld [vmem:[%s1 + $0x4c0] sm:$0xf]
    %v325 = vld [vmem:[%s1 + $0x4c4] sm:$0xf]
    %v326 = vld [vmem:[%s1 + $0x4c8] sm:$0xf]
    %v327 = vld [vmem:[%s1 + $0x4cc] sm:$0xf]
    %v328 = vld [vmem:[%s1 + $0x4d0] sm:$0xf]
    %v329 = vld [vmem:[%s1 + $0x4d4] sm:$0xf]
    %v330 = vld [vmem:[%s1 + $0x4d8] sm:$0xf]
    %v331 = vld [vmem:[%s1 + $0x4dc] sm:$0xf]
    %v332 = vld [vmem:[%s1 + $0x4e0] sm:$0xf]
    %v333 = vld [vmem:[%s1 + $0x4e4] sm:$0xf]
    %v334 = vld [vmem:[%s1 + $0x4e8] sm:$0xf]
    %v335 = vld [vmem:[%s1 + $0x4ec] sm:$0xf]
    %v336 = vld [vmem:[%s1 + $0x4f0] sm:$0xf]
    %v337 = vld [vmem:[%s1 + $0x4f4] sm:$0xf]
    %v338 = vld [vmem:[%s1 + $0x4f8] sm:$0xf]
    %v339 = vld [vmem:[%s1 + $0x4fc] sm:$0xf]
    %v340 = vld [vmem:[%s1 + $0x500] sm:$0xf]
    %v341 = vld [vmem:[%s1 + $0x504] sm:$0xf]
    %v342 = vld [vmem:[%s1 + $0x508] sm:$0xf]
    %v343 = vld [vmem:[%s1 + $0x50c] sm:$0xf]
    %v344 = vld [vmem:[%s1 + $0x510] sm:$0xf]
    %v345 = vld [vmem:[%s1 + $0x514] sm:$0xf]
    %v346 = vld [vmem:[%s1 + $0x518] sm:$0xf]
    %v347 = vld [vmem:[%s1 + $0x51c] sm:$0xf]
    %v348 = vld [vmem:[%s1 + $0x520] sm:$0xf]
    %v349 = vld [vmem:[%s1 + $0x524] sm:$0xf]
    %v350 = vld [vmem:[%s1 + $0x528] sm:$0xf]
    %v351 = vld [vmem:[%s1 + $0x52c] sm:$0xf]
    %v352 = vld [vmem:[%s1 + $0x530] sm:$0xf]
    %v353 = vld [vmem:[%s1 + $0x534] sm:$0xf]
    %v354 = vld [vmem:[%s1 + $0x538] sm:$0xf]
    %v355 = vld [vmem:[%s1 + $0x53c] sm:$0xf]
    %v356 = vld [vmem:[%s1 + $0x540] sm:$0xf]
    %v357 = vld [vmem:[%s1 + $0x544] sm:$0xf]
    %v358 = vld [vmem:[%s1 + $0x548] sm:$0xf]
    %v359 = vld [vmem:[%s1 + $0x54c] sm:$0xf]
    %v360 = vld [vmem:[%s1 + $0x550] sm:$0xf]
    %v361 = vld [vmem:[%s1 + $0x554] sm:$0xf]
    %v362 = vld [vmem:[%s1 + $0x558] sm:$0xf]
    %v363 = vld [vmem:[%s1 + $0x55c] sm:$0xf]
    %v364 = vld [vmem:[%s1 + $0x560] sm:$0xf]
    %v365 = vld [vmem:[%s1 + $0x564] sm:$0xf]
    %v366 = vld [vmem:[%s1 + $0x568] sm:$0xf]
    %v367 = vld [vmem:[%s1 + $0x56c] sm:$0xf]
    %v368 = vld [vmem:[%s1 + $0x570] sm:$0xf]
    %v369 = vld [vmem:[%s1 + $0x574] sm:$0xf]
    %v370 = vld [vmem:[%s1 + $0x578] sm:$0xf]
    %v371 = vld [vmem:[%s1 + $0x57c] sm:$0xf]
    %v372 = vld [vmem:[%s1 + $0x580] sm:$0xf]
    %v373 = vld [vmem:[%s1 + $0x584] sm:$0xf]
    %v374 = vld [vmem:[%s1 + $0x588] sm:$0xf]
    %v375 = vld [vmem:[%s1 + $0x58c] sm:$0xf]
    %v376 = vld [vmem:[%s1 + $0x590] sm:$0xf]
    %v377 = vld [vmem:[%s1 + $0x594] sm:$0xf]
    %v378 = vld [vmem:[%s1 + $0x598] sm:$0xf]
    %v379 = vld [vmem:[%s1 + $0x59c] sm:$0xf]
    %v380 = vld [vmem:[%s1 + $0x5a0] sm:$0xf]
    %v381 = vld [vmem:[%s1 + $0x5a4] sm:$0xf]
    %v382 = vld [vmem:[%s1 + $0x5a8] sm:$0xf]
    %v383 = vld [vmem:[%s1 + $0x5ac] sm:$0xf]
    %v384 = vld [vmem:[%s1 + $0x5b0] sm:$0xf]
    %v385 = vld [vmem:[%s1 + $0x5b4] sm:$0xf]
    %v386 = vld [vmem:[%s1 + $0x5b8] sm:$0xf]
    %v387 = vld [vmem:[%s1 + $0x5bc] sm:$0xf]
    %v388 = vld [vmem:[%s1 + $0x5c0] sm:$0xf]
    %v389 = vld [vmem:[%s1 + $0x5c4] sm:$0xf]
    %v390 = vld [vmem:[%s1 + $0x5c8] sm:$0xf]
    %v391 = vld [vmem:[%s1 + $0x5cc] sm:$0xf]
    %v392 = vld [vmem:[%s1 + $0x5d0] sm:$0xf]
    %v393 = vld [vmem:[%s1 + $0x5d4] sm:$0xf]
    %v394 = vld [vmem:[%s1 + $0x5d8] sm:$0xf]
    %v395 = vld [vmem:[%s1 + $0x5dc] sm:$0xf]
    %v396 = vld [vmem:[%s1 + $0x5e0] sm:$0xf]
    %v397 = vld [vmem:[%s1 + $0x5e4] sm:$0xf]
    %v398 = vld [vmem:[%s1 + $0x5e8] sm:$0xf]
    %v399 = vld [vmem:[%s1 + $0x5ec] sm:$0xf]
    %v400 = vld [vmem:[%s1 + $0x5f0] sm:$0xf]
    %v401 = vld [vmem:[%s1 + $0x5f4] sm:$0xf]
    %v402 = vld [vmem:[%s1 + $0x5f8] sm:$0xf]
    %v403 = vld [vmem:[%s1 + $0x5fc] sm:$0xf]
    %v404 = vld [vmem:[%s1 + $0x600] sm:$0xf]
    %v405 = vld [vmem:[%s1 + $0x604] sm:$0xf]
    %v406 = vld [vmem:[%s1 + $0x608] sm:$0xf]
    %v407 = vld [vmem:[%s1 + $0x60c] sm:$0xf]
    %v408 = vld [vmem:[%s1 + $0x610] sm:$0xf]
    %v409 = vld [vmem:[%s1 + $0x614] sm:$0xf]
    %v410 = vld [vmem:[%s1 + $0x618] sm:$0xf]
    %v411 = vld [vmem:[%s1 + $0x61c] sm:$0xf]
    %v412 = vld [vmem:[%s2] sm:$0x1]
    %v414 = vlaneseq
    %v415 = vshrl.u32 %v414, 7
    %v416 = vsub.s32 0, %v415
    %v417 = vrot.slane %v412, %v416
    %v423 = vcombine.high %v16, %v16
    %v425 = vunpack.c.l.s4 1966171168
    %v426 = vunpack.c.0.s8 %v425
    %v427 = vlaneseq
    %v428 = vshrl.u32 %v427, 7
    %v429 = vsub.s32 %v426, %v428
    %v430 = vrot.slane %v16, %v429
    %v432 = vunpack.c.l.s4 1966171168
    %v433 = vunpack.c.0.s8 %v432
    %v434 = vlaneseq
    %v435 = vshrl.u32 %v434, 7
    %v436 = vsub.s32 %v433, %v435
    %v437 = vrot.slane %v423, %v436
    %v438 = vcombine.high %v430, %v430
    %v439 = vcombine.high %v437, %v437
    %v441 = vunpack.c.l.s4 1966171168
    %v442 = vunpack.c.0.s8 %v441
    %v443 = vlaneseq
    %v444 = vshrl.u32 %v443, 7
    %v445 = vsub.s32 %v442, %v444
    %v446 = vrot.slane %v430, %v445
    %v448 = vunpack.c.l.s4 1966171168
    %v449 = vunpack.c.0.s8 %v448
    %v450 = vlaneseq
    %v451 = vshrl.u32 %v450, 7
    %v452 = vsub.s32 %v449, %v451
    %v453 = vrot.slane %v437, %v452
    %v455 = vunpack.c.l.s4 1966171168
    %v456 = vunpack.c.0.s8 %v455
    %v457 = vlaneseq
    %v458 = vshrl.u32 %v457, 7
    %v459 = vsub.s32 %v456, %v458
    %v460 = vrot.slane %v438, %v459
    %v462 = vunpack.c.l.s4 1966171168
    %v463 = vunpack.c.0.s8 %v462
    %v464 = vlaneseq
    %v465 = vshrl.u32 %v464, 7
    %v466 = vsub.s32 %v463, %v465
    %v467 = vrot.slane %v439, %v466
    %v468 = vcombine.high %v446, %v446
    %v469 = vcombine.high %v453, %v453
    %v470 = vcombine.high %v460, %v460
    %v471 = vcombine.high %v467, %v467
    %v472 = vcombine.high %v17, %v17
    %v474 = vunpack.c.l.s4 1966171168
    %v475 = vunpack.c.0.s8 %v474
    %v476 = vlaneseq
    %v477 = vshrl.u32 %v476, 7
    %v478 = vsub.s32 %v475, %v477
    %v479 = vrot.slane %v17, %v478
    %v481 = vunpack.c.l.s4 1966171168
    %v482 = vunpack.c.0.s8 %v481
    %v483 = vlaneseq
    %v484 = vshrl.u32 %v483, 7
    %v485 = vsub.s32 %v482, %v484
    %v486 = vrot.slane %v472, %v485
    %v487 = vcombine.high %v479, %v479
    %v488 = vcombine.high %v486, %v486
    %v490 = vunpack.c.l.s4 1966171168
    %v491 = vunpack.c.0.s8 %v490
    %v492 = vlaneseq
    %v493 = vshrl.u32 %v492, 7
    %v494 = vsub.s32 %v491, %v493
    %v495 = vrot.slane %v479, %v494
    %v497 = vunpack.c.l.s4 1966171168
    %v498 = vunpack.c.0.s8 %v497
    %v499 = vlaneseq
    %v500 = vshrl.u32 %v499, 7
    %v501 = vsub.s32 %v498, %v500
    %v502 = vrot.slane %v486, %v501
    %v504 = vunpack.c.l.s4 1966171168
    %v505 = vunpack.c.0.s8 %v504
    %v506 = vlaneseq
    %v507 = vshrl.u32 %v506, 7
    %v508 = vsub.s32 %v505, %v507
    %v509 = vrot.slane %v487, %v508
    %v511 = vunpack.c.l.s4 1966171168
    %v512 = vunpack.c.0.s8 %v511
    %v513 = vlaneseq
    %v514 = vshrl.u32 %v513, 7
    %v515 = vsub.s32 %v512, %v514
    %v516 = vrot.slane %v488, %v515
    %v517 = vcombine.high %v495, %v495
    %v518 = vcombine.high %v502, %v502
    %v519 = vcombine.high %v509, %v509
    %v520 = vcombine.high %v516, %v516
    %v521 = vcombine.high %v18, %v18
    %v523 = vunpack.c.l.s4 1966171168
    %v524 = vunpack.c.0.s8 %v523
    %v525 = vlaneseq
    %v526 = vshrl.u32 %v525, 7
    %v527 = vsub.s32 %v524, %v526
    %v528 = vrot.slane %v18, %v527
    %v530 = vunpack.c.l.s4 1966171168
    %v531 = vunpack.c.0.s8 %v530
    %v532 = vlaneseq
    %v533 = vshrl.u32 %v532, 7
    %v534 = vsub.s32 %v531, %v533
    %v535 = vrot.slane %v521, %v534
    %v536 = vcombine.high %v528, %v528
    %v537 = vcombine.high %v535, %v535
    %v539 = vunpack.c.l.s4 1966171168
    %v540 = vunpack.c.0.s8 %v539
    %v541 = vlaneseq
    %v542 = vshrl.u32 %v541, 7
    %v543 = vsub.s32 %v540, %v542
    %v544 = vrot.slane %v528, %v543
    %v546 = vunpack.c.l.s4 1966171168
    %v547 = vunpack.c.0.s8 %v546
    %v548 = vlaneseq
    %v549 = vshrl.u32 %v548, 7
    %v550 = vsub.s32 %v547, %v549
    %v551 = vrot.slane %v535, %v550
    %v553 = vunpack.c.l.s4 1966171168
    %v554 = vunpack.c.0.s8 %v553
    %v555 = vlaneseq
    %v556 = vshrl.u32 %v555, 7
    %v557 = vsub.s32 %v554, %v556
    %v558 = vrot.slane %v536, %v557
    %v560 = vunpack.c.l.s4 1966171168
    %v561 = vunpack.c.0.s8 %v560
    %v562 = vlaneseq
    %v563 = vshrl.u32 %v562, 7
    %v564 = vsub.s32 %v561, %v563
    %v565 = vrot.slane %v537, %v564
    %v566 = vcombine.high %v544, %v544
    %v567 = vcombine.high %v551, %v551
    %v568 = vcombine.high %v558, %v558
    %v569 = vcombine.high %v565, %v565
    %v571 = vunpack.c.l.s4 1966171168
    %v572 = vunpack.c.0.s8 %v571
    %v573 = vlaneseq
    %v574 = vshrl.u32 %v573, 7
    %v575 = vsub.s32 %v572, %v574
    %v576 = vrot.slane %v19, %v575
    %v578 = vunpack.c.l.s4 1966171168
    %v579 = vunpack.c.0.s8 %v578
    %v580 = vlaneseq
    %v581 = vshrl.u32 %v580, 7
    %v582 = vsub.s32 %v579, %v581
    %v583 = vrot.slane %v576, %v582
    %v1000 = vunpack.c.l.b16 %v20
    %v1001 = vunpack.c.l.b16 %v21
    %v1002 = vunpack.c.l.b16 %v22
    %v1003 = vunpack.c.l.b16 %v23
    %v1004 = vunpack.c.l.b16 %v24
    %v1005 = vunpack.c.l.b16 %v25
    %v1006 = vunpack.c.l.b16 %v26
    %v1007 = vunpack.c.l.b16 %v27
    %v1008 = vunpack.c.l.b16 %v28
    %v1009 = vunpack.c.l.b16 %v29
    %v1010 = vunpack.c.l.b16 %v30
    %v1011 = vunpack.c.l.b16 %v31
    %v1012 = vunpack.c.l.b16 %v32
    %v1013 = vunpack.c.l.b16 %v33
    %v1014 = vunpack.c.l.b16 %v34
    %v1015 = vunpack.c.l.b16 %v35
    %v1016 = vunpack.c.l.b16 %v36
    %v1017 = vunpack.c.l.b16 %v37
    %v1018 = vunpack.c.l.b16 %v38
    %v1019 = vunpack.c.l.b16 %v39
    %v1020 = vunpack.c.l.b16 %v40
    %v1021 = vunpack.c.l.b16 %v41
    %v1022 = vunpack.c.l.b16 %v42
    %v1023 = vunpack.c.l.b16 %v43
    %v1024 = vunpack.c.l.b16 %v44
    %v1025 = vunpack.c.l.b16 %v45
    %v1026 = vunpack.c.l.b16 %v46
    %v1027 = vunpack.c.l.b16 %v47
    %v1028 = vunpack.c.l.b16 %v48
    %v1029 = vunpack.c.l.b16 %v49
    %v1030 = vunpack.c.l.b16 %v50
    %v1031 = vunpack.c.l.b16 %v51
    %v1032 = vunpack.c.l.b16 %v52
    %v1033 = vunpack.c.l.b16 %v53
    %v1034 = vunpack.c.l.b16 %v54
    %v1035 = vunpack.c.l.b16 %v55
    %v1036 = vunpack.c.l.b16 %v56
    %v1037 = vunpack.c.l.b16 %v57
    %v1038 = vunpack.c.l.b16 %v58
    %v1039 = vunpack.c.l.b16 %v59
    %v1040 = vunpack.c.l.b16 %v60
    %v1041 = vunpack.c.l.b16 %v61
    %v1042 = vunpack.c.l.b16 %v62
    %v1043 = vunpack.c.l.b16 %v63
    %v1044 = vunpack.c.l.b16 %v64
    %v1045 = vunpack.c.l.b16 %v65
    %v1046 = vunpack.c.l.b16 %v66
    %v1047 = vunpack.c.l.b16 %v67
    %v1048 = vunpack.c.l.b16 %v68
    %v1049 = vunpack.c.l.b16 %v69
    %v1050 = vunpack.c.l.b16 %v70
    %v1051 = vunpack.c.l.b16 %v71
    %v1052 = vunpack.c.l.b16 %v72
    %v1053 = vunpack.c.l.b16 %v73
    %v1054 = vunpack.c.l.b16 %v74
    %v1055 = vunpack.c.l.b16 %v75
    %v1056 = vunpack.c.l.b16 %v76
    %v1057 = vunpack.c.l.b16 %v77
    %v1058 = vunpack.c.l.b16 %v78
    %v1059 = vunpack.c.l.b16 %v79
    %v1060 = vunpack.c.l.b16 %v80
    %v1061 = vunpack.c.l.b16 %v81
    %v1062 = vunpack.c.l.b16 %v82
    %v1063 = vunpack.c.l.b16 %v83
    %v1064 = vunpack.c.l.b16 %v84
    %v1065 = vunpack.c.l.b16 %v85
    %v1066 = vunpack.c.l.b16 %v86
    %v1067 = vunpack.c.l.b16 %v87
    %v1068 = vunpack.c.l.b16 %v88
    %v1069 = vunpack.c.l.b16 %v89
    %v1070 = vunpack.c.l.b16 %v90
    %v1071 = vunpack.c.l.b16 %v91
    %v1072 = vunpack.c.l.b16 %v92
    %v1073 = vunpack.c.l.b16 %v93
    %v1074 = vunpack.c.l.b16 %v94
    %v1075 = vunpack.c.l.b16 %v95
    %v1076 = vunpack.c.l.b16 %v96
    %v1077 = vunpack.c.l.b16 %v97
    %v1078 = vunpack.c.l.b16 %v98
    %v1079 = vunpack.c.l.b16 %v99
    %v1080 = vunpack.c.l.b16 %v100
    %v1081 = vunpack.c.l.b16 %v101
    %v1082 = vunpack.c.l.b16 %v102
    %v1083 = vunpack.c.l.b16 %v103
    %v1084 = vunpack.c.l.b16 %v104
    %v1085 = vunpack.c.l.b16 %v105
    %v1086 = vunpack.c.l.b16 %v106
    %v1087 = vunpack.c.l.b16 %v107
    %v1088 = vunpack.c.l.b16 %v108
    %v1089 = vunpack.c.l.b16 %v109
    %v1090 = vunpack.c.l.b16 %v110
    %v1091 = vunpack.c.l.b16 %v111
    %v1092 = vunpack.c.l.b16 %v112
    %v1093 = vunpack.c.l.b16 %v113
    %v1094 = vunpack.c.l.b16 %v114
    %v1095 = vunpack.c.l.b16 %v115
    %v1096 = vunpack.c.l.b16 %v116
    %v1097 = vunpack.c.l.b16 %v117
    %v1098 = vunpack.c.l.b16 %v118
    %v1099 = vunpack.c.l.b16 %v119
    %v1100 = vunpack.c.l.b16 %v120
    %v1101 = vunpack.c.l.b16 %v121
    %v1102 = vunpack.c.l.b16 %v122
    %v1103 = vunpack.c.l.b16 %v123
    %v1104 = vunpack.c.l.b16 %v124
    %v1105 = vunpack.c.l.b16 %v125
    %v1106 = vunpack.c.l.b16 %v126
    %v1107 = vunpack.c.l.b16 %v127
    %v1108 = vunpack.c.l.b16 %v128
    %v1109 = vunpack.c.l.b16 %v129
    %v1110 = vunpack.c.l.b16 %v130
    %v1111 = vunpack.c.l.b16 %v131
    %v1112 = vunpack.c.l.b16 %v132
    %v1113 = vunpack.c.l.b16 %v133
    %v1114 = vunpack.c.l.b16 %v134
    %v1115 = vunpack.c.l.b16 %v135
    %v1116 = vunpack.c.l.b16 %v136
    %v1117 = vunpack.c.l.b16 %v137
    %v1118 = vunpack.c.l.b16 %v138
    %v1119 = vunpack.c.l.b16 %v139
    %v1120 = vunpack.c.l.b16 %v140
    %v1121 = vunpack.c.l.b16 %v141
    %v1122 = vunpack.c.l.b16 %v142
    %v1123 = vunpack.c.l.b16 %v143
    %v1124 = vunpack.c.l.b16 %v144
    %v1125 = vunpack.c.l.b16 %v145
    %v1126 = vunpack.c.l.b16 %v146
    %v1127 = vunpack.c.l.b16 %v147
    %v1128 = vunpack.c.l.b16 %v148
    %v1129 = vunpack.c.l.b16 %v149
    %v1130 = vunpack.c.l.b16 %v150
    %v1131 = vunpack.c.l.b16 %v151
    %v1132 = vunpack.c.l.b16 %v152
    %v1133 = vunpack.c.l.b16 %v153
    %v1134 = vunpack.c.l.b16 %v154
    %v1135 = vunpack.c.l.b16 %v155
    %v1136 = vunpack.c.l.b16 %v156
    %v1137 = vunpack.c.l.b16 %v157
    %v1138 = vunpack.c.l.b16 %v158
    %v1139 = vunpack.c.l.b16 %v159
    %v1140 = vunpack.c.l.b16 %v160
    %v1141 = vunpack.c.l.b16 %v161
    %v1142 = vunpack.c.l.b16 %v162
    %v1143 = vunpack.c.l.b16 %v163
    %v1144 = vunpack.c.l.b16 %v164
    %v1145 = vunpack.c.l.b16 %v165
    %v1146 = vunpack.c.l.b16 %v166
    %v1147 = vunpack.c.l.b16 %v167
    %v1148 = vunpack.c.l.b16 %v168
    %v1149 = vunpack.c.l.b16 %v169
    %v1150 = vunpack.c.l.b16 %v170
    %v1151 = vunpack.c.l.b16 %v171
    %v1152 = vunpack.c.l.b16 %v172
    %v1153 = vunpack.c.l.b16 %v173
    %v1154 = vunpack.c.l.b16 %v174
    %v1155 = vunpack.c.l.b16 %v175
    %v1156 = vunpack.c.l.b16 %v176
    %v1157 = vunpack.c.l.b16 %v177
    %v1158 = vunpack.c.l.b16 %v178
    %v1159 = vunpack.c.l.b16 %v179
    %v1160 = vunpack.c.l.b16 %v180
    %v1161 = vunpack.c.l.b16 %v181
    %v1162 = vunpack.c.l.b16 %v182
    %v1163 = vunpack.c.l.b16 %v183
    %v1164 = vunpack.c.l.b16 %v184
    %v1165 = vunpack.c.l.b16 %v185
    %v1166 = vunpack.c.l.b16 %v186
    %v1167 = vunpack.c.l.b16 %v187
    %v1168 = vunpack.c.l.b16 %v188
    %v1169 = vunpack.c.l.b16 %v189
    %v1170 = vunpack.c.l.b16 %v190
    %v1171 = vunpack.c.l.b16 %v191
    %v1172 = vunpack.c.l.b16 %v192
    %v1173 = vunpack.c.l.b16 %v193
    %v1174 = vunpack.c.l.b16 %v194
    %v1175 = vunpack.c.l.b16 %v195
    %v1176 = vunpack.c.l.b16 %v196
    %v1177 = vunpack.c.l.b16 %v197
    %v1178 = vunpack.c.l.b16 %v198
    %v1179 = vunpack.c.l.b16 %v199
    %v1180 = vunpack.c.l.b16 %v200
    %v1181 = vunpack.c.l.b16 %v201
    %v1182 = vunpack.c.l.b16 %v202
    %v1183 = vunpack.c.l.b16 %v203
    %v1184 = vunpack.c.l.b16 %v204
    %v1185 = vunpack.c.l.b16 %v205
    %v1186 = vunpack.c.l.b16 %v206
    %v1187 = vunpack.c.l.b16 %v207
    %v1188 = vunpack.c.l.b16 %v208
    %v1189 = vunpack.c.l.b16 %v209
    %v1190 = vunpack.c.l.b16 %v210
    %v1191 = vunpack.c.l.b16 %v211
    %v1192 = vunpack.c.l.b16 %v212
    %v1193 = vunpack.c.l.b16 %v213
    %v1194 = vunpack.c.l.b16 %v214
    %v1195 = vunpack.c.l.b16 %v215
    %v1196 = vunpack.c.l.b16 %v216
    %v1197 = vunpack.c.l.b16 %v217
    %v1198 = vunpack.c.l.b16 %v218
    %v1199 = vunpack.c.l.b16 %v219
    %v1200 = vunpack.c.l.b16 %v220
    %v1201 = vunpack.c.l.b16 %v221
    %v1202 = vunpack.c.l.b16 %v222
    %v1203 = vunpack.c.l.b16 %v223
    %v1204 = vunpack.c.l.b16 %v224
    %v1205 = vunpack.c.l.b16 %v225
    %v1206 = vunpack.c.l.b16 %v226
    %v1207 = vunpack.c.l.b16 %v227
    %v1208 = vunpack.c.l.b16 %v228
    %v1209 = vunpack.c.l.b16 %v229
    %v1210 = vunpack.c.l.b16 %v230
    %v1211 = vunpack.c.l.b16 %v231
    %v1212 = vunpack.c.l.b16 %v232
    %v1213 = vunpack.c.l.b16 %v233
    %v1214 = vunpack.c.l.b16 %v234
    %v1215 = vunpack.c.l.b16 %v235
    %v1216 = vunpack.c.l.b16 %v236
    %v1217 = vunpack.c.l.b16 %v237
    %v1218 = vunpack.c.l.b16 %v238
    %v1219 = vunpack.c.l.b16 %v239
    %v1220 = vunpack.c.l.b16 %v240
    %v1221 = vunpack.c.l.b16 %v241
    %v1222 = vunpack.c.l.b16 %v242
    %v1223 = vunpack.c.l.b16 %v243
    %v1224 = vunpack.c.l.b16 %v244
    %v1225 = vunpack.c.l.b16 %v245
    %v1226 = vunpack.c.l.b16 %v246
    %v1227 = vunpack.c.l.b16 %v247
    %v1228 = vunpack.c.l.b16 %v248
    %v1229 = vunpack.c.l.b16 %v249
    %v1230 = vunpack.c.l.b16 %v250
    %v1231 = vunpack.c.l.b16 %v251
    %v1232 = vunpack.c.l.b16 %v252
    %v1233 = vunpack.c.l.b16 %v253
    %v1234 = vunpack.c.l.b16 %v254
    %v1235 = vunpack.c.l.b16 %v255
    %v1236 = vunpack.c.l.b16 %v256
    %v1237 = vunpack.c.l.b16 %v257
    %v1238 = vunpack.c.l.b16 %v258
    %v1239 = vunpack.c.l.b16 %v259
    %v1240 = vunpack.c.l.b16 %v260
    %v1241 = vunpack.c.l.b16 %v261
    %v1242 = vunpack.c.l.b16 %v262
    %v1243 = vunpack.c.l.b16 %v263
    %v1244 = vunpack.c.l.b16 %v264
    %v1245 = vunpack.c.l.b16 %v265
    %v1246 = vunpack.c.l.b16 %v266
    %v1247 = vunpack.c.l.b16 %v267
    %v1248 = vunpack.c.l.b16 %v268
    %v1249 = vunpack.c.l.b16 %v269
    %v1250 = vunpack.c.l.b16 %v270
    %v1251 = vunpack.c.l.b16 %v271
    %v1252 = vunpack.c.l.b16 %v272
    %v1253 = vunpack.c.l.b16 %v273
    %v1254 = vunpack.c.l.b16 %v274
    %v1255 = vunpack.c.l.b16 %v275
    %v1256 = vunpack.c.l.b16 %v276
    %v1257 = vunpack.c.l.b16 %v277
    %v1258 = vunpack.c.l.b16 %v278
    %v1259 = vunpack.c.l.b16 %v279
    %v1260 = vunpack.c.l.b16 %v280
    %v1261 = vunpack.c.l.b16 %v281
    %v1262 = vunpack.c.l.b16 %v282
    %v1263 = vunpack.c.l.b16 %v283
    %v1264 = vunpack.c.l.b16 %v284
    %v1265 = vunpack.c.l.b16 %v285
    %v1266 = vunpack.c.l.b16 %v286
    %v1267 = vunpack.c.l.b16 %v287
    %v1268 = vunpack.c.l.b16 %v288
    %v1269 = vunpack.c.l.b16 %v289
    %v1270 = vunpack.c.l.b16 %v290
    %v1271 = vunpack.c.l.b16 %v291
    %v1272 = vunpack.c.l.b16 %v292
    %v1273 = vunpack.c.l.b16 %v293
    %v1274 = vunpack.c.l.b16 %v294
    %v1275 = vunpack.c.l.b16 %v295
    %v1276 = vunpack.c.l.b16 %v296
    %v1277 = vunpack.c.l.b16 %v297
    %v1278 = vunpack.c.l.b16 %v298
    %v1279 = vunpack.c.l.b16 %v299
    %v1280 = vunpack.c.l.b16 %v300
    %v1281 = vunpack.c.l.b16 %v301
    %v1282 = vunpack.c.l.b16 %v302
    %v1283 = vunpack.c.l.b16 %v303
    %v1284 = vunpack.c.l.b16 %v304
    %v1285 = vunpack.c.l.b16 %v305
    %v1286 = vunpack.c.l.b16 %v306
    %v1287 = vunpack.c.l.b16 %v307
    %v1288 = vunpack.c.l.b16 %v308
    %v1289 = vunpack.c.l.b16 %v309
    %v1290 = vunpack.c.l.b16 %v310
    %v1291 = vunpack.c.l.b16 %v311
    %v1292 = vunpack.c.l.b16 %v312
    %v1293 = vunpack.c.l.b16 %v313
    %v1294 = vunpack.c.l.b16 %v314
    %v1295 = vunpack.c.l.b16 %v315
    %v1296 = vunpack.c.l.b16 %v316
    %v1297 = vunpack.c.l.b16 %v317
    %v1298 = vunpack.c.l.b16 %v318
    %v1299 = vunpack.c.l.b16 %v319
    %v1300 = vunpack.c.l.b16 %v320
    %v1301 = vunpack.c.l.b16 %v321
    %v1302 = vunpack.c.l.b16 %v322
    %v1303 = vunpack.c.l.b16 %v323
    %v1304 = vunpack.c.l.b16 %v324
    %v1305 = vunpack.c.l.b16 %v325
    %v1306 = vunpack.c.l.b16 %v326
    %v1307 = vunpack.c.l.b16 %v327
    %v1308 = vunpack.c.l.b16 %v328
    %v1309 = vunpack.c.l.b16 %v329
    %v1310 = vunpack.c.l.b16 %v330
    %v1311 = vunpack.c.l.b16 %v331
    %v1312 = vunpack.c.l.b16 %v332
    %v1313 = vunpack.c.l.b16 %v333
    %v1314 = vunpack.c.l.b16 %v334
    %v1315 = vunpack.c.l.b16 %v335
    %v1316 = vunpack.c.l.b16 %v336
    %v1317 = vunpack.c.l.b16 %v337
    %v1318 = vunpack.c.l.b16 %v338
    %v1319 = vunpack.c.l.b16 %v339
    %v1320 = vunpack.c.l.b16 %v340
    %v1321 = vunpack.c.l.b16 %v341
    %v1322 = vunpack.c.l.b16 %v342
    %v1323 = vunpack.c.l.b16 %v343
    %v1324 = vunpack.c.l.b16 %v344
    %v1325 = vunpack.c.l.b16 %v345
    %v1326 = vunpack.c.l.b16 %v346
    %v1327 = vunpack.c.l.b16 %v347
    %v1328 = vunpack.c.l.b16 %v348
    %v1329 = vunpack.c.l.b16 %v349
    %v1330 = vunpack.c.l.b16 %v350
    %v1331 = vunpack.c.l.b16 %v351
    %v1332 = vunpack.c.l.b16 %v352
    %v1333 = vunpack.c.l.b16 %v353
    %v1334 = vunpack.c.l.b16 %v354
    %v1335 = vunpack.c.l.b16 %v355
    %v1336 = vunpack.c.l.b16 %v356
    %v1337 = vunpack.c.l.b16 %v357
    %v1338 = vunpack.c.l.b16 %v358
    %v1339 = vunpack.c.l.b16 %v359
    %v1340 = vunpack.c.l.b16 %v360
    %v1341 = vunpack.c.l.b16 %v361
    %v1342 = vunpack.c.l.b16 %v362
    %v1343 = vunpack.c.l.b16 %v363
    %v1344 = vunpack.c.l.b16 %v364
    %v1345 = vunpack.c.l.b16 %v365
    %v1346 = vunpack.c.l.b16 %v366
    %v1347 = vunpack.c.l.b16 %v367
    %v1348 = vunpack.c.l.b16 %v368
    %v1349 = vunpack.c.l.b16 %v369
    %v1350 = vunpack.c.l.b16 %v370
    %v1351 = vunpack.c.l.b16 %v371
    %v1352 = vunpack.c.l.b16 %v372
    %v1353 = vunpack.c.l.b16 %v373
    %v1354 = vunpack.c.l.b16 %v374
    %v1355 = vunpack.c.l.b16 %v375
    %v1356 = vunpack.c.l.b16 %v376
    %v1357 = vunpack.c.l.b16 %v377
    %v1358 = vunpack.c.l.b16 %v378
    %v1359 = vunpack.c.l.b16 %v379
    %v1360 = vunpack.c.l.b16 %v380
    %v1361 = vunpack.c.l.b16 %v381
    %v1362 = vunpack.c.l.b16 %v382
    %v1363 = vunpack.c.l.b16 %v383
    %v1364 = vunpack.c.l.b16 %v384
    %v1365 = vunpack.c.l.b16 %v385
    %v1366 = vunpack.c.l.b16 %v386
    %v1367 = vunpack.c.l.b16 %v387
    %v1368 = vunpack.c.l.b16 %v388
    %v1369 = vunpack.c.l.b16 %v389
    %v1370 = vunpack.c.l.b16 %v390
    %v1371 = vunpack.c.l.b16 %v391
    %v1372 = vunpack.c.l.b16 %v392
    %v1373 = vunpack.c.l.b16 %v393
    %v1374 = vunpack.c.l.b16 %v394
    %v1375 = vunpack.c.l.b16 %v395
    %v1376 = vunpack.c.l.b16 %v396
    %v1377 = vunpack.c.l.b16 %v397
    %v1378 = vunpack.c.l.b16 %v398
    %v1379 = vunpack.c.l.b16 %v399
    %v1380 = vunpack.c.l.b16 %v400
    %v1381 = vunpack.c.l.b16 %v401
    %v1382 = vunpack.c.l.b16 %v402
    %v1383 = vunpack.c.l.b16 %v403
    %v1384 = vunpack.c.l.b16 %v404
    %v1385 = vunpack.c.l.b16 %v405
    %v1386 = vunpack.c.l.b16 %v406
    %v1387 = vunpack.c.l.b16 %v407
    %v1388 = vunpack.c.l.b16 %v408
    %v1389 = vunpack.c.l.b16 %v409
    %v1390 = vunpack.c.l.b16 %v410
    %v1391 = vunpack.c.l.b16 %v411
    %v1392 = vpack.c.b16 %v1001, %v1000
    %v1393 = vpack.c.b16 %v1003, %v1002
    %v1394 = vpack.c.b16 %v1005, %v1004
    %v1395 = vpack.c.b16 %v1007, %v1006
    %v1396 = vpack.c.b16 %v1009, %v1008
    %v1397 = vpack.c.b16 %v1011, %v1010
    %v1398 = vpack.c.b16 %v1013, %v1012
    %v1399 = vpack.c.b16 %v1015, %v1014
    %v1400 = vpack.c.b16 %v1017, %v1016
    %v1401 = vpack.c.b16 %v1019, %v1018
    %v1402 = vpack.c.b16 %v1021, %v1020
    %v1403 = vpack.c.b16 %v1023, %v1022
    %v1404 = vpack.c.b16 %v1025, %v1024
    %v1405 = vpack.c.b16 %v1027, %v1026
    %v1406 = vpack.c.b16 %v1029, %v1028
    %v1407 = vpack.c.b16 %v1031, %v1030
    %v1408 = vpack.c.b16 %v1033, %v1032
    %v1409 = vpack.c.b16 %v1035, %v1034
    %v1410 = vpack.c.b16 %v1037, %v1036
    %v1411 = vpack.c.b16 %v1039, %v1038
    %v1412 = vpack.c.b16 %v1041, %v1040
    %v1413 = vpack.c.b16 %v1043, %v1042
    %v1414 = vpack.c.b16 %v1045, %v1044
    %v1415 = vpack.c.b16 %v1047, %v1046
    %v1416 = vpack.c.b16 %v1049, %v1048
    %v1417 = vpack.c.b16 %v1051, %v1050
    %v1418 = vpack.c.b16 %v1053, %v1052
    %v1419 = vpack.c.b16 %v1055, %v1054
    %v1420 = vpack.c.b16 %v1057, %v1056
    %v1421 = vpack.c.b16 %v1059, %v1058
    %v1422 = vpack.c.b16 %v1061, %v1060
    %v1423 = vpack.c.b16 %v1063, %v1062
    %v1424 = vpack.c.b16 %v1065, %v1064
    %v1425 = vpack.c.b16 %v1067, %v1066
    %v1426 = vpack.c.b16 %v1069, %v1068
    %v1427 = vpack.c.b16 %v1071, %v1070
    %v1428 = vpack.c.b16 %v1073, %v1072
    %v1429 = vpack.c.b16 %v1075, %v1074
    %v1430 = vpack.c.b16 %v1077, %v1076
    %v1431 = vpack.c.b16 %v1079, %v1078
    %v1432 = vpack.c.b16 %v1081, %v1080
    %v1433 = vpack.c.b16 %v1083, %v1082
    %v1434 = vpack.c.b16 %v1085, %v1084
    %v1435 = vpack.c.b16 %v1087, %v1086
    %v1436 = vpack.c.b16 %v1089, %v1088
    %v1437 = vpack.c.b16 %v1091, %v1090
    %v1438 = vpack.c.b16 %v1093, %v1092
    %v1439 = vpack.c.b16 %v1095, %v1094
    %v1440 = vpack.c.b16 %v1097, %v1096
    %v1441 = vpack.c.b16 %v1099, %v1098
    %v1442 = vpack.c.b16 %v1101, %v1100
    %v1443 = vpack.c.b16 %v1103, %v1102
    %v1444 = vpack.c.b16 %v1105, %v1104
    %v1445 = vpack.c.b16 %v1107, %v1106
    %v1446 = vpack.c.b16 %v1109, %v1108
    %v1447 = vpack.c.b16 %v1111, %v1110
    %v1448 = vpack.c.b16 %v1113, %v1112
    %v1449 = vpack.c.b16 %v1115, %v1114
    %v1450 = vpack.c.b16 %v1117, %v1116
    %v1451 = vpack.c.b16 %v1119, %v1118
    %v1452 = vpack.c.b16 %v1121, %v1120
    %v1453 = vpack.c.b16 %v1123, %v1122
    %v1454 = vpack.c.b16 %v1125, %v1124
    %v1455 = vpack.c.b16 %v1127, %v1126
    %v1456 = vpack.c.b16 %v1129, %v1128
    %v1457 = vpack.c.b16 %v1131, %v1130
    %v1458 = vpack.c.b16 %v1133, %v1132
    %v1459 = vpack.c.b16 %v1135, %v1134
    %v1460 = vpack.c.b16 %v1137, %v1136
    %v1461 = vpack.c.b16 %v1139, %v1138
    %v1462 = vpack.c.b16 %v1141, %v1140
    %v1463 = vpack.c.b16 %v1143, %v1142
    %v1464 = vpack.c.b16 %v1145, %v1144
    %v1465 = vpack.c.b16 %v1147, %v1146
    %v1466 = vpack.c.b16 %v1149, %v1148
    %v1467 = vpack.c.b16 %v1151, %v1150
    %v1468 = vpack.c.b16 %v1153, %v1152
    %v1469 = vpack.c.b16 %v1155, %v1154
    %v1470 = vpack.c.b16 %v1157, %v1156
    %v1471 = vpack.c.b16 %v1159, %v1158
    %v1472 = vpack.c.b16 %v1161, %v1160
    %v1473 = vpack.c.b16 %v1163, %v1162
    %v1474 = vpack.c.b16 %v1165, %v1164
    %v1475 = vpack.c.b16 %v1167, %v1166
    %v1476 = vpack.c.b16 %v1169, %v1168
    %v1477 = vpack.c.b16 %v1171, %v1170
    %v1478 = vpack.c.b16 %v1173, %v1172
    %v1479 = vpack.c.b16 %v1175, %v1174
    %v1480 = vpack.c.b16 %v1177, %v1176
    %v1481 = vpack.c.b16 %v1179, %v1178
    %v1482 = vpack.c.b16 %v1181, %v1180
    %v1483 = vpack.c.b16 %v1183, %v1182
    %v1484 = vpack.c.b16 %v1185, %v1184
    %v1485 = vpack.c.b16 %v1187, %v1186
    %v1486 = vpack.c.b16 %v1189, %v1188
    %v1487 = vpack.c.b16 %v1191, %v1190
    %v1488 = vpack.c.b16 %v1193, %v1192
    %v1489 = vpack.c.b16 %v1195, %v1194
    %v1490 = vpack.c.b16 %v1197, %v1196
    %v1491 = vpack.c.b16 %v1199, %v1198
    %v1492 = vpack.c.b16 %v1201, %v1200
    %v1493 = vpack.c.b16 %v1203, %v1202
    %v1494 = vpack.c.b16 %v1205, %v1204
    %v1495 = vpack.c.b16 %v1207, %v1206
    %v1496 = vpack.c.b16 %v1209, %v1208
    %v1497 = vpack.c.b16 %v1211, %v1210
    %v1498 = vpack.c.b16 %v1213, %v1212
    %v1499 = vpack.c.b16 %v1215, %v1214
    %v1500 = vpack.c.b16 %v1217, %v1216
    %v1501 = vpack.c.b16 %v1219, %v1218
    %v1502 = vpack.c.b16 %v1221, %v1220
    %v1503 = vpack.c.b16 %v1223, %v1222
    %v1504 = vpack.c.b16 %v1225, %v1224
    %v1505 = vpack.c.b16 %v1227, %v1226
    %v1506 = vpack.c.b16 %v1229, %v1228
    %v1507 = vpack.c.b16 %v1231, %v1230
    %v1508 = vpack.c.b16 %v1233, %v1232
    %v1509 = vpack.c.b16 %v1235, %v1234
    %v1510 = vpack.c.b16 %v1237, %v1236
    %v1511 = vpack.c.b16 %v1239, %v1238
    %v1512 = vpack.c.b16 %v1241, %v1240
    %v1513 = vpack.c.b16 %v1243, %v1242
    %v1514 = vpack.c.b16 %v1245, %v1244
    %v1515 = vpack.c.b16 %v1247, %v1246
    %v1516 = vpack.c.b16 %v1249, %v1248
    %v1517 = vpack.c.b16 %v1251, %v1250
    %v1518 = vpack.c.b16 %v1253, %v1252
    %v1519 = vpack.c.b16 %v1255, %v1254
    %v1520 = vpack.c.b16 %v1257, %v1256
    %v1521 = vpack.c.b16 %v1259, %v1258
    %v1522 = vpack.c.b16 %v1261, %v1260
    %v1523 = vpack.c.b16 %v1263, %v1262
    %v1524 = vpack.c.b16 %v1265, %v1264
    %v1525 = vpack.c.b16 %v1267, %v1266
    %v1526 = vpack.c.b16 %v1269, %v1268
    %v1527 = vpack.c.b16 %v1271, %v1270
    %v1528 = vpack.c.b16 %v1273, %v1272
    %v1529 = vpack.c.b16 %v1275, %v1274
    %v1530 = vpack.c.b16 %v1277, %v1276
    %v1531 = vpack.c.b16 %v1279, %v1278
    %v1532 = vpack.c.b16 %v1281, %v1280
    %v1533 = vpack.c.b16 %v1283, %v1282
    %v1534 = vpack.c.b16 %v1285, %v1284
    %v1535 = vpack.c.b16 %v1287, %v1286
    %v1536 = vpack.c.b16 %v1289, %v1288
    %v1537 = vpack.c.b16 %v1291, %v1290
    %v1538 = vpack.c.b16 %v1293, %v1292
    %v1539 = vpack.c.b16 %v1295, %v1294
    %v1540 = vpack.c.b16 %v1297, %v1296
    %v1541 = vpack.c.b16 %v1299, %v1298
    %v1542 = vpack.c.b16 %v1301, %v1300
    %v1543 = vpack.c.b16 %v1303, %v1302
    %v1544 = vpack.c.b16 %v1305, %v1304
    %v1545 = vpack.c.b16 %v1307, %v1306
    %v1546 = vpack.c.b16 %v1309, %v1308
    %v1547 = vpack.c.b16 %v1311, %v1310
    %v1548 = vpack.c.b16 %v1313, %v1312
    %v1549 = vpack.c.b16 %v1315, %v1314
    %v1550 = vpack.c.b16 %v1317, %v1316
    %v1551 = vpack.c.b16 %v1319, %v1318
    %v1552 = vpack.c.b16 %v1321, %v1320
    %v1553 = vpack.c.b16 %v1323, %v1322
    %v1554 = vpack.c.b16 %v1325, %v1324
    %v1555 = vpack.c.b16 %v1327, %v1326
    %v1556 = vpack.c.b16 %v1329, %v1328
    %v1557 = vpack.c.b16 %v1331, %v1330
    %v1558 = vpack.c.b16 %v1333, %v1332
    %v1559 = vpack.c.b16 %v1335, %v1334
    %v1560 = vpack.c.b16 %v1337, %v1336
    %v1561 = vpack.c.b16 %v1339, %v1338
    %v1562 = vpack.c.b16 %v1341, %v1340
    %v1563 = vpack.c.b16 %v1343, %v1342
    %v1564 = vpack.c.b16 %v1345, %v1344
    %v1565 = vpack.c.b16 %v1347, %v1346
    %v1566 = vpack.c.b16 %v1349, %v1348
    %v1567 = vpack.c.b16 %v1351, %v1350
    %v1568 = vpack.c.b16 %v1353, %v1352
    %v1569 = vpack.c.b16 %v1355, %v1354
    %v1570 = vpack.c.b16 %v1357, %v1356
    %v1571 = vpack.c.b16 %v1359, %v1358
    %v1572 = vpack.c.b16 %v1361, %v1360
    %v1573 = vpack.c.b16 %v1363, %v1362
    %v1574 = vpack.c.b16 %v1365, %v1364
    %v1575 = vpack.c.b16 %v1367, %v1366
    %v1576 = vpack.c.b16 %v1369, %v1368
    %v1577 = vpack.c.b16 %v1371, %v1370
    %v1578 = vpack.c.b16 %v1373, %v1372
    %v1579 = vpack.c.b16 %v1375, %v1374
    %v1580 = vpack.c.b16 %v1377, %v1376
    %v1581 = vpack.c.b16 %v1379, %v1378
    %v1582 = vpack.c.b16 %v1381, %v1380
    %v1583 = vpack.c.b16 %v1383, %v1382
    %v1584 = vpack.c.b16 %v1385, %v1384
    %v1585 = vpack.c.b16 %v1387, %v1386
    %v1586 = vpack.c.b16 %v1389, %v1388
    %v1587 = vpack.c.b16 %v1391, %v1390
    %vm1784 = vcmask 523264
    %v1786 = vsel %vm1784, %v583, 0
    %1788 = vmatprep.subr.bf16.mxu0 0
    %1789 = vmatpush1.bf16.msra.mxu0 %v1392
    %1790 = vmatprep.subr.bf16.mxu0 0
    %1791 = vmatpush1.bf16.msra.mxu0 %v1393
    %1792 = vmatprep.subr.bf16.mxu0 0
    %1793 = vmatpush1.bf16.msra.mxu0 %v1394
    %1794 = vmatprep.subr.bf16.mxu0 0
    %1795 = vmatpush1.bf16.msra.mxu0 %v1395
    %1796 = vmatprep.subr.bf16.mxu0 0
    %1797 = vmatpush1.bf16.msra.mxu0 %v1396
    %1798 = vmatprep.subr.bf16.mxu0 0
    %1799 = vmatpush1.bf16.msra.mxu0 %v1397
    %1800 = vmatprep.subr.bf16.mxu0 0
    %1801 = vmatpush1.bf16.msra.mxu0 %v1398
    %1802 = vmatprep.subr.bf16.mxu0 0
    %1803 = vmatpush1.bf16.msra.mxu0 %v1399
    %1804 = vmatprep.subr.bf16.mxu0 0
    %1805 = vmatpush1.bf16.msra.mxu0 %v1400
    %1806 = vmatprep.subr.bf16.mxu0 0
    %1807 = vmatpush1.bf16.msra.mxu0 %v1401
    %1808 = vmatprep.subr.bf16.mxu0 0
    %1809 = vmatpush1.bf16.msra.mxu0 %v1402
    %1810 = vmatprep.subr.bf16.mxu0 0
    %1811 = vmatpush1.bf16.msra.mxu0 %v1403
    %1812 = vmatprep.subr.bf16.mxu0 0
    %1813 = vmatpush1.bf16.msra.mxu0 %v1404
    %1814 = vmatprep.subr.bf16.mxu0 0
    %1815 = vmatpush1.bf16.msra.mxu0 %v1405
    %1816 = vmatprep.subr.bf16.mxu0 0
    %1817 = vmatpush1.bf16.msra.mxu0 %v1406
    %1818 = vmatprep.subr.bf16.mxu0 0
    %1819 = vmatpush1.bf16.msra.mxu0 %v1407
    %1820 = vmatprep.mubr.bf16.mxu0 %v460
    %1821 = vmatmul.mubr.bf16.gmra.mrb[0].mxu0 %v446
    %v1822 = vpop.f32.mrb[0].mxu0
    %v1823 = vadd.f32 %v417, %v1822
    %v1824 = vpop.f32.mrb[0].mxu0
    %v1825 = vpop.f32.mrb[0].mxu0
    %v1826 = vpop.f32.mrb[0].mxu0
    %1827 = vdwg.mxu0
    %1828 = vmatprep.subr.bf16.mxu0 0
    %1829 = vmatpush1.bf16.msra.mxu0 %v1408
    %1830 = vmatprep.subr.bf16.mxu0 0
    %1831 = vmatpush1.bf16.msra.mxu0 %v1409
    %1832 = vmatprep.subr.bf16.mxu0 0
    %1833 = vmatpush1.bf16.msra.mxu0 %v1410
    %1834 = vmatprep.subr.bf16.mxu0 0
    %1835 = vmatpush1.bf16.msra.mxu0 %v1411
    %1836 = vmatprep.subr.bf16.mxu0 0
    %1837 = vmatpush1.bf16.msra.mxu0 %v1412
    %1838 = vmatprep.subr.bf16.mxu0 0
    %1839 = vmatpush1.bf16.msra.mxu0 %v1413
    %1840 = vmatprep.subr.bf16.mxu0 0
    %1841 = vmatpush1.bf16.msra.mxu0 %v1414
    %1842 = vmatprep.subr.bf16.mxu0 0
    %1843 = vmatpush1.bf16.msra.mxu0 %v1415
    %1844 = vmatprep.subr.bf16.mxu0 0
    %1845 = vmatpush1.bf16.msra.mxu0 %v1416
    %1846 = vmatprep.subr.bf16.mxu0 0
    %1847 = vmatpush1.bf16.msra.mxu0 %v1417
    %1848 = vmatprep.subr.bf16.mxu0 0
    %1849 = vmatpush1.bf16.msra.mxu0 %v1418
    %1850 = vmatprep.subr.bf16.mxu0 0
    %1851 = vmatpush1.bf16.msra.mxu0 %v1419
    %1852 = vmatprep.subr.bf16.mxu0 0
    %1853 = vmatpush1.bf16.msra.mxu0 %v1420
    %1854 = vmatprep.subr.bf16.mxu0 0
    %1855 = vmatpush1.bf16.msra.mxu0 %v1421
    %1856 = vmatprep.subr.bf16.mxu0 0
    %1857 = vmatpush1.bf16.msra.mxu0 %v1422
    %1858 = vmatprep.subr.bf16.mxu0 0
    %1859 = vmatpush1.bf16.msra.mxu0 %v1423
    %1860 = vmatprep.mubr.bf16.mxu0 %v470
    %1861 = vmatmul.mubr.bf16.gmra.mrb[0].mxu0 %v468
    %v1862 = vpop.f32.mrb[0].mxu0
    %v1863 = vadd.f32 %v1823, %v1862
    %v1864 = vpop.f32.mrb[0].mxu0
    %v1865 = vpop.f32.mrb[0].mxu0
    %v1866 = vpop.f32.mrb[0].mxu0
    %1867 = vdwg.mxu0
    %1868 = vmatprep.subr.bf16.mxu0 0
    %1869 = vmatpush1.bf16.msra.mxu0 %v1424
    %1870 = vmatprep.subr.bf16.mxu0 0
    %1871 = vmatpush1.bf16.msra.mxu0 %v1425
    %1872 = vmatprep.subr.bf16.mxu0 0
    %1873 = vmatpush1.bf16.msra.mxu0 %v1426
    %1874 = vmatprep.subr.bf16.mxu0 0
    %1875 = vmatpush1.bf16.msra.mxu0 %v1427
    %1876 = vmatprep.subr.bf16.mxu0 0
    %1877 = vmatpush1.bf16.msra.mxu0 %v1428
    %1878 = vmatprep.subr.bf16.mxu0 0
    %1879 = vmatpush1.bf16.msra.mxu0 %v1429
    %1880 = vmatprep.subr.bf16.mxu0 0
    %1881 = vmatpush1.bf16.msra.mxu0 %v1430
    %1882 = vmatprep.subr.bf16.mxu0 0
    %1883 = vmatpush1.bf16.msra.mxu0 %v1431
    %1884 = vmatprep.subr.bf16.mxu0 0
    %1885 = vmatpush1.bf16.msra.mxu0 %v1432
    %1886 = vmatprep.subr.bf16.mxu0 0
    %1887 = vmatpush1.bf16.msra.mxu0 %v1433
    %1888 = vmatprep.subr.bf16.mxu0 0
    %1889 = vmatpush1.bf16.msra.mxu0 %v1434
    %1890 = vmatprep.subr.bf16.mxu0 0
    %1891 = vmatpush1.bf16.msra.mxu0 %v1435
    %1892 = vmatprep.subr.bf16.mxu0 0
    %1893 = vmatpush1.bf16.msra.mxu0 %v1436
    %1894 = vmatprep.subr.bf16.mxu0 0
    %1895 = vmatpush1.bf16.msra.mxu0 %v1437
    %1896 = vmatprep.subr.bf16.mxu0 0
    %1897 = vmatpush1.bf16.msra.mxu0 %v1438
    %1898 = vmatprep.subr.bf16.mxu0 0
    %1899 = vmatpush1.bf16.msra.mxu0 %v1439
    %1900 = vmatprep.mubr.bf16.mxu0 %v467
    %1901 = vmatmul.mubr.bf16.gmra.mrb[0].mxu0 %v453
    %v1902 = vpop.f32.mrb[0].mxu0
    %v1903 = vadd.f32 %v1863, %v1902
    %v1904 = vpop.f32.mrb[0].mxu0
    %v1905 = vpop.f32.mrb[0].mxu0
    %v1906 = vpop.f32.mrb[0].mxu0
    %1907 = vdwg.mxu0
    %1908 = vmatprep.subr.bf16.mxu0 0
    %1909 = vmatpush1.bf16.msra.mxu0 %v1440
    %1910 = vmatprep.subr.bf16.mxu0 0
    %1911 = vmatpush1.bf16.msra.mxu0 %v1441
    %1912 = vmatprep.subr.bf16.mxu0 0
    %1913 = vmatpush1.bf16.msra.mxu0 %v1442
    %1914 = vmatprep.subr.bf16.mxu0 0
    %1915 = vmatpush1.bf16.msra.mxu0 %v1443
    %1916 = vmatprep.subr.bf16.mxu0 0
    %1917 = vmatpush1.bf16.msra.mxu0 %v1444
    %1918 = vmatprep.subr.bf16.mxu0 0
    %1919 = vmatpush1.bf16.msra.mxu0 %v1445
    %1920 = vmatprep.subr.bf16.mxu0 0
    %1921 = vmatpush1.bf16.msra.mxu0 %v1446
    %1922 = vmatprep.subr.bf16.mxu0 0
    %1923 = vmatpush1.bf16.msra.mxu0 %v1447
    %1924 = vmatprep.subr.bf16.mxu0 0
    %1925 = vmatpush1.bf16.msra.mxu0 %v1448
    %1926 = vmatprep.subr.bf16.mxu0 0
    %1927 = vmatpush1.bf16.msra.mxu0 %v1449
    %1928 = vmatprep.subr.bf16.mxu0 0
    %1929 = vmatpush1.bf16.msra.mxu0 %v1450
    %1930 = vmatprep.subr.bf16.mxu0 0
    %1931 = vmatpush1.bf16.msra.mxu0 %v1451
    %1932 = vmatprep.subr.bf16.mxu0 0
    %1933 = vmatpush1.bf16.msra.mxu0 %v1452
    %1934 = vmatprep.subr.bf16.mxu0 0
    %1935 = vmatpush1.bf16.msra.mxu0 %v1453
    %1936 = vmatprep.subr.bf16.mxu0 0
    %1937 = vmatpush1.bf16.msra.mxu0 %v1454
    %1938 = vmatprep.subr.bf16.mxu0 0
    %1939 = vmatpush1.bf16.msra.mxu0 %v1455
    %1940 = vmatprep.mubr.bf16.mxu0 %v471
    %1941 = vmatmul.mubr.bf16.gmra.mrb[0].mxu0 %v469
    %v1942 = vpop.f32.mrb[0].mxu0
    %v1943 = vadd.f32 %v1903, %v1942
    %v1944 = vpop.f32.mrb[0].mxu0
    %v1945 = vpop.f32.mrb[0].mxu0
    %v1946 = vpop.f32.mrb[0].mxu0
    %1947 = vdwg.mxu0
    %1948 = vmatprep.subr.bf16.mxu0 0
    %1949 = vmatpush1.bf16.msra.mxu0 %v1456
    %1950 = vmatprep.subr.bf16.mxu0 0
    %1951 = vmatpush1.bf16.msra.mxu0 %v1457
    %1952 = vmatprep.subr.bf16.mxu0 0
    %1953 = vmatpush1.bf16.msra.mxu0 %v1458
    %1954 = vmatprep.subr.bf16.mxu0 0
    %1955 = vmatpush1.bf16.msra.mxu0 %v1459
    %1956 = vmatprep.subr.bf16.mxu0 0
    %1957 = vmatpush1.bf16.msra.mxu0 %v1460
    %1958 = vmatprep.subr.bf16.mxu0 0
    %1959 = vmatpush1.bf16.msra.mxu0 %v1461
    %1960 = vmatprep.subr.bf16.mxu0 0
    %1961 = vmatpush1.bf16.msra.mxu0 %v1462
    %1962 = vmatprep.subr.bf16.mxu0 0
    %1963 = vmatpush1.bf16.msra.mxu0 %v1463
    %1964 = vmatprep.subr.bf16.mxu0 0
    %1965 = vmatpush1.bf16.msra.mxu0 %v1464
    %1966 = vmatprep.subr.bf16.mxu0 0
    %1967 = vmatpush1.bf16.msra.mxu0 %v1465
    %1968 = vmatprep.subr.bf16.mxu0 0
    %1969 = vmatpush1.bf16.msra.mxu0 %v1466
    %1970 = vmatprep.subr.bf16.mxu0 0
    %1971 = vmatpush1.bf16.msra.mxu0 %v1467
    %1972 = vmatprep.subr.bf16.mxu0 0
    %1973 = vmatpush1.bf16.msra.mxu0 %v1468
    %1974 = vmatprep.subr.bf16.mxu0 0
    %1975 = vmatpush1.bf16.msra.mxu0 %v1469
    %1976 = vmatprep.subr.bf16.mxu0 0
    %1977 = vmatpush1.bf16.msra.mxu0 %v1470
    %1978 = vmatprep.subr.bf16.mxu0 0
    %1979 = vmatpush1.bf16.msra.mxu0 %v1471
    %1980 = vmatprep.mubr.bf16.mxu0 %v509
    %1981 = vmatmul.mubr.bf16.gmra.mrb[0].mxu0 %v495
    %v1982 = vpop.f32.mrb[0].mxu0
    %v1983 = vadd.f32 %v1943, %v1982
    %v1984 = vpop.f32.mrb[0].mxu0
    %v1985 = vpop.f32.mrb[0].mxu0
    %v1986 = vpop.f32.mrb[0].mxu0
    %1987 = vdwg.mxu0
    %1988 = vmatprep.subr.bf16.mxu0 0
    %1989 = vmatpush1.bf16.msra.mxu0 %v1472
    %1990 = vmatprep.subr.bf16.mxu0 0
    %1991 = vmatpush1.bf16.msra.mxu0 %v1473
    %1992 = vmatprep.subr.bf16.mxu0 0
    %1993 = vmatpush1.bf16.msra.mxu0 %v1474
    %1994 = vmatprep.subr.bf16.mxu0 0
    %1995 = vmatpush1.bf16.msra.mxu0 %v1475
    %1996 = vmatprep.subr.bf16.mxu0 0
    %1997 = vmatpush1.bf16.msra.mxu0 %v1476
    %1998 = vmatprep.subr.bf16.mxu0 0
    %1999 = vmatpush1.bf16.msra.mxu0 %v1477
    %2000 = vmatprep.subr.bf16.mxu0 0
    %2001 = vmatpush1.bf16.msra.mxu0 %v1478
    %2002 = vmatprep.subr.bf16.mxu0 0
    %2003 = vmatpush1.bf16.msra.mxu0 %v1479
    %2004 = vmatprep.subr.bf16.mxu0 0
    %2005 = vmatpush1.bf16.msra.mxu0 %v1480
    %2006 = vmatprep.subr.bf16.mxu0 0
    %2007 = vmatpush1.bf16.msra.mxu0 %v1481
    %2008 = vmatprep.subr.bf16.mxu0 0
    %2009 = vmatpush1.bf16.msra.mxu0 %v1482
    %2010 = vmatprep.subr.bf16.mxu0 0
    %2011 = vmatpush1.bf16.msra.mxu0 %v1483
    %2012 = vmatprep.subr.bf16.mxu0 0
    %2013 = vmatpush1.bf16.msra.mxu0 %v1484
    %2014 = vmatprep.subr.bf16.mxu0 0
    %2015 = vmatpush1.bf16.msra.mxu0 %v1485
    %2016 = vmatprep.subr.bf16.mxu0 0
    %2017 = vmatpush1.bf16.msra.mxu0 %v1486
    %2018 = vmatprep.subr.bf16.mxu0 0
    %2019 = vmatpush1.bf16.msra.mxu0 %v1487
    %2020 = vmatprep.mubr.bf16.mxu0 %v519
    %2021 = vmatmul.mubr.bf16.gmra.mrb[0].mxu0 %v517
    %v2022 = vpop.f32.mrb[0].mxu0
    %v2023 = vadd.f32 %v1983, %v2022
    %v2024 = vpop.f32.mrb[0].mxu0
    %v2025 = vpop.f32.mrb[0].mxu0
    %v2026 = vpop.f32.mrb[0].mxu0
    %2027 = vdwg.mxu0
    %2028 = vmatprep.subr.bf16.mxu0 0
    %2029 = vmatpush1.bf16.msra.mxu0 %v1488
    %2030 = vmatprep.subr.bf16.mxu0 0
    %2031 = vmatpush1.bf16.msra.mxu0 %v1489
    %2032 = vmatprep.subr.bf16.mxu0 0
    %2033 = vmatpush1.bf16.msra.mxu0 %v1490
    %2034 = vmatprep.subr.bf16.mxu0 0
    %2035 = vmatpush1.bf16.msra.mxu0 %v1491
    %2036 = vmatprep.subr.bf16.mxu0 0
    %2037 = vmatpush1.bf16.msra.mxu0 %v1492
    %2038 = vmatprep.subr.bf16.mxu0 0
    %2039 = vmatpush1.bf16.msra.mxu0 %v1493
    %2040 = vmatprep.subr.bf16.mxu0 0
    %2041 = vmatpush1.bf16.msra.mxu0 %v1494
    %2042 = vmatprep.subr.bf16.mxu0 0
    %2043 = vmatpush1.bf16.msra.mxu0 %v1495
    %2044 = vmatprep.subr.bf16.mxu0 0
    %2045 = vmatpush1.bf16.msra.mxu0 %v1496
    %2046 = vmatprep.subr.bf16.mxu0 0
    %2047 = vmatpush1.bf16.msra.mxu0 %v1497
    %2048 = vmatprep.subr.bf16.mxu0 0
    %2049 = vmatpush1.bf16.msra.mxu0 %v1498
    %2050 = vmatprep.subr.bf16.mxu0 0
    %2051 = vmatpush1.bf16.msra.mxu0 %v1499
    %2052 = vmatprep.subr.bf16.mxu0 0
    %2053 = vmatpush1.bf16.msra.mxu0 %v1500
    %2054 = vmatprep.subr.bf16.mxu0 0
    %2055 = vmatpush1.bf16.msra.mxu0 %v1501
    %2056 = vmatprep.subr.bf16.mxu0 0
    %2057 = vmatpush1.bf16.msra.mxu0 %v1502
    %2058 = vmatprep.subr.bf16.mxu0 0
    %2059 = vmatpush1.bf16.msra.mxu0 %v1503
    %2060 = vmatprep.mubr.bf16.mxu0 %v516
    %2061 = vmatmul.mubr.bf16.gmra.mrb[0].mxu0 %v502
    %v2062 = vpop.f32.mrb[0].mxu0
    %v2063 = vadd.f32 %v2023, %v2062
    %v2064 = vpop.f32.mrb[0].mxu0
    %v2065 = vpop.f32.mrb[0].mxu0
    %v2066 = vpop.f32.mrb[0].mxu0
    %2067 = vdwg.mxu0
    %2068 = vmatprep.subr.bf16.mxu0 0
    %2069 = vmatpush1.bf16.msra.mxu0 %v1504
    %2070 = vmatprep.subr.bf16.mxu0 0
    %2071 = vmatpush1.bf16.msra.mxu0 %v1505
    %2072 = vmatprep.subr.bf16.mxu0 0
    %2073 = vmatpush1.bf16.msra.mxu0 %v1506
    %2074 = vmatprep.subr.bf16.mxu0 0
    %2075 = vmatpush1.bf16.msra.mxu0 %v1507
    %2076 = vmatprep.subr.bf16.mxu0 0
    %2077 = vmatpush1.bf16.msra.mxu0 %v1508
    %2078 = vmatprep.subr.bf16.mxu0 0
    %2079 = vmatpush1.bf16.msra.mxu0 %v1509
    %2080 = vmatprep.subr.bf16.mxu0 0
    %2081 = vmatpush1.bf16.msra.mxu0 %v1510
    %2082 = vmatprep.subr.bf16.mxu0 0
    %2083 = vmatpush1.bf16.msra.mxu0 %v1511
    %2084 = vmatprep.subr.bf16.mxu0 0
    %2085 = vmatpush1.bf16.msra.mxu0 %v1512
    %2086 = vmatprep.subr.bf16.mxu0 0
    %2087 = vmatpush1.bf16.msra.mxu0 %v1513
    %2088 = vmatprep.subr.bf16.mxu0 0
    %2089 = vmatpush1.bf16.msra.mxu0 %v1514
    %2090 = vmatprep.subr.bf16.mxu0 0
    %2091 = vmatpush1.bf16.msra.mxu0 %v1515
    %2092 = vmatprep.subr.bf16.mxu0 0
    %2093 = vmatpush1.bf16.msra.mxu0 %v1516
    %2094 = vmatprep.subr.bf16.mxu0 0
    %2095 = vmatpush1.bf16.msra.mxu0 %v1517
    %2096 = vmatprep.subr.bf16.mxu0 0
    %2097 = vmatpush1.bf16.msra.mxu0 %v1518
    %2098 = vmatprep.subr.bf16.mxu0 0
    %2099 = vmatpush1.bf16.msra.mxu0 %v1519
    %2100 = vmatprep.mubr.bf16.mxu0 %v520
    %2101 = vmatmul.mubr.bf16.gmra.mrb[0].mxu0 %v518
    %v2102 = vpop.f32.mrb[0].mxu0
    %v2103 = vadd.f32 %v2063, %v2102
    %v2104 = vpop.f32.mrb[0].mxu0
    %v2105 = vpop.f32.mrb[0].mxu0
    %v2106 = vpop.f32.mrb[0].mxu0
    %2107 = vdwg.mxu0
    %2108 = vmatprep.subr.bf16.mxu0 0
    %2109 = vmatpush1.bf16.msra.mxu0 %v1520
    %2110 = vmatprep.subr.bf16.mxu0 0
    %2111 = vmatpush1.bf16.msra.mxu0 %v1521
    %2112 = vmatprep.subr.bf16.mxu0 0
    %2113 = vmatpush1.bf16.msra.mxu0 %v1522
    %2114 = vmatprep.subr.bf16.mxu0 0
    %2115 = vmatpush1.bf16.msra.mxu0 %v1523
    %2116 = vmatprep.subr.bf16.mxu0 0
    %2117 = vmatpush1.bf16.msra.mxu0 %v1524
    %2118 = vmatprep.subr.bf16.mxu0 0
    %2119 = vmatpush1.bf16.msra.mxu0 %v1525
    %2120 = vmatprep.subr.bf16.mxu0 0
    %2121 = vmatpush1.bf16.msra.mxu0 %v1526
    %2122 = vmatprep.subr.bf16.mxu0 0
    %2123 = vmatpush1.bf16.msra.mxu0 %v1527
    %2124 = vmatprep.subr.bf16.mxu0 0
    %2125 = vmatpush1.bf16.msra.mxu0 %v1528
    %2126 = vmatprep.subr.bf16.mxu0 0
    %2127 = vmatpush1.bf16.msra.mxu0 %v1529
    %2128 = vmatprep.subr.bf16.mxu0 0
    %2129 = vmatpush1.bf16.msra.mxu0 %v1530
    %2130 = vmatprep.subr.bf16.mxu0 0
    %2131 = vmatpush1.bf16.msra.mxu0 %v1531
    %2132 = vmatprep.subr.bf16.mxu0 0
    %2133 = vmatpush1.bf16.msra.mxu0 %v1532
    %2134 = vmatprep.subr.bf16.mxu0 0
    %2135 = vmatpush1.bf16.msra.mxu0 %v1533
    %2136 = vmatprep.subr.bf16.mxu0 0
    %2137 = vmatpush1.bf16.msra.mxu0 %v1534
    %2138 = vmatprep.subr.bf16.mxu0 0
    %2139 = vmatpush1.bf16.msra.mxu0 %v1535
    %2140 = vmatprep.mubr.bf16.mxu0 %v558
    %2141 = vmatmul.mubr.bf16.gmra.mrb[0].mxu0 %v544
    %v2142 = vpop.f32.mrb[0].mxu0
    %v2143 = vadd.f32 %v2103, %v2142
    %v2144 = vpop.f32.mrb[0].mxu0
    %v2145 = vpop.f32.mrb[0].mxu0
    %v2146 = vpop.f32.mrb[0].mxu0
    %2147 = vdwg.mxu0
    %2148 = vmatprep.subr.bf16.mxu0 0
    %2149 = vmatpush1.bf16.msra.mxu0 %v1536
    %2150 = vmatprep.subr.bf16.mxu0 0
    %2151 = vmatpush1.bf16.msra.mxu0 %v1537
    %2152 = vmatprep.subr.bf16.mxu0 0
    %2153 = vmatpush1.bf16.msra.mxu0 %v1538
    %2154 = vmatprep.subr.bf16.mxu0 0
    %2155 = vmatpush1.bf16.msra.mxu0 %v1539
    %2156 = vmatprep.subr.bf16.mxu0 0
    %2157 = vmatpush1.bf16.msra.mxu0 %v1540
    %2158 = vmatprep.subr.bf16.mxu0 0
    %2159 = vmatpush1.bf16.msra.mxu0 %v1541
    %2160 = vmatprep.subr.bf16.mxu0 0
    %2161 = vmatpush1.bf16.msra.mxu0 %v1542
    %2162 = vmatprep.subr.bf16.mxu0 0
    %2163 = vmatpush1.bf16.msra.mxu0 %v1543
    %2164 = vmatprep.subr.bf16.mxu0 0
    %2165 = vmatpush1.bf16.msra.mxu0 %v1544
    %2166 = vmatprep.subr.bf16.mxu0 0
    %2167 = vmatpush1.bf16.msra.mxu0 %v1545
    %2168 = vmatprep.subr.bf16.mxu0 0
    %2169 = vmatpush1.bf16.msra.mxu0 %v1546
    %2170 = vmatprep.subr.bf16.mxu0 0
    %2171 = vmatpush1.bf16.msra.mxu0 %v1547
    %2172 = vmatprep.subr.bf16.mxu0 0
    %2173 = vmatpush1.bf16.msra.mxu0 %v1548
    %2174 = vmatprep.subr.bf16.mxu0 0
    %2175 = vmatpush1.bf16.msra.mxu0 %v1549
    %2176 = vmatprep.subr.bf16.mxu0 0
    %2177 = vmatpush1.bf16.msra.mxu0 %v1550
    %2178 = vmatprep.subr.bf16.mxu0 0
    %2179 = vmatpush1.bf16.msra.mxu0 %v1551
    %2180 = vmatprep.mubr.bf16.mxu0 %v568
    %2181 = vmatmul.mubr.bf16.gmra.mrb[0].mxu0 %v566
    %v2182 = vpop.f32.mrb[0].mxu0
    %v2183 = vadd.f32 %v2143, %v2182
    %v2184 = vpop.f32.mrb[0].mxu0
    %v2185 = vpop.f32.mrb[0].mxu0
    %v2186 = vpop.f32.mrb[0].mxu0
    %2187 = vdwg.mxu0
    %2188 = vmatprep.subr.bf16.mxu0 0
    %2189 = vmatpush1.bf16.msra.mxu0 %v1552
    %2190 = vmatprep.subr.bf16.mxu0 0
    %2191 = vmatpush1.bf16.msra.mxu0 %v1553
    %2192 = vmatprep.subr.bf16.mxu0 0
    %2193 = vmatpush1.bf16.msra.mxu0 %v1554
    %2194 = vmatprep.subr.bf16.mxu0 0
    %2195 = vmatpush1.bf16.msra.mxu0 %v1555
    %2196 = vmatprep.subr.bf16.mxu0 0
    %2197 = vmatpush1.bf16.msra.mxu0 %v1556
    %2198 = vmatprep.subr.bf16.mxu0 0
    %2199 = vmatpush1.bf16.msra.mxu0 %v1557
    %2200 = vmatprep.subr.bf16.mxu0 0
    %2201 = vmatpush1.bf16.msra.mxu0 %v1558
    %2202 = vmatprep.subr.bf16.mxu0 0
    %2203 = vmatpush1.bf16.msra.mxu0 %v1559
    %2204 = vmatprep.subr.bf16.mxu0 0
    %2205 = vmatpush1.bf16.msra.mxu0 %v1560
    %2206 = vmatprep.subr.bf16.mxu0 0
    %2207 = vmatpush1.bf16.msra.mxu0 %v1561
    %2208 = vmatprep.subr.bf16.mxu0 0
    %2209 = vmatpush1.bf16.msra.mxu0 %v1562
    %2210 = vmatprep.subr.bf16.mxu0 0
    %2211 = vmatpush1.bf16.msra.mxu0 %v1563
    %2212 = vmatprep.subr.bf16.mxu0 0
    %2213 = vmatpush1.bf16.msra.mxu0 %v1564
    %2214 = vmatprep.subr.bf16.mxu0 0
    %2215 = vmatpush1.bf16.msra.mxu0 %v1565
    %2216 = vmatprep.subr.bf16.mxu0 0
    %2217 = vmatpush1.bf16.msra.mxu0 %v1566
    %2218 = vmatprep.subr.bf16.mxu0 0
    %2219 = vmatpush1.bf16.msra.mxu0 %v1567
    %2220 = vmatprep.mubr.bf16.mxu0 %v565
    %2221 = vmatmul.mubr.bf16.gmra.mrb[0].mxu0 %v551
    %v2222 = vpop.f32.mrb[0].mxu0
    %v2223 = vadd.f32 %v2183, %v2222
    %v2224 = vpop.f32.mrb[0].mxu0
    %v2225 = vpop.f32.mrb[0].mxu0
    %v2226 = vpop.f32.mrb[0].mxu0
    %2227 = vdwg.mxu0
    %2228 = vmatprep.subr.bf16.mxu0 0
    %2229 = vmatpush1.bf16.msra.mxu0 %v1568
    %2230 = vmatprep.subr.bf16.mxu0 0
    %2231 = vmatpush1.bf16.msra.mxu0 %v1569
    %2232 = vmatprep.subr.bf16.mxu0 0
    %2233 = vmatpush1.bf16.msra.mxu0 %v1570
    %2234 = vmatprep.subr.bf16.mxu0 0
    %2235 = vmatpush1.bf16.msra.mxu0 %v1571
    %2236 = vmatprep.subr.bf16.mxu0 0
    %2237 = vmatpush1.bf16.msra.mxu0 %v1572
    %2238 = vmatprep.subr.bf16.mxu0 0
    %2239 = vmatpush1.bf16.msra.mxu0 %v1573
    %2240 = vmatprep.subr.bf16.mxu0 0
    %2241 = vmatpush1.bf16.msra.mxu0 %v1574
    %2242 = vmatprep.subr.bf16.mxu0 0
    %2243 = vmatpush1.bf16.msra.mxu0 %v1575
    %2244 = vmatprep.subr.bf16.mxu0 0
    %2245 = vmatpush1.bf16.msra.mxu0 %v1576
    %2246 = vmatprep.subr.bf16.mxu0 0
    %2247 = vmatpush1.bf16.msra.mxu0 %v1577
    %2248 = vmatprep.subr.bf16.mxu0 0
    %2249 = vmatpush1.bf16.msra.mxu0 %v1578
    %2250 = vmatprep.subr.bf16.mxu0 0
    %2251 = vmatpush1.bf16.msra.mxu0 %v1579
    %2252 = vmatprep.subr.bf16.mxu0 0
    %2253 = vmatpush1.bf16.msra.mxu0 %v1580
    %2254 = vmatprep.subr.bf16.mxu0 0
    %2255 = vmatpush1.bf16.msra.mxu0 %v1581
    %2256 = vmatprep.subr.bf16.mxu0 0
    %2257 = vmatpush1.bf16.msra.mxu0 %v1582
    %2258 = vmatprep.subr.bf16.mxu0 0
    %2259 = vmatpush1.bf16.msra.mxu0 %v1583
    %2260 = vmatprep.mubr.bf16.mxu0 %v569
    %2261 = vmatmul.mubr.bf16.gmra.mrb[0].mxu0 %v567
    %v2262 = vpop.f32.mrb[0].mxu0
    %v2263 = vadd.f32 %v2223, %v2262
    %v2264 = vpop.f32.mrb[0].mxu0
    %v2265 = vpop.f32.mrb[0].mxu0
    %v2266 = vpop.f32.mrb[0].mxu0
    %2267 = vdwg.mxu0
    %2268 = vmatprep.subr.bf16.mxu0 0
    %2269 = vmatpush1.bf16.msra.mxu0 %v1584
    %2270 = vmatprep.subr.bf16.mxu0 0
    %2271 = vmatpush1.bf16.msra.mxu0 %v1585
    %2272 = vmatprep.subr.bf16.mxu0 0
    %2273 = vmatpush1.bf16.msra.mxu0 %v1586
    %2274 = vmatprep.subr.bf16.mxu0 0
    %2275 = vmatpush1.bf16.msra.mxu0 %v1587
    %2276 = vmatprep.subr.bf16.mxu0 0
    %2277 = vmatpush1.bf16.msra.mxu0 0
    %2278 = vmatprep.subr.bf16.mxu0 0
    %2279 = vmatpush1.bf16.msra.mxu0 0
    %2280 = vmatprep.subr.bf16.mxu0 0
    %2281 = vmatpush1.bf16.msra.mxu0 0
    %2282 = vmatprep.subr.bf16.mxu0 0
    %2283 = vmatpush1.bf16.msra.mxu0 0
    %2284 = vmatprep.subr.bf16.mxu0 0
    %2285 = vmatpush1.bf16.msra.mxu0 0
    %2286 = vmatprep.subr.bf16.mxu0 0
    %2287 = vmatpush1.bf16.msra.mxu0 0
    %2288 = vmatprep.subr.bf16.mxu0 0
    %2289 = vmatpush1.bf16.msra.mxu0 0
    %2290 = vmatprep.subr.bf16.mxu0 0
    %2291 = vmatpush1.bf16.msra.mxu0 0
    %2292 = vmatprep.subr.bf16.mxu0 0
    %2293 = vmatpush1.bf16.msra.mxu0 0
    %2294 = vmatprep.subr.bf16.mxu0 0
    %2295 = vmatpush1.bf16.msra.mxu0 0
    %2296 = vmatprep.subr.bf16.mxu0 0
    %2297 = vmatpush1.bf16.msra.mxu0 0
    %2298 = vmatprep.subr.bf16.mxu0 0
    %2299 = vmatpush1.bf16.msra.mxu0 0
    %2300 = vmatprep.mubr.bf16.mxu0 0
    %2301 = vmatmul.mubr.bf16.gmra.mrb[0].mxu0 %v1786
    %v2302 = vpop.f32.mrb[0].mxu0
    %v2303 = vadd.f32 %v2263, %v2302
    %v2304 = vpop.f32.mrb[0].mxu0
    %v2305 = vpop.f32.mrb[0].mxu0
    %v2306 = vpop.f32.mrb[0].mxu0
    %2307 = vdwg.mxu0
    %2308 = vst [vmem:[#allocation2] sm:$0x3] %v2303
    // Predicated region
    $region14: #{classi_forward.3} parent=1 // pred_check
      _
    $region15: #{classi_forward.3} parent=1 // pred_check_branch
      %2310 = sbr.rel (0) target = $region17
    $region16: #{classi_forward.3} parent=1 // pred_region
      %s2312 = ssub.s32 32, 32
      %2313 = vsyncadd [#allocation3], %s2312
      %s2315 = sshll.u32 [#allocation2], 4
      %s2316 = int_to_ptr.vmem [resolvable:$true] %s2315
      %2318 = dma.vmem_to_hbm [thread:$0]  %s2316, 32, %s3, [#allocation3]
    $region17: #{classi_forward.3} parent=1 // pred_fallthru
      _
    // Predicated region
    $region18: #{classi_forward.3} parent=1 // pred_check
      _
    $region19: #{classi_forward.3} parent=1 // pred_check_branch
      %2320 = sbr.rel (0) target = $region21
    $region20: #{classi_forward.3} parent=1 // pred_region
      %2321 = dma.done [#allocation3], 32
    $region21: #{classi_forward.3} parent=1 // pred_fallthru
      _
    %2322 = vsyncpa [#allocation3], 1

</llo_original>
